<compile_context>
chip_gen: v6e
topology: v6e:2x2x1
jax: 0.10.0
libtpu: 0.0.40
codegen_flags: <defaults>
</compile_context>

<pallas_src>
import math
import functools

import jax
import jax.numpy as jnp
from jax.experimental import pallas as pl
from jax.experimental.pallas import tpu as pltpu


# ----------------------------- small helpers -----------------------------

def _pick_tile(T, max_rows=512):
    """Largest time tile <= max_rows that divides T (multiple of 8 unless == T)."""
    if T <= max_rows:
        return T
    for tt in range(max_rows, 7, -1):
        if T % tt == 0 and tt % 8 == 0:
            return tt
    return T


def _row_mask(T, L):
    rows = jax.lax.broadcasted_iota(jnp.int32, (T, 1), 0)
    return rows < L                                                    # [T, 1] bool


def _shifted(z, d, T):
    """s[t] = z[t + d], zero outside [0, T). Static slices + concat (no pltpu.roll)."""
    if d == 0:
        return z
    zeros = jnp.zeros((abs(d), z.shape[1]), z.dtype)
    if d > 0:
        return jnp.concatenate([z[d:, :], zeros], axis=0)
    return jnp.concatenate([zeros, z[:T + d, :]], axis=0)


def _conv_same(x, w_ref, bias, kernel_size):
    """'same' 1D conv over time: y[t] = sum_j x[t + j - pad_l] @ w[j] + bias.

    Implemented as k MXU matmuls whose f32 outputs are shift-accumulated; time
    zero-padding comes from the zero-filled shifts. x: [T, Cin]; w_ref: [k, Cin, Cout].
    """
    T = x.shape[0]
    pad_l = (kernel_size - 1) // 2
    cout = w_ref.shape[2]
    acc = jnp.zeros((T, cout), jnp.float32)
    for j in range(kernel_size):
        d = j - pad_l
        z = jnp.dot(x, w_ref[j], preferred_element_type=jnp.float32)   # [T, Cout] f32
        acc = acc + _shifted(z, d, T)
    return acc + bias


def _layer_norm(h, gamma, beta, eps):
    mu = jnp.mean(h, axis=-1, keepdims=True)
    var = jnp.mean((h - mu) ** 2, axis=-1, keepdims=True)
    return (h - mu) * jax.lax.rsqrt(var + eps) * gamma + beta


# ----------------------------- Pallas kernels -----------------------------

def _attn_block_kernel(len_ref, x_ref, wqkv_ref, bqkv_ref, ek_ref, ev_ref,
                       wo_ref, bo_ref, g_ref, beta_ref, o_ref, acc_ref,
                       *, num_heads, scale, window, eps):
    """Fused: QKV proj + relative-position MHA (all heads) + out proj + residual + LN.

    One grid step per batch element. Per-head outputs go into the f32 VMEM scratch
    acc_ref [T, C]; the wo projection is a single lane-dense matmul from that scratch.
    """
    b = pl.program_id(0)
    L = len_ref[b]
    T = x_ref.shape[1]
    C = x_ref.shape[2]
    dh = C // num_heads
    W2 = 2 * window + 1

    x = x_ref[0]                                                        # [T, C]
    # fused Q|K|V projection (one MXU matmul, bf16 x bf16 -> f32 accumulate)
    qkv = jnp.dot(x, wqkv_ref[...], preferred_element_type=jnp.float32) + bqkv_ref[...]

    col = jax.lax.broadcasted_iota(jnp.int32, (1, T), 1)                # [1, T]
    row = jax.lax.broadcasted_iota(jnp.int32, (T, 1), 0)                # [T, 1]
    reldiff = col - row                                                 # [T, T] (only [T,T] int temp)
    key_valid = col < L                                                 # [1, T] row mask

    # diagonal masks hoisted out of the head loop; reused for rel-key scatter
    # and rel-value diagonal extraction.
    diag = [reldiff == (c - window) for c in range(W2)]

    ek = ek_ref[...].astype(jnp.float32)                                # [W2, dh]
    ev = ev_ref[...].astype(jnp.float32)

    for h in range(num_heads):
        q = qkv[:, h * dh:(h + 1) * dh] * scale                         # [T, dh] f32
        k = qkv[:, C + h * dh:C + (h + 1) * dh]
        v = qkv[:, 2 * C + h * dh:2 * C + (h + 1) * dh]

        # content scores q @ k^T  and rel-key logits q @ ek^T  (MXU)
        scores = jax.lax.dot_general(q, k, (((1,), (1,)), ((), ())),
                                     preferred_element_type=jnp.float32)   # [T, T]
        rl = jax.lax.dot_general(q, ek, (((1,), (1,)), ((), ())),
                                 preferred_element_type=jnp.float32)       # [T, W2]
        for c in range(W2):                                              # scatter onto diagonals
            scores = scores + jnp.where(diag[c], rl[:, c:c + 1], 0.0)

        # key mask (masked_fill(mask == 0, -1e4)) + softmax in f32
        scores = jnp.where(key_valid, scores, jnp.float32(-1e4))
        m = jnp.max(scores, axis=-1, keepdims=True)
        p = jnp.exp(scores - m)
        p = p / jnp.sum(p, axis=-1, keepdims=True)

        out = jnp.dot(p, v, preferred_element_type=jnp.float32)          # [T, dh]
        # rel-value term as one MXU matmul: D[T, W2] @ ev[W2, dh]
        dcols = [jnp.sum(jnp.where(diag[c], p, 0.0), axis=-1, keepdims=True)
                 for c in range(W2)]
        D = jnp.concatenate(dcols, axis=1)                               # [T, W2]
        out = out + jnp.dot(D, ev, preferred_element_type=jnp.float32)

        acc_ref[:, h * dh:(h + 1) * dh] = out                            # head slice -> scratch

    # fused output projection + residual + LayerNorm (layer_norm_type='2')
    y = jnp.dot(acc_ref[...].astype(wo_ref.dtype), wo_ref[...],
                preferred_element_type=jnp.float32) + bo_ref[...]
    h_res = x.astype(jnp.float32) + y
    out = _layer_norm(h_res, g_ref[...], beta_ref[...], eps)
    o_ref[0] = out.astype(o_ref.dtype)


def _ffn_block_kernel(len_ref, x_ref, w1_ref, b1_ref, w2_ref, b2_ref,
                      g_ref, beta_ref, o_ref, *, kernel_size, eps, mask_rows):
    """Fused FFN: conv1(+ReLU) + conv2 + residual + LayerNorm; [T, Fc] stays in VMEM."""
    b = pl.program_id(0)
    L = len_ref[b]
    T = x_ref.shape[1]
    valid = _row_mask(T, L)                                              # [T, 1]

    x = x_ref[0]                                                         # [T, C]
    xm = jnp.where(valid, x, jnp.zeros((), x.dtype))                     # x * x_mask

    h = _conv_same(xm, w1_ref, b1_ref[...], kernel_size)                 # [T, Fc] f32
    h = jnp.maximum(h, 0.0)
    hm = jnp.where(valid, h, 0.0).astype(w2_ref.dtype)                   # relu(h) * x_mask

    y = _conv_same(hm, w2_ref, b2_ref[...], kernel_size)                 # [T, C] f32

    h_res = x.astype(jnp.float32) + y                                    # residual
    out = _layer_norm(h_res, g_ref[...], beta_ref[...], eps)
    if mask_rows:                                                        # final x * x_mask fused
        out = jnp.where(valid, out, 0.0)
    o_ref[0] = out.astype(o_ref.dtype)


def _linear_kernel(len_ref, x_ref, w_ref, b_ref, o_ref, *, mask_rows):
    """[1, tt, K] @ [K, N] + [1, N]; optional zeroing of rows t >= len (stats * x_mask)."""
    y = jnp.dot(x_ref[0], w_ref[...], preferred_element_type=jnp.float32) + b_ref[...]
    if mask_rows:
        b_idx = pl.program_id(0)
        tt = x_ref.shape[1]
        t_idx = pl.program_id(1) * tt + jax.lax.broadcasted_iota(jnp.int32, y.shape, 0)
        y = jnp.where(t_idx < len_ref[b_idx], y, 0.0)
    o_ref[0] = y.astype(o_ref.dtype)


# ----------------------------- Pallas wrappers -----------------------------

def attn_block(x, lengths, lp, *, num_heads, window, eps=1e-5):
    B, T, C = x.shape
    dh = C // num_heads
    W2 = 2 * window + 1
    p = lp["attn"]
    return pl.pallas_call(
        functools.partial(_attn_block_kernel, num_heads=num_heads,
                          scale=1.0 / math.sqrt(dh), window=window, eps=eps),
        out_shape=jax.ShapeDtypeStruct((B, T, C), x.dtype),
        grid_spec=pltpu.PrefetchScalarGridSpec(
            num_scalar_prefetch=1,
            grid=(B,),
            in_specs=[
                pl.BlockSpec((1, T, C), lambda bi, lens: (bi, 0, 0)),
                pl.BlockSpec((C, 3 * C), lambda bi, lens: (0, 0)),
                pl.BlockSpec((1, 3 * C), lambda bi, lens: (0, 0)),
                pl.BlockSpec((W2, dh), lambda bi, lens: (0, 0)),
                pl.BlockSpec((W2, dh), lambda bi, lens: (0, 0)),
                pl.BlockSpec((C, C), lambda bi, lens: (0, 0)),
                pl.BlockSpec((1, C), lambda bi, lens: (0, 0)),
                pl.BlockSpec((1, C), lambda bi, lens: (0, 0)),
                pl.BlockSpec((1, C), lambda bi, lens: (0, 0)),
            ],
            out_specs=pl.BlockSpec((1, T, C), lambda bi, lens: (bi, 0, 0)),
            scratch_shapes=[pltpu.VMEM((T, C), jnp.float32)],
        ),
        compiler_params=pltpu.CompilerParams(dimension_semantics=("parallel",)),
    )(lengths, x, p["wqkv"], p["bqkv"].reshape(1, -1), p["emb_rel_k"], p["emb_rel_v"],
      p["wo"], p["bo"].reshape(1, -1), lp["g1"].reshape(1, -1), lp["b1"].reshape(1, -1))


def ffn_block(x, lengths, lp, *, kernel_size, eps=1e-5, mask_rows=False):
    B, T, C = x.shape
    f = lp["ffn"]
    Fc = f["w1"].shape[2]
    k = kernel_size
    return pl.pallas_call(
        functools.partial(_ffn_block_kernel, kernel_size=k, eps=eps, mask_rows=mask_rows),
        out_shape=jax.ShapeDtypeStruct((B, T, C), x.dtype),
        grid_spec=pltpu.PrefetchScalarGridSpec(
            num_scalar_prefetch=1,
            grid=(B,),
            in_specs=[
                pl.BlockSpec((1, T, C), lambda bi, lens: (bi, 0, 0)),
                pl.BlockSpec((k, C, Fc), lambda bi, lens: (0, 0, 0)),
                pl.BlockSpec((1, Fc), lambda bi, lens: (0, 0)),
                pl.BlockSpec((k, Fc, C), lambda bi, lens: (0, 0, 0)),
                pl.BlockSpec((1, C), lambda bi, lens: (0, 0)),
                pl.BlockSpec((1, C), lambda bi, lens: (0, 0)),
                pl.BlockSpec((1, C), lambda bi, lens: (0, 0)),
            ],
            out_specs=pl.BlockSpec((1, T, C), lambda bi, lens: (bi, 0, 0)),
        ),
        compiler_params=pltpu.CompilerParams(dimension_semantics=("parallel",)),
    )(lengths, x, f["w1"], f["b1"].reshape(1, -1), f["w2"], f["b2"].reshape(1, -1),
      lp["g2"].reshape(1, -1), lp["b2"].reshape(1, -1))


def linear3d(x, w, b, lengths, *, mask_rows=False):
    """x: [B, T, K] @ w: [K, N] + b: [N] -> [B, T, N] (1x1 conv / proj)."""
    B, T, K = x.shape
    N = w.shape[1]
    tt = _pick_tile(T)
    return pl.pallas_call(
        functools.partial(_linear_kernel, mask_rows=mask_rows),
        out_shape=jax.ShapeDtypeStruct((B, T, N), x.dtype),
        grid_spec=pltpu.PrefetchScalarGridSpec(
            num_scalar_prefetch=1,
            grid=(B, T // tt),
            in_specs=[
                pl.BlockSpec((1, tt, K), lambda bi, ti, lens: (bi, ti, 0)),
                pl.BlockSpec((K, N), lambda bi, ti, lens: (0, 0)),
                pl.BlockSpec((1, N), lambda bi, ti, lens: (0, 0)),
            ],
            out_specs=pl.BlockSpec((1, tt, N), lambda bi, ti, lens: (bi, ti, 0)),
        ),
        compiler_params=pltpu.CompilerParams(
            dimension_semantics=("parallel", "parallel")),
    )(lengths, x, w, b.reshape(1, N))


# ----------------------------- model forward -----------------------------

def text_encoder_forward(params, tokens, x_lengths, cfg):
    B, T = tokens.shape
    C = cfg["hidden_channels"]
    H = cfg["num_heads"]
    O = cfg["out_channels"]
    n_layers = len(params["layers"])

    lengths = x_lengths.astype(jnp.int32)

    # embedding lookup (gather, XLA glue) + sqrt(hidden) scale   [B, T, C]
    x = params["emb"][tokens] * math.sqrt(C)

    for li, lp in enumerate(params["layers"]):
        last = li == n_layers - 1
        # 2 pallas_calls per layer (attention block + FFN block), both fully fused
        x = attn_block(x, lengths, lp, num_heads=H, window=cfg["rel_window"])
        x = ffn_block(x, lengths, lp, kernel_size=cfg["kernel_size"], mask_rows=last)

    # proj: Conv1d(hidden, 2*out, 1); stats * x_mask fused as a row mask
    stats = linear3d(x, params["proj_w"], params["proj_b"], lengths, mask_rows=True)
    m, logs = stats[..., :O], stats[..., O:]

    x_mask = (jnp.arange(T)[None, :] < lengths[:, None]).astype(x.dtype)   # [B, T]
    return x, m, logs, x_mask


# ----------------------------- parameter init -----------------------------

def init_params(key, cfg):
    C = cfg["hidden_channels"]
    Fc = cfg["hidden_channels_ffn"]
    O = cfg["out_channels"]
    H = cfg["num_heads"]
    dh = C // H
    w = cfg["rel_window"]
    k = cfg["kernel_size"]
    wdt = cfg["dtype"]                 # storage dtype for activations/matmul weights

    keys = iter(jax.random.split(key, 64))

    def nrm(shape, std):
        return (jax.random.normal(next(keys), shape, jnp.float32) * std).astype(wdt)

    params = {"emb": nrm((cfg["n_vocab"], C), C ** (-0.5))}
    layers = []
    for _ in range(cfg["num_layers"]):
        attn = {
            "wqkv": nrm((C, 3 * C), C ** -0.5),                  # fused q|k|v
            "bqkv": jnp.zeros((3 * C,), jnp.float32),
            "wo": nrm((C, C), C ** -0.5), "bo": jnp.zeros((C,), jnp.float32),
            "emb_rel_k": nrm((2 * w + 1, dh), dh ** -0.5),
            "emb_rel_v": nrm((2 * w + 1, dh), dh ** -0.5),
        }
        ffn = {
            "w1": nrm((k, C, Fc), (k * C) ** -0.5), "b1": jnp.zeros((Fc,), jnp.float32),
            "w2": nrm((k, Fc, C), (k * Fc) ** -0.5), "b2": jnp.zeros((C,), jnp.float32),
        }
        layers.append({
            "attn": attn, "ffn": ffn,
            "g1": jnp.ones((C,), jnp.float32), "b1": jnp.zeros((C,), jnp.float32),
            "g2": jnp.ones((C,), jnp.float32), "b2": jnp.zeros((C,), jnp.float32),
        })
    params["layers"] = layers
    params["proj_w"] = nrm((C, 2 * O), C ** -0.5)
    params["proj_b"] = jnp.zeros((2 * O,), jnp.float32)
    return params


# ----------------------------- main -----------------------------

if __name__ == "__main__":
    cfg = dict(
        n_vocab=50,
        out_channels=8,
        hidden_channels=32,
        hidden_channels_ffn=64,
        num_heads=2,
        num_layers=2,
        kernel_size=3,
        dropout_p=0.1,         # identity at inference
        rel_window=4,          # rel_attn_window_size=4 (hard-coded in TextEncoder)
        dtype=jnp.bfloat16,    # activation/weight storage; use jnp.float32 for exact ref numerics
    )
    key = jax.random.PRNGKey(0)
    pkey, tkey = jax.random.split(key)
    params = init_params(pkey, cfg)

    B, T = 2, 16
    tokens = jax.random.randint(tkey, (B, T), 0, cfg["n_vocab"], dtype=jnp.int32)
    x_lengths = jnp.array([16, 11], dtype=jnp.int32)

    fwd = jax.jit(functools.partial(text_encoder_forward, cfg=cfg))
    x, m, logs, x_mask = fwd(params, tokens, x_lengths)
    jax.block_until_ready((x, m, logs, x_mask))

    assert x.shape == (B, T, cfg["hidden_channels"])
    assert m.shape == (B, T, cfg["out_channels"])
    assert logs.shape == (B, T, cfg["out_channels"])
    assert x_mask.shape == (B, T)
    assert bool(jnp.all(jnp.isfinite(x.astype(jnp.float32))))
    assert bool(jnp.all(jnp.isfinite(m.astype(jnp.float32))))
    # padded rows (t >= x_lengths[1] = 11) must be exactly zero in the masked outputs
    assert bool(jnp.all(m[1, 11:, :].astype(jnp.float32) == 0.0))
    assert bool(jnp.all(x[1, 11:, :].astype(jnp.float32) == 0.0))
    print("KERNEL_OK")
</pallas_src>

<mosaic_0001>
module attributes {stable_mosaic.version = 11 : i64} {
  func.func @_ffn_block_kernel(%arg0: i32, %arg1: memref<2xi32, #tpu.memory_space<smem>>, %arg2: memref<1x16x32xbf16, #tpu.memory_space<vmem>>, %arg3: memref<3x32x64xbf16, #tpu.memory_space<vmem>>, %arg4: memref<1x64xf32, #tpu.memory_space<vmem>>, %arg5: memref<3x64x32xbf16, #tpu.memory_space<vmem>>, %arg6: memref<1x32xf32, #tpu.memory_space<vmem>>, %arg7: memref<1x32xf32, #tpu.memory_space<vmem>>, %arg8: memref<1x32xf32, #tpu.memory_space<vmem>>, %arg9: memref<1x16x32xbf16, #tpu.memory_space<vmem>>) attributes {dimension_semantics = [#tpu.dimension_semantics<parallel>], iteration_bounds = array<i64: 2>, scalar_prefetch = 1 : i64, scratch_operands = 0 : i64, tpu.core_type = #tpu.core_type<tc>, window_params = [{transform_indices = @transform_0, window_bounds = array<i64: 1, 16, 32>}, {pipeline_mode = #tpu.pipeline_mode<synchronous>, transform_indices = @transform_1, window_bounds = array<i64: 3, 32, 64>}, {pipeline_mode = #tpu.pipeline_mode<synchronous>, transform_indices = @transform_2, window_bounds = array<i64: 1, 64>}, {pipeline_mode = #tpu.pipeline_mode<synchronous>, transform_indices = @transform_3, window_bounds = array<i64: 3, 64, 32>}, {pipeline_mode = #tpu.pipeline_mode<synchronous>, transform_indices = @transform_4, window_bounds = array<i64: 1, 32>}, {pipeline_mode = #tpu.pipeline_mode<synchronous>, transform_indices = @transform_5, window_bounds = array<i64: 1, 32>}, {pipeline_mode = #tpu.pipeline_mode<synchronous>, transform_indices = @transform_6, window_bounds = array<i64: 1, 32>}, {transform_indices = @transform_7, window_bounds = array<i64: 1, 16, 32>}]} {
    %0 = arith.index_cast %arg0 : i32 to index
    %1 = memref.load %arg1[%0] : memref<2xi32, #tpu.memory_space<smem>>
    %2 = tpu.iota {dimensions = array<i32: 0>} : vector<16x1xi32>
    %3 = vector.broadcast %1 : i32 to vector<16x1xi32>
    %4 = arith.cmpi slt, %2, %3 : vector<16x1xi32>
    %c0 = arith.constant 0 : index
    %c0_0 = arith.constant 0 : index
    %c0_1 = arith.constant 0 : index
    %5 = vector.load %arg2[%c0, %c0_0, %c0_1] : memref<1x16x32xbf16, #tpu.memory_space<vmem>>, vector<1x16x32xbf16>
    %6 = vector.shape_cast %5 : vector<1x16x32xbf16> to vector<16x32xbf16>
    %cst = arith.constant 0.000000e+00 : bf16
    %7 = vector.shape_cast %4 : vector<16x1xi1> to vector<16x1xi1>
    %8 = vector.broadcast %7 : vector<16x1xi1> to vector<16x32xi1>
    %9 = vector.broadcast %cst : bf16 to vector<16x32xbf16>
    %10 = arith.select %8, %6, %9 : vector<16x32xi1>, vector<16x32xbf16>
    %c0_2 = arith.constant 0 : index
    %c0_3 = arith.constant 0 : index
    %11 = vector.load %arg4[%c0_2, %c0_3] : memref<1x64xf32, #tpu.memory_space<vmem>>, vector<1x64xf32>
    %cst_4 = arith.constant 0.000000e+00 : f32
    %12 = vector.broadcast %cst_4 : f32 to vector<16x64xf32>
    %c0_5 = arith.constant 0 : index
    %c0_6 = arith.constant 0 : index
    %c0_7 = arith.constant 0 : index
    %13 = vector.load %arg3[%c0_5, %c0_6, %c0_7] : memref<3x32x64xbf16, #tpu.memory_space<vmem>>, vector<1x32x64xbf16>
    %14 = vector.shape_cast %13 : vector<1x32x64xbf16> to vector<32x64xbf16>
    %cst_8 = arith.constant dense<0.000000e+00> : vector<16x64xf32>
    %15 = tpu.matmul %10, %14, %cst_8 {dimension_numbers = #tpu.dot_dimension_numbers<[1], [0], [0], [1], [0, 0, 1, 1], [], []>} : vector<16x32xbf16>, vector<32x64xbf16>, vector<16x64xf32> -> vector<16x64xf32>
    %cst_9 = arith.constant 0.000000e+00 : f32
    %16 = vector.broadcast %cst_9 : f32 to vector<1x64xf32>
    %17 = vector.extract_strided_slice %15 {offsets = [0, 0], sizes = [15, 64], strides = [1, 1]} : vector<16x64xf32> to vector<15x64xf32>
    %18 = tpu.concatenate %16, %17 in 0 : vector<1x64xf32>, vector<15x64xf32> -> vector<16x64xf32>
    %19 = arith.addf %12, %18 : vector<16x64xf32>
    %c1 = arith.constant 1 : index
    %c0_10 = arith.constant 0 : index
    %c0_11 = arith.constant 0 : index
    %20 = vector.load %arg3[%c1, %c0_10, %c0_11] : memref<3x32x64xbf16, #tpu.memory_space<vmem>>, vector<1x32x64xbf16>
    %21 = vector.shape_cast %20 : vector<1x32x64xbf16> to vector<32x64xbf16>
    %cst_12 = arith.constant dense<0.000000e+00> : vector<16x64xf32>
    %22 = tpu.matmul %10, %21, %cst_12 {dimension_numbers = #tpu.dot_dimension_numbers<[1], [0], [0], [1], [0, 0, 1, 1], [], []>} : vector<16x32xbf16>, vector<32x64xbf16>, vector<16x64xf32> -> vector<16x64xf32>
    %23 = arith.addf %19, %22 : vector<16x64xf32>
    %c2 = arith.constant 2 : index
    %c0_13 = arith.constant 0 : index
    %c0_14 = arith.constant 0 : index
    %24 = vector.load %arg3[%c2, %c0_13, %c0_14] : memref<3x32x64xbf16, #tpu.memory_space<vmem>>, vector<1x32x64xbf16>
    %25 = vector.shape_cast %24 : vector<1x32x64xbf16> to vector<32x64xbf16>
    %cst_15 = arith.constant dense<0.000000e+00> : vector<16x64xf32>
    %26 = tpu.matmul %10, %25, %cst_15 {dimension_numbers = #tpu.dot_dimension_numbers<[1], [0], [0], [1], [0, 0, 1, 1], [], []>} : vector<16x32xbf16>, vector<32x64xbf16>, vector<16x64xf32> -> vector<16x64xf32>
    %cst_16 = arith.constant 0.000000e+00 : f32
    %27 = vector.broadcast %cst_16 : f32 to vector<1x64xf32>
    %28 = vector.extract_strided_slice %26 {offsets = [1, 0], sizes = [15, 64], strides = [1, 1]} : vector<16x64xf32> to vector<15x64xf32>
    %29 = tpu.concatenate %28, %27 in 0 : vector<15x64xf32>, vector<1x64xf32> -> vector<16x64xf32>
    %30 = arith.addf %23, %29 : vector<16x64xf32>
    %31 = vector.broadcast %11 : vector<1x64xf32> to vector<16x64xf32>
    %32 = arith.addf %30, %31 : vector<16x64xf32>
    %cst_17 = arith.constant 0.000000e+00 : f32
    %33 = vector.broadcast %cst_17 : f32 to vector<16x64xf32>
    %34 = arith.maximumf %32, %33 : vector<16x64xf32>
    %cst_18 = arith.constant 0.000000e+00 : f32
    %35 = vector.shape_cast %4 : vector<16x1xi1> to vector<16x1xi1>
    %36 = vector.broadcast %35 : vector<16x1xi1> to vector<16x64xi1>
    %37 = vector.broadcast %cst_18 : f32 to vector<16x64xf32>
    %38 = arith.select %36, %34, %37 : vector<16x64xi1>, vector<16x64xf32>
    %39 = arith.truncf %38 : vector<16x64xf32> to vector<16x64xbf16>
    %c0_19 = arith.constant 0 : index
    %c0_20 = arith.constant 0 : index
    %40 = vector.load %arg6[%c0_19, %c0_20] : memref<1x32xf32, #tpu.memory_space<vmem>>, vector<1x32xf32>
    %cst_21 = arith.constant 0.000000e+00 : f32
    %41 = vector.broadcast %cst_21 : f32 to vector<16x32xf32>
    %c0_22 = arith.constant 0 : index
    %c0_23 = arith.constant 0 : index
    %c0_24 = arith.constant 0 : index
    %42 = vector.load %arg5[%c0_22, %c0_23, %c0_24] : memref<3x64x32xbf16, #tpu.memory_space<vmem>>, vector<1x64x32xbf16>
    %43 = vector.shape_cast %42 : vector<1x64x32xbf16> to vector<64x32xbf16>
    %cst_25 = arith.constant dense<0.000000e+00> : vector<16x32xf32>
    %44 = tpu.matmul %39, %43, %cst_25 {dimension_numbers = #tpu.dot_dimension_numbers<[1], [0], [0], [1], [0, 0, 1, 1], [], []>} : vector<16x64xbf16>, vector<64x32xbf16>, vector<16x32xf32> -> vector<16x32xf32>
    %cst_26 = arith.constant 0.000000e+00 : f32
    %45 = vector.broadcast %cst_26 : f32 to vector<1x32xf32>
    %46 = vector.extract_strided_slice %44 {offsets = [0, 0], sizes = [15, 32], strides = [1, 1]} : vector<16x32xf32> to vector<15x32xf32>
    %47 = tpu.concatenate %45, %46 in 0 : vector<1x32xf32>, vector<15x32xf32> -> vector<16x32xf32>
    %48 = arith.addf %41, %47 : vector<16x32xf32>
    %c1_27 = arith.constant 1 : index
    %c0_28 = arith.constant 0 : index
    %c0_29 = arith.constant 0 : index
    %49 = vector.load %arg5[%c1_27, %c0_28, %c0_29] : memref<3x64x32xbf16, #tpu.memory_space<vmem>>, vector<1x64x32xbf16>
    %50 = vector.shape_cast %49 : vector<1x64x32xbf16> to vector<64x32xbf16>
    %cst_30 = arith.constant dense<0.000000e+00> : vector<16x32xf32>
    %51 = tpu.matmul %39, %50, %cst_30 {dimension_numbers = #tpu.dot_dimension_numbers<[1], [0], [0], [1], [0, 0, 1, 1], [], []>} : vector<16x64xbf16>, vector<64x32xbf16>, vector<16x32xf32> -> vector<16x32xf32>
    %52 = arith.addf %48, %51 : vector<16x32xf32>
    %c2_31 = arith.constant 2 : index
    %c0_32 = arith.constant 0 : index
    %c0_33 = arith.constant 0 : index
    %53 = vector.load %arg5[%c2_31, %c0_32, %c0_33] : memref<3x64x32xbf16, #tpu.memory_space<vmem>>, vector<1x64x32xbf16>
    %54 = vector.shape_cast %53 : vector<1x64x32xbf16> to vector<64x32xbf16>
    %cst_34 = arith.constant dense<0.000000e+00> : vector<16x32xf32>
    %55 = tpu.matmul %39, %54, %cst_34 {dimension_numbers = #tpu.dot_dimension_numbers<[1], [0], [0], [1], [0, 0, 1, 1], [], []>} : vector<16x64xbf16>, vector<64x32xbf16>, vector<16x32xf32> -> vector<16x32xf32>
    %cst_35 = arith.constant 0.000000e+00 : f32
    %56 = vector.broadcast %cst_35 : f32 to vector<1x32xf32>
    %57 = vector.extract_strided_slice %55 {offsets = [1, 0], sizes = [15, 32], strides = [1, 1]} : vector<16x32xf32> to vector<15x32xf32>
    %58 = tpu.concatenate %57, %56 in 0 : vector<15x32xf32>, vector<1x32xf32> -> vector<16x32xf32>
    %59 = arith.addf %52, %58 : vector<16x32xf32>
    %60 = vector.broadcast %40 : vector<1x32xf32> to vector<16x32xf32>
    %61 = arith.addf %59, %60 : vector<16x32xf32>
    %62 = arith.extf %6 : vector<16x32xbf16> to vector<16x32xf32>
    %63 = arith.addf %62, %61 : vector<16x32xf32>
    %c0_36 = arith.constant 0 : index
    %c0_37 = arith.constant 0 : index
    %64 = vector.load %arg7[%c0_36, %c0_37] : memref<1x32xf32, #tpu.memory_space<vmem>>, vector<1x32xf32>
    %c0_38 = arith.constant 0 : index
    %c0_39 = arith.constant 0 : index
    %65 = vector.load %arg8[%c0_38, %c0_39] : memref<1x32xf32, #tpu.memory_space<vmem>>, vector<1x32xf32>
    %cst_40 = arith.constant dense<0.000000e+00> : vector<16xf32>
    %66 = vector.multi_reduction <add>, %63, %cst_40 [1] : vector<16x32xf32> to vector<16xf32>
    %67 = vector.shape_cast %66 : vector<16xf32> to vector<16x1xf32>
    %cst_41 = arith.constant 3.200000e+01 : f32
    %68 = vector.broadcast %cst_41 : f32 to vector<16x1xf32>
    %69 = arith.divf %67, %68 : vector<16x1xf32>
    %70 = vector.broadcast %69 : vector<16x1xf32> to vector<16x32xf32>
    %71 = arith.subf %63, %70 : vector<16x32xf32>
    %72 = arith.mulf %71, %71 : vector<16x32xf32>
    %cst_42 = arith.constant dense<0.000000e+00> : vector<16xf32>
    %73 = vector.multi_reduction <add>, %72, %cst_42 [1] : vector<16x32xf32> to vector<16xf32>
    %74 = vector.shape_cast %73 : vector<16xf32> to vector<16x1xf32>
    %cst_43 = arith.constant 3.200000e+01 : f32
    %75 = vector.broadcast %cst_43 : f32 to vector<16x1xf32>
    %76 = arith.divf %74, %75 : vector<16x1xf32>
    %77 = vector.broadcast %69 : vector<16x1xf32> to vector<16x32xf32>
    %78 = arith.subf %63, %77 : vector<16x32xf32>
    %cst_44 = arith.constant 9.99999974E-6 : f32
    %79 = vector.broadcast %cst_44 : f32 to vector<16x1xf32>
    %80 = arith.addf %76, %79 : vector<16x1xf32>
    %81 = math.rsqrt %80 : vector<16x1xf32>
    %82 = vector.broadcast %81 : vector<16x1xf32> to vector<16x32xf32>
    %83 = arith.mulf %78, %82 : vector<16x32xf32>
    %84 = vector.broadcast %64 : vector<1x32xf32> to vector<16x32xf32>
    %85 = arith.mulf %83, %84 : vector<16x32xf32>
    %86 = vector.broadcast %65 : vector<1x32xf32> to vector<16x32xf32>
    %87 = arith.addf %85, %86 : vector<16x32xf32>
    %88 = arith.truncf %87 : vector<16x32xf32> to vector<16x32xbf16>
    %c0_45 = arith.constant 0 : index
    %c0_46 = arith.constant 0 : index
    %c0_47 = arith.constant 0 : index
    %89 = vector.load %arg9[%c0_45, %c0_46, %c0_47] : memref<1x16x32xbf16, #tpu.memory_space<vmem>>, vector<1x16x32xbf16>
    %90 = vector.shape_cast %89 : vector<1x16x32xbf16> to vector<16x32xbf16>
    %91 = vector.shape_cast %88 : vector<16x32xbf16> to vector<1x16x32xbf16>
    tpu.vector_store %arg9[%c0_45, %c0_46, %c0_47], %91 {strides = array<i32>} : memref<1x16x32xbf16, #tpu.memory_space<vmem>>, vector<1x16x32xbf16>,
    return
  }
  func.func @transform_0(%arg0: i32, %arg1: memref<2xi32, #tpu.memory_space<smem>>) -> (i32, i32, i32) {
    %c0_i32 = arith.constant 0 : i32
    %c0_i32_0 = arith.constant 0 : i32
    %c0_i32_1 = arith.constant 0 : i32
    return %arg0, %c0_i32, %c0_i32_0 : i32, i32, i32
  }
  func.func @transform_1(%arg0: i32, %arg1: memref<2xi32, #tpu.memory_space<smem>>) -> (i32, i32, i32) {
    %c0_i32 = arith.constant 0 : i32
    %c0_i32_0 = arith.constant 0 : i32
    %c0_i32_1 = arith.constant 0 : i32
    %c0_i32_2 = arith.constant 0 : i32
    return %c0_i32, %c0_i32_0, %c0_i32_1 : i32, i32, i32
  }
  func.func @transform_2(%arg0: i32, %arg1: memref<2xi32, #tpu.memory_space<smem>>) -> (i32, i32) {
    %c0_i32 = arith.constant 0 : i32
    %c0_i32_0 = arith.constant 0 : i32
    %c0_i32_1 = arith.constant 0 : i32
    return %c0_i32, %c0_i32_0 : i32, i32
  }
  func.func @transform_3(%arg0: i32, %arg1: memref<2xi32, #tpu.memory_space<smem>>) -> (i32, i32, i32) {
    %c0_i32 = arith.constant 0 : i32
    %c0_i32_0 = arith.constant 0 : i32
    %c0_i32_1 = arith.constant 0 : i32
    %c0_i32_2 = arith.constant 0 : i32
    return %c0_i32, %c0_i32_0, %c0_i32_1 : i32, i32, i32
  }
  func.func @transform_4(%arg0: i32, %arg1: memref<2xi32, #tpu.memory_space<smem>>) -> (i32, i32) {
    %c0_i32 = arith.constant 0 : i32
    %c0_i32_0 = arith.constant 0 : i32
    %c0_i32_1 = arith.constant 0 : i32
    return %c0_i32, %c0_i32_0 : i32, i32
  }
  func.func @transform_5(%arg0: i32, %arg1: memref<2xi32, #tpu.memory_space<smem>>) -> (i32, i32) {
    %c0_i32 = arith.constant 0 : i32
    %c0_i32_0 = arith.constant 0 : i32
    %c0_i32_1 = arith.constant 0 : i32
    return %c0_i32, %c0_i32_0 : i32, i32
  }
  func.func @transform_6(%arg0: i32, %arg1: memref<2xi32, #tpu.memory_space<smem>>) -> (i32, i32) {
    %c0_i32 = arith.constant 0 : i32
    %c0_i32_0 = arith.constant 0 : i32
    %c0_i32_1 = arith.constant 0 : i32
    return %c0_i32, %c0_i32_0 : i32, i32
  }
  func.func @transform_7(%arg0: i32, %arg1: memref<2xi32, #tpu.memory_space<smem>>) -> (i32, i32, i32) {
    %c0_i32 = arith.constant 0 : i32
    %c0_i32_0 = arith.constant 0 : i32
    %c0_i32_1 = arith.constant 0 : i32
    return %arg0, %c0_i32, %c0_i32_0 : i32, i32, i32
  }
}

module attributes {stable_mosaic.version = 11 : i64} {
  func.func @_attn_block_kernel(%arg0: i32, %arg1: memref<2xi32, #tpu.memory_space<smem>>, %arg2: memref<1x16x32xbf16, #tpu.memory_space<vmem>>, %arg3: memref<32x96xbf16, #tpu.memory_space<vmem>>, %arg4: memref<1x96xf32, #tpu.memory_space<vmem>>, %arg5: memref<9x16xbf16, #tpu.memory_space<vmem>>, %arg6: memref<9x16xbf16, #tpu.memory_space<vmem>>, %arg7: memref<32x32xbf16, #tpu.memory_space<vmem>>, %arg8: memref<1x32xf32, #tpu.memory_space<vmem>>, %arg9: memref<1x32xf32, #tpu.memory_space<vmem>>, %arg10: memref<1x32xf32, #tpu.memory_space<vmem>>, %arg11: memref<1x16x32xbf16, #tpu.memory_space<vmem>>, %arg12: memref<16x32xf32, #tpu.memory_space<vmem>>) attributes {dimension_semantics = [#tpu.dimension_semantics<parallel>], iteration_bounds = array<i64: 2>, scalar_prefetch = 1 : i64, scratch_operands = 1 : i64, tpu.core_type = #tpu.core_type<tc>, window_params = [{transform_indices = @transform_0, window_bounds = array<i64: 1, 16, 32>}, {pipeline_mode = #tpu.pipeline_mode<synchronous>, transform_indices = @transform_1, window_bounds = array<i64: 32, 96>}, {pipeline_mode = #tpu.pipeline_mode<synchronous>, transform_indices = @transform_2, window_bounds = array<i64: 1, 96>}, {pipeline_mode = #tpu.pipeline_mode<synchronous>, transform_indices = @transform_3, window_bounds = array<i64: 9, 16>}, {pipeline_mode = #tpu.pipeline_mode<synchronous>, transform_indices = @transform_4, window_bounds = array<i64: 9, 16>}, {pipeline_mode = #tpu.pipeline_mode<synchronous>, transform_indices = @transform_5, window_bounds = array<i64: 32, 32>}, {pipeline_mode = #tpu.pipeline_mode<synchronous>, transform_indices = @transform_6, window_bounds = array<i64: 1, 32>}, {pipeline_mode = #tpu.pipeline_mode<synchronous>, transform_indices = @transform_7, window_bounds = array<i64: 1, 32>}, {pipeline_mode = #tpu.pipeline_mode<synchronous>, transform_indices = @transform_8, window_bounds = array<i64: 1, 32>}, {transform_indices = @transform_9, window_bounds = array<i64: 1, 16, 32>}]} {
    %0 = arith.index_cast %arg0 : i32 to index
    %1 = memref.load %arg1[%0] : memref<2xi32, #tpu.memory_space<smem>>
    %c0 = arith.constant 0 : index
    %c0_0 = arith.constant 0 : index
    %c0_1 = arith.constant 0 : index
    %2 = vector.load %arg2[%c0, %c0_0, %c0_1] : memref<1x16x32xbf16, #tpu.memory_space<vmem>>, vector<1x16x32xbf16>
    %3 = vector.shape_cast %2 : vector<1x16x32xbf16> to vector<16x32xbf16>
    %c0_2 = arith.constant 0 : index
    %c0_3 = arith.constant 0 : index
    %4 = vector.load %arg3[%c0_2, %c0_3] : memref<32x96xbf16, #tpu.memory_space<vmem>>, vector<32x96xbf16>
    %cst = arith.constant dense<0.000000e+00> : vector<16x96xf32>
    %5 = tpu.matmul %3, %4, %cst {dimension_numbers = #tpu.dot_dimension_numbers<[1], [0], [0], [1], [0, 0, 1, 1], [], []>} : vector<16x32xbf16>, vector<32x96xbf16>, vector<16x96xf32> -> vector<16x96xf32>
    %c0_4 = arith.constant 0 : index
    %c0_5 = arith.constant 0 : index
    %6 = vector.load %arg4[%c0_4, %c0_5] : memref<1x96xf32, #tpu.memory_space<vmem>>, vector<1x96xf32>
    %7 = vector.broadcast %6 : vector<1x96xf32> to vector<16x96xf32>
    %8 = arith.addf %5, %7 : vector<16x96xf32>
    %9 = tpu.iota {dimensions = array<i32: 1>} : vector<1x16xi32>
    %10 = tpu.iota {dimensions = array<i32: 0>} : vector<16x1xi32>
    %11 = vector.broadcast %9 : vector<1x16xi32> to vector<16x16xi32>
    %12 = vector.broadcast %10 : vector<16x1xi32> to vector<16x16xi32>
    %13 = arith.subi %11, %12 : vector<16x16xi32>
    %14 = vector.broadcast %1 : i32 to vector<1x16xi32>
    %15 = arith.cmpi slt, %9, %14 : vector<1x16xi32>
    %c-4_i32 = arith.constant -4 : i32
    %16 = vector.broadcast %c-4_i32 : i32 to vector<16x16xi32>
    %17 = arith.cmpi eq, %13, %16 : vector<16x16xi32>
    %c-3_i32 = arith.constant -3 : i32
    %18 = vector.broadcast %c-3_i32 : i32 to vector<16x16xi32>
    %19 = arith.cmpi eq, %13, %18 : vector<16x16xi32>
    %c-2_i32 = arith.constant -2 : i32
    %20 = vector.broadcast %c-2_i32 : i32 to vector<16x16xi32>
    %21 = arith.cmpi eq, %13, %20 : vector<16x16xi32>
    %c-1_i32 = arith.constant -1 : i32
    %22 = vector.broadcast %c-1_i32 : i32 to vector<16x16xi32>
    %23 = arith.cmpi eq, %13, %22 : vector<16x16xi32>
    %c0_i32 = arith.constant 0 : i32
    %24 = vector.broadcast %c0_i32 : i32 to vector<16x16xi32>
    %25 = arith.cmpi eq, %13, %24 : vector<16x16xi32>
    %c1_i32 = arith.constant 1 : i32
    %26 = vector.broadcast %c1_i32 : i32 to vector<16x16xi32>
    %27 = arith.cmpi eq, %13, %26 : vector<16x16xi32>
    %c2_i32 = arith.constant 2 : i32
    %28 = vector.broadcast %c2_i32 : i32 to vector<16x16xi32>
    %29 = arith.cmpi eq, %13, %28 : vector<16x16xi32>
    %c3_i32 = arith.constant 3 : i32
    %30 = vector.broadcast %c3_i32 : i32 to vector<16x16xi32>
    %31 = arith.cmpi eq, %13, %30 : vector<16x16xi32>
    %c4_i32 = arith.constant 4 : i32
    %32 = vector.broadcast %c4_i32 : i32 to vector<16x16xi32>
    %33 = arith.cmpi eq, %13, %32 : vector<16x16xi32>
    %c0_6 = arith.constant 0 : index
    %c0_7 = arith.constant 0 : index
    %34 = vector.load %arg5[%c0_6, %c0_7] : memref<9x16xbf16, #tpu.memory_space<vmem>>, vector<9x16xbf16>
    %35 = arith.extf %34 : vector<9x16xbf16> to vector<9x16xf32>
    %c0_8 = arith.constant 0 : index
    %c0_9 = arith.constant 0 : index
    %36 = vector.load %arg6[%c0_8, %c0_9] : memref<9x16xbf16, #tpu.memory_space<vmem>>, vector<9x16xbf16>
    %37 = arith.extf %36 : vector<9x16xbf16> to vector<9x16xf32>
    %38 = vector.extract_strided_slice %8 {offsets = [0, 0], sizes = [16, 16], strides = [1, 1]} : vector<16x96xf32> to vector<16x16xf32>
    %cst_10 = arith.constant 2.500000e-01 : f32
    %39 = vector.broadcast %cst_10 : f32 to vector<16x16xf32>
    %40 = arith.mulf %38, %39 : vector<16x16xf32>
    %41 = vector.extract_strided_slice %8 {offsets = [0, 32], sizes = [16, 16], strides = [1, 1]} : vector<16x96xf32> to vector<16x16xf32>
    %42 = vector.extract_strided_slice %8 {offsets = [0, 64], sizes = [16, 16], strides = [1, 1]} : vector<16x96xf32> to vector<16x16xf32>
    %cst_11 = arith.constant dense<0.000000e+00> : vector<16x16xf32>
    %43 = tpu.matmul %40, %41, %cst_11 {dimension_numbers = #tpu.dot_dimension_numbers<[1], [1], [0], [0], [0, 0, 1, 0], [], []>} : vector<16x16xf32>, vector<16x16xf32>, vector<16x16xf32> -> vector<16x16xf32>
    %cst_12 = arith.constant dense<0.000000e+00> : vector<16x9xf32>
    %44 = tpu.matmul %40, %35, %cst_12 {dimension_numbers = #tpu.dot_dimension_numbers<[1], [1], [0], [0], [0, 0, 1, 0], [], []>} : vector<16x16xf32>, vector<9x16xf32>, vector<16x9xf32> -> vector<16x9xf32>
    %45 = vector.extract_strided_slice %44 {offsets = [0, 0], sizes = [16, 1], strides = [1, 1]} : vector<16x9xf32> to vector<16x1xf32>
    %cst_13 = arith.constant 0.000000e+00 : f32
    %46 = vector.shape_cast %45 : vector<16x1xf32> to vector<16x1xf32>
    %47 = vector.broadcast %46 : vector<16x1xf32> to vector<16x16xf32>
    %48 = vector.broadcast %cst_13 : f32 to vector<16x16xf32>
    %49 = arith.select %17, %47, %48 : vector<16x16xi1>, vector<16x16xf32>
    %50 = arith.addf %43, %49 : vector<16x16xf32>
    %51 = vector.extract_strided_slice %44 {offsets = [0, 1], sizes = [16, 1], strides = [1, 1]} : vector<16x9xf32> to vector<16x1xf32>
    %cst_14 = arith.constant 0.000000e+00 : f32
    %52 = vector.shape_cast %51 : vector<16x1xf32> to vector<16x1xf32>
    %53 = vector.broadcast %52 : vector<16x1xf32> to vector<16x16xf32>
    %54 = vector.broadcast %cst_14 : f32 to vector<16x16xf32>
    %55 = arith.select %19, %53, %54 : vector<16x16xi1>, vector<16x16xf32>
    %56 = arith.addf %50, %55 : vector<16x16xf32>
    %57 = vector.extract_strided_slice %44 {offsets = [0, 2], sizes = [16, 1], strides = [1, 1]} : vector<16x9xf32> to vector<16x1xf32>
    %cst_15 = arith.constant 0.000000e+00 : f32
    %58 = vector.shape_cast %57 : vector<16x1xf32> to vector<16x1xf32>
    %59 = vector.broadcast %58 : vector<16x1xf32> to vector<16x16xf32>
    %60 = vector.broadcast %cst_15 : f32 to vector<16x16xf32>
    %61 = arith.select %21, %59, %60 : vector<16x16xi1>, vector<16x16xf32>
    %62 = arith.addf %56, %61 : vector<16x16xf32>
    %63 = vector.extract_strided_slice %44 {offsets = [0, 3], sizes = [16, 1], strides = [1, 1]} : vector<16x9xf32> to vector<16x1xf32>
    %cst_16 = arith.constant 0.000000e+00 : f32
    %64 = vector.shape_cast %63 : vector<16x1xf32> to vector<16x1xf32>
    %65 = vector.broadcast %64 : vector<16x1xf32> to vector<16x16xf32>
    %66 = vector.broadcast %cst_16 : f32 to vector<16x16xf32>
    %67 = arith.select %23, %65, %66 : vector<16x16xi1>, vector<16x16xf32>
    %68 = arith.addf %62, %67 : vector<16x16xf32>
    %69 = vector.extract_strided_slice %44 {offsets = [0, 4], sizes = [16, 1], strides = [1, 1]} : vector<16x9xf32> to vector<16x1xf32>
    %cst_17 = arith.constant 0.000000e+00 : f32
    %70 = vector.shape_cast %69 : vector<16x1xf32> to vector<16x1xf32>
    %71 = vector.broadcast %70 : vector<16x1xf32> to vector<16x16xf32>
    %72 = vector.broadcast %cst_17 : f32 to vector<16x16xf32>
    %73 = arith.select %25, %71, %72 : vector<16x16xi1>, vector<16x16xf32>
    %74 = arith.addf %68, %73 : vector<16x16xf32>
    %75 = vector.extract_strided_slice %44 {offsets = [0, 5], sizes = [16, 1], strides = [1, 1]} : vector<16x9xf32> to vector<16x1xf32>
    %cst_18 = arith.constant 0.000000e+00 : f32
    %76 = vector.shape_cast %75 : vector<16x1xf32> to vector<16x1xf32>
    %77 = vector.broadcast %76 : vector<16x1xf32> to vector<16x16xf32>
    %78 = vector.broadcast %cst_18 : f32 to vector<16x16xf32>
    %79 = arith.select %27, %77, %78 : vector<16x16xi1>, vector<16x16xf32>
    %80 = arith.addf %74, %79 : vector<16x16xf32>
    %81 = vector.extract_strided_slice %44 {offsets = [0, 6], sizes = [16, 1], strides = [1, 1]} : vector<16x9xf32> to vector<16x1xf32>
    %cst_19 = arith.constant 0.000000e+00 : f32
    %82 = vector.shape_cast %81 : vector<16x1xf32> to vector<16x1xf32>
    %83 = vector.broadcast %82 : vector<16x1xf32> to vector<16x16xf32>
    %84 = vector.broadcast %cst_19 : f32 to vector<16x16xf32>
    %85 = arith.select %29, %83, %84 : vector<16x16xi1>, vector<16x16xf32>
    %86 = arith.addf %80, %85 : vector<16x16xf32>
    %87 = vector.extract_strided_slice %44 {offsets = [0, 7], sizes = [16, 1], strides = [1, 1]} : vector<16x9xf32> to vector<16x1xf32>
    %cst_20 = arith.constant 0.000000e+00 : f32
    %88 = vector.shape_cast %87 : vector<16x1xf32> to vector<16x1xf32>
    %89 = vector.broadcast %88 : vector<16x1xf32> to vector<16x16xf32>
    %90 = vector.broadcast %cst_20 : f32 to vector<16x16xf32>
    %91 = arith.select %31, %89, %90 : vector<16x16xi1>, vector<16x16xf32>
    %92 = arith.addf %86, %91 : vector<16x16xf32>
    %93 = vector.extract_strided_slice %44 {offsets = [0, 8], sizes = [16, 1], strides = [1, 1]} : vector<16x9xf32> to vector<16x1xf32>
    %cst_21 = arith.constant 0.000000e+00 : f32
    %94 = vector.shape_cast %93 : vector<16x1xf32> to vector<16x1xf32>
    %95 = vector.broadcast %94 : vector<16x1xf32> to vector<16x16xf32>
    %96 = vector.broadcast %cst_21 : f32 to vector<16x16xf32>
    %97 = arith.select %33, %95, %96 : vector<16x16xi1>, vector<16x16xf32>
    %98 = arith.addf %92, %97 : vector<16x16xf32>
    %cst_22 = arith.constant -1.000000e+04 : f32
    %99 = vector.shape_cast %15 : vector<1x16xi1> to vector<1x16xi1>
    %100 = vector.broadcast %99 : vector<1x16xi1> to vector<16x16xi1>
    %101 = vector.broadcast %cst_22 : f32 to vector<16x16xf32>
    %102 = arith.select %100, %98, %101 : vector<16x16xi1>, vector<16x16xf32>
    %cst_23 = arith.constant dense<0xFF800000> : vector<16xf32>
    %103 = vector.multi_reduction <maximumf>, %102, %cst_23 [1] : vector<16x16xf32> to vector<16xf32>
    %104 = vector.shape_cast %103 : vector<16xf32> to vector<16x1xf32>
    %105 = vector.broadcast %104 : vector<16x1xf32> to vector<16x16xf32>
    %106 = arith.subf %102, %105 : vector<16x16xf32>
    %107 = math.exp %106 : vector<16x16xf32>
    %cst_24 = arith.constant dense<0.000000e+00> : vector<16xf32>
    %108 = vector.multi_reduction <add>, %107, %cst_24 [1] : vector<16x16xf32> to vector<16xf32>
    %109 = vector.shape_cast %108 : vector<16xf32> to vector<16x1xf32>
    %110 = vector.broadcast %109 : vector<16x1xf32> to vector<16x16xf32>
    %111 = arith.divf %107, %110 : vector<16x16xf32>
    %cst_25 = arith.constant dense<0.000000e+00> : vector<16x16xf32>
    %112 = tpu.matmul %111, %42, %cst_25 {dimension_numbers = #tpu.dot_dimension_numbers<[1], [0], [0], [1], [0, 0, 1, 1], [], []>} : vector<16x16xf32>, vector<16x16xf32>, vector<16x16xf32> -> vector<16x16xf32>
    %cst_26 = arith.constant 0.000000e+00 : f32
    %113 = vector.broadcast %cst_26 : f32 to vector<16x16xf32>
    %114 = arith.select %17, %111, %113 : vector<16x16xi1>, vector<16x16xf32>
    %cst_27 = arith.constant dense<0.000000e+00> : vector<16xf32>
    %115 = vector.multi_reduction <add>, %114, %cst_27 [1] : vector<16x16xf32> to vector<16xf32>
    %116 = vector.shape_cast %115 : vector<16xf32> to vector<16x1xf32>
    %cst_28 = arith.constant 0.000000e+00 : f32
    %117 = vector.broadcast %cst_28 : f32 to vector<16x16xf32>
    %118 = arith.select %19, %111, %117 : vector<16x16xi1>, vector<16x16xf32>
    %cst_29 = arith.constant dense<0.000000e+00> : vector<16xf32>
    %119 = vector.multi_reduction <add>, %118, %cst_29 [1] : vector<16x16xf32> to vector<16xf32>
    %120 = vector.shape_cast %119 : vector<16xf32> to vector<16x1xf32>
    %cst_30 = arith.constant 0.000000e+00 : f32
    %121 = vector.broadcast %cst_30 : f32 to vector<16x16xf32>
    %122 = arith.select %21, %111, %121 : vector<16x16xi1>, vector<16x16xf32>
    %cst_31 = arith.constant dense<0.000000e+00> : vector<16xf32>
    %123 = vector.multi_reduction <add>, %122, %cst_31 [1] : vector<16x16xf32> to vector<16xf32>
    %124 = vector.shape_cast %123 : vector<16xf32> to vector<16x1xf32>
    %cst_32 = arith.constant 0.000000e+00 : f32
    %125 = vector.broadcast %cst_32 : f32 to vector<16x16xf32>
    %126 = arith.select %23, %111, %125 : vector<16x16xi1>, vector<16x16xf32>
    %cst_33 = arith.constant dense<0.000000e+00> : vector<16xf32>
    %127 = vector.multi_reduction <add>, %126, %cst_33 [1] : vector<16x16xf32> to vector<16xf32>
    %128 = vector.shape_cast %127 : vector<16xf32> to vector<16x1xf32>
    %cst_34 = arith.constant 0.000000e+00 : f32
    %129 = vector.broadcast %cst_34 : f32 to vector<16x16xf32>
    %130 = arith.select %25, %111, %129 : vector<16x16xi1>, vector<16x16xf32>
    %cst_35 = arith.constant dense<0.000000e+00> : vector<16xf32>
    %131 = vector.multi_reduction <add>, %130, %cst_35 [1] : vector<16x16xf32> to vector<16xf32>
    %132 = vector.shape_cast %131 : vector<16xf32> to vector<16x1xf32>
    %cst_36 = arith.constant 0.000000e+00 : f32
    %133 = vector.broadcast %cst_36 : f32 to vector<16x16xf32>
    %134 = arith.select %27, %111, %133 : vector<16x16xi1>, vector<16x16xf32>
    %cst_37 = arith.constant dense<0.000000e+00> : vector<16xf32>
    %135 = vector.multi_reduction <add>, %134, %cst_37 [1] : vector<16x16xf32> to vector<16xf32>
    %136 = vector.shape_cast %135 : vector<16xf32> to vector<16x1xf32>
    %cst_38 = arith.constant 0.000000e+00 : f32
    %137 = vector.broadcast %cst_38 : f32 to vector<16x16xf32>
    %138 = arith.select %29, %111, %137 : vector<16x16xi1>, vector<16x16xf32>
    %cst_39 = arith.constant dense<0.000000e+00> : vector<16xf32>
    %139 = vector.multi_reduction <add>, %138, %cst_39 [1] : vector<16x16xf32> to vector<16xf32>
    %140 = vector.shape_cast %139 : vector<16xf32> to vector<16x1xf32>
    %cst_40 = arith.constant 0.000000e+00 : f32
    %141 = vector.broadcast %cst_40 : f32 to vector<16x16xf32>
    %142 = arith.select %31, %111, %141 : vector<16x16xi1>, vector<16x16xf32>
    %cst_41 = arith.constant dense<0.000000e+00> : vector<16xf32>
    %143 = vector.multi_reduction <add>, %142, %cst_41 [1] : vector<16x16xf32> to vector<16xf32>
    %144 = vector.shape_cast %143 : vector<16xf32> to vector<16x1xf32>
    %cst_42 = arith.constant 0.000000e+00 : f32
    %145 = vector.broadcast %cst_42 : f32 to vector<16x16xf32>
    %146 = arith.select %33, %111, %145 : vector<16x16xi1>, vector<16x16xf32>
    %cst_43 = arith.constant dense<0.000000e+00> : vector<16xf32>
    %147 = vector.multi_reduction <add>, %146, %cst_43 [1] : vector<16x16xf32> to vector<16xf32>
    %148 = vector.shape_cast %147 : vector<16xf32> to vector<16x1xf32>
    %149 = tpu.concatenate %116, %120, %124, %128, %132, %136, %140, %144, %148 in 1 : vector<16x1xf32>, vector<16x1xf32>, vector<16x1xf32>, vector<16x1xf32>, vector<16x1xf32>, vector<16x1xf32>, vector<16x1xf32>, vector<16x1xf32>, vector<16x1xf32> -> vector<16x9xf32>
    %cst_44 = arith.constant dense<0.000000e+00> : vector<16x16xf32>
    %150 = tpu.matmul %149, %37, %cst_44 {dimension_numbers = #tpu.dot_dimension_numbers<[1], [0], [0], [1], [0, 0, 1, 1], [], []>} : vector<16x9xf32>, vector<9x16xf32>, vector<16x16xf32> -> vector<16x16xf32>
    %151 = arith.addf %112, %150 : vector<16x16xf32>
    %c0_45 = arith.constant 0 : index
    %c0_46 = arith.constant 0 : index
    %152 = vector.load %arg12[%c0_45, %c0_46] : memref<16x32xf32, #tpu.memory_space<vmem>>, vector<16x16xf32>
    tpu.vector_store %arg12[%c0_45, %c0_46], %151 {strides = array<i32>} : memref<16x32xf32, #tpu.memory_space<vmem>>, vector<16x16xf32>,
    %153 = vector.extract_strided_slice %8 {offsets = [0, 16], sizes = [16, 16], strides = [1, 1]} : vector<16x96xf32> to vector<16x16xf32>
    %cst_47 = arith.constant 2.500000e-01 : f32
    %154 = vector.broadcast %cst_47 : f32 to vector<16x16xf32>
    %155 = arith.mulf %153, %154 : vector<16x16xf32>
    %156 = vector.extract_strided_slice %8 {offsets = [0, 48], sizes = [16, 16], strides = [1, 1]} : vector<16x96xf32> to vector<16x16xf32>
    %157 = vector.extract_strided_slice %8 {offsets = [0, 80], sizes = [16, 16], strides = [1, 1]} : vector<16x96xf32> to vector<16x16xf32>
    %cst_48 = arith.constant dense<0.000000e+00> : vector<16x16xf32>
    %158 = tpu.matmul %155, %156, %cst_48 {dimension_numbers = #tpu.dot_dimension_numbers<[1], [1], [0], [0], [0, 0, 1, 0], [], []>} : vector<16x16xf32>, vector<16x16xf32>, vector<16x16xf32> -> vector<16x16xf32>
    %cst_49 = arith.constant dense<0.000000e+00> : vector<16x9xf32>
    %159 = tpu.matmul %155, %35, %cst_49 {dimension_numbers = #tpu.dot_dimension_numbers<[1], [1], [0], [0], [0, 0, 1, 0], [], []>} : vector<16x16xf32>, vector<9x16xf32>, vector<16x9xf32> -> vector<16x9xf32>
    %160 = vector.extract_strided_slice %159 {offsets = [0, 0], sizes = [16, 1], strides = [1, 1]} : vector<16x9xf32> to vector<16x1xf32>
    %cst_50 = arith.constant 0.000000e+00 : f32
    %161 = vector.shape_cast %160 : vector<16x1xf32> to vector<16x1xf32>
    %162 = vector.broadcast %161 : vector<16x1xf32> to vector<16x16xf32>
    %163 = vector.broadcast %cst_50 : f32 to vector<16x16xf32>
    %164 = arith.select %17, %162, %163 : vector<16x16xi1>, vector<16x16xf32>
    %165 = arith.addf %158, %164 : vector<16x16xf32>
    %166 = vector.extract_strided_slice %159 {offsets = [0, 1], sizes = [16, 1], strides = [1, 1]} : vector<16x9xf32> to vector<16x1xf32>
    %cst_51 = arith.constant 0.000000e+00 : f32
    %167 = vector.shape_cast %166 : vector<16x1xf32> to vector<16x1xf32>
    %168 = vector.broadcast %167 : vector<16x1xf32> to vector<16x16xf32>
    %169 = vector.broadcast %cst_51 : f32 to vector<16x16xf32>
    %170 = arith.select %19, %168, %169 : vector<16x16xi1>, vector<16x16xf32>
    %171 = arith.addf %165, %170 : vector<16x16xf32>
    %172 = vector.extract_strided_slice %159 {offsets = [0, 2], sizes = [16, 1], strides = [1, 1]} : vector<16x9xf32> to vector<16x1xf32>
    %cst_52 = arith.constant 0.000000e+00 : f32
    %173 = vector.shape_cast %172 : vector<16x1xf32> to vector<16x1xf32>
    %174 = vector.broadcast %173 : vector<16x1xf32> to vector<16x16xf32>
    %175 = vector.broadcast %cst_52 : f32 to vector<16x16xf32>
    %176 = arith.select %21, %174, %175 : vector<16x16xi1>, vector<16x16xf32>
    %177 = arith.addf %171, %176 : vector<16x16xf32>
    %178 = vector.extract_strided_slice %159 {offsets = [0, 3], sizes = [16, 1], strides = [1, 1]} : vector<16x9xf32> to vector<16x1xf32>
    %cst_53 = arith.constant 0.000000e+00 : f32
    %179 = vector.shape_cast %178 : vector<16x1xf32> to vector<16x1xf32>
    %180 = vector.broadcast %179 : vector<16x1xf32> to vector<16x16xf32>
    %181 = vector.broadcast %cst_53 : f32 to vector<16x16xf32>
    %182 = arith.select %23, %180, %181 : vector<16x16xi1>, vector<16x16xf32>
    %183 = arith.addf %177, %182 : vector<16x16xf32>
    %184 = vector.extract_strided_slice %159 {offsets = [0, 4], sizes = [16, 1], strides = [1, 1]} : vector<16x9xf32> to vector<16x1xf32>
    %cst_54 = arith.constant 0.000000e+00 : f32
    %185 = vector.shape_cast %184 : vector<16x1xf32> to vector<16x1xf32>
    %186 = vector.broadcast %185 : vector<16x1xf32> to vector<16x16xf32>
    %187 = vector.broadcast %cst_54 : f32 to vector<16x16xf32>
    %188 = arith.select %25, %186, %187 : vector<16x16xi1>, vector<16x16xf32>
    %189 = arith.addf %183, %188 : vector<16x16xf32>
    %190 = vector.extract_strided_slice %159 {offsets = [0, 5], sizes = [16, 1], strides = [1, 1]} : vector<16x9xf32> to vector<16x1xf32>
    %cst_55 = arith.constant 0.000000e+00 : f32
    %191 = vector.shape_cast %190 : vector<16x1xf32> to vector<16x1xf32>
    %192 = vector.broadcast %191 : vector<16x1xf32> to vector<16x16xf32>
    %193 = vector.broadcast %cst_55 : f32 to vector<16x16xf32>
    %194 = arith.select %27, %192, %193 : vector<16x16xi1>, vector<16x16xf32>
    %195 = arith.addf %189, %194 : vector<16x16xf32>
    %196 = vector.extract_strided_slice %159 {offsets = [0, 6], sizes = [16, 1], strides = [1, 1]} : vector<16x9xf32> to vector<16x1xf32>
    %cst_56 = arith.constant 0.000000e+00 : f32
    %197 = vector.shape_cast %196 : vector<16x1xf32> to vector<16x1xf32>
    %198 = vector.broadcast %197 : vector<16x1xf32> to vector<16x16xf32>
    %199 = vector.broadcast %cst_56 : f32 to vector<16x16xf32>
    %200 = arith.select %29, %198, %199 : vector<16x16xi1>, vector<16x16xf32>
    %201 = arith.addf %195, %200 : vector<16x16xf32>
    %202 = vector.extract_strided_slice %159 {offsets = [0, 7], sizes = [16, 1], strides = [1, 1]} : vector<16x9xf32> to vector<16x1xf32>
    %cst_57 = arith.constant 0.000000e+00 : f32
    %203 = vector.shape_cast %202 : vector<16x1xf32> to vector<16x1xf32>
    %204 = vector.broadcast %203 : vector<16x1xf32> to vector<16x16xf32>
    %205 = vector.broadcast %cst_57 : f32 to vector<16x16xf32>
    %206 = arith.select %31, %204, %205 : vector<16x16xi1>, vector<16x16xf32>
    %207 = arith.addf %201, %206 : vector<16x16xf32>
    %208 = vector.extract_strided_slice %159 {offsets = [0, 8], sizes = [16, 1], strides = [1, 1]} : vector<16x9xf32> to vector<16x1xf32>
    %cst_58 = arith.constant 0.000000e+00 : f32
    %209 = vector.shape_cast %208 : vector<16x1xf32> to vector<16x1xf32>
    %210 = vector.broadcast %209 : vector<16x1xf32> to vector<16x16xf32>
    %211 = vector.broadcast %cst_58 : f32 to vector<16x16xf32>
    %212 = arith.select %33, %210, %211 : vector<16x16xi1>, vector<16x16xf32>
    %213 = arith.addf %207, %212 : vector<16x16xf32>
    %cst_59 = arith.constant -1.000000e+04 : f32
    %214 = vector.shape_cast %15 : vector<1x16xi1> to vector<1x16xi1>
    %215 = vector.broadcast %214 : vector<1x16xi1> to vector<16x16xi1>
    %216 = vector.broadcast %cst_59 : f32 to vector<16x16xf32>
    %217 = arith.select %215, %213, %216 : vector<16x16xi1>, vector<16x16xf32>
    %cst_60 = arith.constant dense<0xFF800000> : vector<16xf32>
    %218 = vector.multi_reduction <maximumf>, %217, %cst_60 [1] : vector<16x16xf32> to vector<16xf32>
    %219 = vector.shape_cast %218 : vector<16xf32> to vector<16x1xf32>
    %220 = vector.broadcast %219 : vector<16x1xf32> to vector<16x16xf32>
    %221 = arith.subf %217, %220 : vector<16x16xf32>
    %222 = math.exp %221 : vector<16x16xf32>
    %cst_61 = arith.constant dense<0.000000e+00> : vector<16xf32>
    %223 = vector.multi_reduction <add>, %222, %cst_61 [1] : vector<16x16xf32> to vector<16xf32>
    %224 = vector.shape_cast %223 : vector<16xf32> to vector<16x1xf32>
    %225 = vector.broadcast %224 : vector<16x1xf32> to vector<16x16xf32>
    %226 = arith.divf %222, %225 : vector<16x16xf32>
    %cst_62 = arith.constant dense<0.000000e+00> : vector<16x16xf32>
    %227 = tpu.matmul %226, %157, %cst_62 {dimension_numbers = #tpu.dot_dimension_numbers<[1], [0], [0], [1], [0, 0, 1, 1], [], []>} : vector<16x16xf32>, vector<16x16xf32>, vector<16x16xf32> -> vector<16x16xf32>
    %cst_63 = arith.constant 0.000000e+00 : f32
    %228 = vector.broadcast %cst_63 : f32 to vector<16x16xf32>
    %229 = arith.select %17, %226, %228 : vector<16x16xi1>, vector<16x16xf32>
    %cst_64 = arith.constant dense<0.000000e+00> : vector<16xf32>
    %230 = vector.multi_reduction <add>, %229, %cst_64 [1] : vector<16x16xf32> to vector<16xf32>
    %231 = vector.shape_cast %230 : vector<16xf32> to vector<16x1xf32>
    %cst_65 = arith.constant 0.000000e+00 : f32
    %232 = vector.broadcast %cst_65 : f32 to vector<16x16xf32>
    %233 = arith.select %19, %226, %232 : vector<16x16xi1>, vector<16x16xf32>
    %cst_66 = arith.constant dense<0.000000e+00> : vector<16xf32>
    %234 = vector.multi_reduction <add>, %233, %cst_66 [1] : vector<16x16xf32> to vector<16xf32>
    %235 = vector.shape_cast %234 : vector<16xf32> to vector<16x1xf32>
    %cst_67 = arith.constant 0.000000e+00 : f32
    %236 = vector.broadcast %cst_67 : f32 to vector<16x16xf32>
    %237 = arith.select %21, %226, %236 : vector<16x16xi1>, vector<16x16xf32>
    %cst_68 = arith.constant dense<0.000000e+00> : vector<16xf32>
    %238 = vector.multi_reduction <add>, %237, %cst_68 [1] : vector<16x16xf32> to vector<16xf32>
    %239 = vector.shape_cast %238 : vector<16xf32> to vector<16x1xf32>
    %cst_69 = arith.constant 0.000000e+00 : f32
    %240 = vector.broadcast %cst_69 : f32 to vector<16x16xf32>
    %241 = arith.select %23, %226, %240 : vector<16x16xi1>, vector<16x16xf32>
    %cst_70 = arith.constant dense<0.000000e+00> : vector<16xf32>
    %242 = vector.multi_reduction <add>, %241, %cst_70 [1] : vector<16x16xf32> to vector<16xf32>
    %243 = vector.shape_cast %242 : vector<16xf32> to vector<16x1xf32>
    %cst_71 = arith.constant 0.000000e+00 : f32
    %244 = vector.broadcast %cst_71 : f32 to vector<16x16xf32>
    %245 = arith.select %25, %226, %244 : vector<16x16xi1>, vector<16x16xf32>
    %cst_72 = arith.constant dense<0.000000e+00> : vector<16xf32>
    %246 = vector.multi_reduction <add>, %245, %cst_72 [1] : vector<16x16xf32> to vector<16xf32>
    %247 = vector.shape_cast %246 : vector<16xf32> to vector<16x1xf32>
    %cst_73 = arith.constant 0.000000e+00 : f32
    %248 = vector.broadcast %cst_73 : f32 to vector<16x16xf32>
    %249 = arith.select %27, %226, %248 : vector<16x16xi1>, vector<16x16xf32>
    %cst_74 = arith.constant dense<0.000000e+00> : vector<16xf32>
    %250 = vector.multi_reduction <add>, %249, %cst_74 [1] : vector<16x16xf32> to vector<16xf32>
    %251 = vector.shape_cast %250 : vector<16xf32> to vector<16x1xf32>
    %cst_75 = arith.constant 0.000000e+00 : f32
    %252 = vector.broadcast %cst_75 : f32 to vector<16x16xf32>
    %253 = arith.select %29, %226, %252 : vector<16x16xi1>, vector<16x16xf32>
    %cst_76 = arith.constant dense<0.000000e+00> : vector<16xf32>
    %254 = vector.multi_reduction <add>, %253, %cst_76 [1] : vector<16x16xf32> to vector<16xf32>
    %255 = vector.shape_cast %254 : vector<16xf32> to vector<16x1xf32>
    %cst_77 = arith.constant 0.000000e+00 : f32
    %256 = vector.broadcast %cst_77 : f32 to vector<16x16xf32>
    %257 = arith.select %31, %226, %256 : vector<16x16xi1>, vector<16x16xf32>
    %cst_78 = arith.constant dense<0.000000e+00> : vector<16xf32>
    %258 = vector.multi_reduction <add>, %257, %cst_78 [1] : vector<16x16xf32> to vector<16xf32>
    %259 = vector.shape_cast %258 : vector<16xf32> to vector<16x1xf32>
    %cst_79 = arith.constant 0.000000e+00 : f32
    %260 = vector.broadcast %cst_79 : f32 to vector<16x16xf32>
    %261 = arith.select %33, %226, %260 : vector<16x16xi1>, vector<16x16xf32>
    %cst_80 = arith.constant dense<0.000000e+00> : vector<16xf32>
    %262 = vector.multi_reduction <add>, %261, %cst_80 [1] : vector<16x16xf32> to vector<16xf32>
    %263 = vector.shape_cast %262 : vector<16xf32> to vector<16x1xf32>
    %264 = tpu.concatenate %231, %235, %239, %243, %247, %251, %255, %259, %263 in 1 : vector<16x1xf32>, vector<16x1xf32>, vector<16x1xf32>, vector<16x1xf32>, vector<16x1xf32>, vector<16x1xf32>, vector<16x1xf32>, vector<16x1xf32>, vector<16x1xf32> -> vector<16x9xf32>
    %cst_81 = arith.constant dense<0.000000e+00> : vector<16x16xf32>
    %265 = tpu.matmul %264, %37, %cst_81 {dimension_numbers = #tpu.dot_dimension_numbers<[1], [0], [0], [1], [0, 0, 1, 1], [], []>} : vector<16x9xf32>, vector<9x16xf32>, vector<16x16xf32> -> vector<16x16xf32>
    %266 = arith.addf %227, %265 : vector<16x16xf32>
    %c0_82 = arith.constant 0 : index
    %c16 = arith.constant 16 : index
    %267 = vector.load %arg12[%c0_82, %c16] : memref<16x32xf32, #tpu.memory_space<vmem>>, vector<16x16xf32>
    tpu.vector_store %arg12[%c0_82, %c16], %266 {strides = array<i32>} : memref<16x32xf32, #tpu.memory_space<vmem>>, vector<16x16xf32>,
    %c0_83 = arith.constant 0 : index
    %c0_84 = arith.constant 0 : index
    %268 = vector.load %arg12[%c0_83, %c0_84] : memref<16x32xf32, #tpu.memory_space<vmem>>, vector<16x32xf32>
    %269 = arith.truncf %268 : vector<16x32xf32> to vector<16x32xbf16>
    %c0_85 = arith.constant 0 : index
    %c0_86 = arith.constant 0 : index
    %270 = vector.load %arg7[%c0_85, %c0_86] : memref<32x32xbf16, #tpu.memory_space<vmem>>, vector<32x32xbf16>
    %cst_87 = arith.constant dense<0.000000e+00> : vector<16x32xf32>
    %271 = tpu.matmul %269, %270, %cst_87 {dimension_numbers = #tpu.dot_dimension_numbers<[1], [0], [0], [1], [0, 0, 1, 1], [], []>} : vector<16x32xbf16>, vector<32x32xbf16>, vector<16x32xf32> -> vector<16x32xf32>
    %c0_88 = arith.constant 0 : index
    %c0_89 = arith.constant 0 : index
    %272 = vector.load %arg8[%c0_88, %c0_89] : memref<1x32xf32, #tpu.memory_space<vmem>>, vector<1x32xf32>
    %273 = vector.broadcast %272 : vector<1x32xf32> to vector<16x32xf32>
    %274 = arith.addf %271, %273 : vector<16x32xf32>
    %275 = arith.extf %3 : vector<16x32xbf16> to vector<16x32xf32>
    %276 = arith.addf %275, %274 : vector<16x32xf32>
    %c0_90 = arith.constant 0 : index
    %c0_91 = arith.constant 0 : index
    %277 = vector.load %arg9[%c0_90, %c0_91] : memref<1x32xf32, #tpu.memory_space<vmem>>, vector<1x32xf32>
    %c0_92 = arith.constant 0 : index
    %c0_93 = arith.constant 0 : index
    %278 = vector.load %arg10[%c0_92, %c0_93] : memref<1x32xf32, #tpu.memory_space<vmem>>, vector<1x32xf32>
    %cst_94 = arith.constant dense<0.000000e+00> : vector<16xf32>
    %279 = vector.multi_reduction <add>, %276, %cst_94 [1] : vector<16x32xf32> to vector<16xf32>
    %280 = vector.shape_cast %279 : vector<16xf32> to vector<16x1xf32>
    %cst_95 = arith.constant 3.200000e+01 : f32
    %281 = vector.broadcast %cst_95 : f32 to vector<16x1xf32>
    %282 = arith.divf %280, %281 : vector<16x1xf32>
    %283 = vector.broadcast %282 : vector<16x1xf32> to vector<16x32xf32>
    %284 = arith.subf %276, %283 : vector<16x32xf32>
    %285 = arith.mulf %284, %284 : vector<16x32xf32>
    %cst_96 = arith.constant dense<0.000000e+00> : vector<16xf32>
    %286 = vector.multi_reduction <add>, %285, %cst_96 [1] : vector<16x32xf32> to vector<16xf32>
    %287 = vector.shape_cast %286 : vector<16xf32> to vector<16x1xf32>
    %cst_97 = arith.constant 3.200000e+01 : f32
    %288 = vector.broadcast %cst_97 : f32 to vector<16x1xf32>
    %289 = arith.divf %287, %288 : vector<16x1xf32>
    %290 = vector.broadcast %282 : vector<16x1xf32> to vector<16x32xf32>
    %291 = arith.subf %276, %290 : vector<16x32xf32>
    %cst_98 = arith.constant 9.99999974E-6 : f32
    %292 = vector.broadcast %cst_98 : f32 to vector<16x1xf32>
    %293 = arith.addf %289, %292 : vector<16x1xf32>
    %294 = math.rsqrt %293 : vector<16x1xf32>
    %295 = vector.broadcast %294 : vector<16x1xf32> to vector<16x32xf32>
    %296 = arith.mulf %291, %295 : vector<16x32xf32>
    %297 = vector.broadcast %277 : vector<1x32xf32> to vector<16x32xf32>
    %298 = arith.mulf %296, %297 : vector<16x32xf32>
    %299 = vector.broadcast %278 : vector<1x32xf32> to vector<16x32xf32>
    %300 = arith.addf %298, %299 : vector<16x32xf32>
    %301 = arith.truncf %300 : vector<16x32xf32> to vector<16x32xbf16>
    %c0_99 = arith.constant 0 : index
    %c0_100 = arith.constant 0 : index
    %c0_101 = arith.constant 0 : index
    %302 = vector.load %arg11[%c0_99, %c0_100, %c0_101] : memref<1x16x32xbf16, #tpu.memory_space<vmem>>, vector<1x16x32xbf16>
    %303 = vector.shape_cast %302 : vector<1x16x32xbf16> to vector<16x32xbf16>
    %304 = vector.shape_cast %301 : vector<16x32xbf16> to vector<1x16x32xbf16>
    tpu.vector_store %arg11[%c0_99, %c0_100, %c0_101], %304 {strides = array<i32>} : memref<1x16x32xbf16, #tpu.memory_space<vmem>>, vector<1x16x32xbf16>,
    return
  }
  func.func @transform_0(%arg0: i32, %arg1: memref<2xi32, #tpu.memory_space<smem>>) -> (i32, i32, i32) {
    %c0_i32 = arith.constant 0 : i32
    %c0_i32_0 = arith.constant 0 : i32
    %c0_i32_1 = arith.constant 0 : i32
    return %arg0, %c0_i32, %c0_i32_0 : i32, i32, i32
  }
  func.func @transform_1(%arg0: i32, %arg1: memref<2xi32, #tpu.memory_space<smem>>) -> (i32, i32) {
    %c0_i32 = arith.constant 0 : i32
    %c0_i32_0 = arith.constant 0 : i32
    %c0_i32_1 = arith.constant 0 : i32
    return %c0_i32, %c0_i32_0 : i32, i32
  }
  func.func @transform_2(%arg0: i32, %arg1: memref<2xi32, #tpu.memory_space<smem>>) -> (i32, i32) {
    %c0_i32 = arith.constant 0 : i32
    %c0_i32_0 = arith.constant 0 : i32
    %c0_i32_1 = arith.constant 0 : i32
    return %c0_i32, %c0_i32_0 : i32, i32
  }
  func.func @transform_3(%arg0: i32, %arg1: memref<2xi32, #tpu.memory_space<smem>>) -> (i32, i32) {
    %c0_i32 = arith.constant 0 : i32
    %c0_i32_0 = arith.constant 0 : i32
    %c0_i32_1 = arith.constant 0 : i32
    return %c0_i32, %c0_i32_0 : i32, i32
  }
  func.func @transform_4(%arg0: i32, %arg1: memref<2xi32, #tpu.memory_space<smem>>) -> (i32, i32) {
    %c0_i32 = arith.constant 0 : i32
    %c0_i32_0 = arith.constant 0 : i32
    %c0_i32_1 = arith.constant 0 : i32
    return %c0_i32, %c0_i32_0 : i32, i32
  }
  func.func @transform_5(%arg0: i32, %arg1: memref<2xi32, #tpu.memory_space<smem>>) -> (i32, i32) {
    %c0_i32 = arith.constant 0 : i32
    %c0_i32_0 = arith.constant 0 : i32
    %c0_i32_1 = arith.constant 0 : i32
    return %c0_i32, %c0_i32_0 : i32, i32
  }
  func.func @transform_6(%arg0: i32, %arg1: memref<2xi32, #tpu.memory_space<smem>>) -> (i32, i32) {
    %c0_i32 = arith.constant 0 : i32
    %c0_i32_0 = arith.constant 0 : i32
    %c0_i32_1 = arith.constant 0 : i32
    return %c0_i32, %c0_i32_0 : i32, i32
  }
  func.func @transform_7(%arg0: i32, %arg1: memref<2xi32, #tpu.memory_space<smem>>) -> (i32, i32) {
    %c0_i32 = arith.constant 0 : i32
    %c0_i32_0 = arith.constant 0 : i32
    %c0_i32_1 = arith.constant 0 : i32
    return %c0_i32, %c0_i32_0 : i32, i32
  }
  func.func @transform_8(%arg0: i32, %arg1: memref<2xi32, #tpu.memory_space<smem>>) -> (i32, i32) {
    %c0_i32 = arith.constant 0 : i32
    %c0_i32_0 = arith.constant 0 : i32
    %c0_i32_1 = arith.constant 0 : i32
    return %c0_i32, %c0_i32_0 : i32, i32
  }
  func.func @transform_9(%arg0: i32, %arg1: memref<2xi32, #tpu.memory_space<smem>>) -> (i32, i32, i32) {
    %c0_i32 = arith.constant 0 : i32
    %c0_i32_0 = arith.constant 0 : i32
    %c0_i32_1 = arith.constant 0 : i32
    return %arg0, %c0_i32, %c0_i32_0 : i32, i32, i32
  }
}

module attributes {stable_mosaic.version = 11 : i64} {
  func.func @_ffn_block_kernel(%arg0: i32, %arg1: memref<2xi32, #tpu.memory_space<smem>>, %arg2: memref<1x16x32xbf16, #tpu.memory_space<vmem>>, %arg3: memref<3x32x64xbf16, #tpu.memory_space<vmem>>, %arg4: memref<1x64xf32, #tpu.memory_space<vmem>>, %arg5: memref<3x64x32xbf16, #tpu.memory_space<vmem>>, %arg6: memref<1x32xf32, #tpu.memory_space<vmem>>, %arg7: memref<1x32xf32, #tpu.memory_space<vmem>>, %arg8: memref<1x32xf32, #tpu.memory_space<vmem>>, %arg9: memref<1x16x32xbf16, #tpu.memory_space<vmem>>) attributes {dimension_semantics = [#tpu.dimension_semantics<parallel>], iteration_bounds = array<i64: 2>, scalar_prefetch = 1 : i64, scratch_operands = 0 : i64, tpu.core_type = #tpu.core_type<tc>, window_params = [{transform_indices = @transform_0, window_bounds = array<i64: 1, 16, 32>}, {pipeline_mode = #tpu.pipeline_mode<synchronous>, transform_indices = @transform_1, window_bounds = array<i64: 3, 32, 64>}, {pipeline_mode = #tpu.pipeline_mode<synchronous>, transform_indices = @transform_2, window_bounds = array<i64: 1, 64>}, {pipeline_mode = #tpu.pipeline_mode<synchronous>, transform_indices = @transform_3, window_bounds = array<i64: 3, 64, 32>}, {pipeline_mode = #tpu.pipeline_mode<synchronous>, transform_indices = @transform_4, window_bounds = array<i64: 1, 32>}, {pipeline_mode = #tpu.pipeline_mode<synchronous>, transform_indices = @transform_5, window_bounds = array<i64: 1, 32>}, {pipeline_mode = #tpu.pipeline_mode<synchronous>, transform_indices = @transform_6, window_bounds = array<i64: 1, 32>}, {transform_indices = @transform_7, window_bounds = array<i64: 1, 16, 32>}]} {
    %0 = arith.index_cast %arg0 : i32 to index
    %1 = memref.load %arg1[%0] : memref<2xi32, #tpu.memory_space<smem>>
    %2 = tpu.iota {dimensions = array<i32: 0>} : vector<16x1xi32>
    %3 = vector.broadcast %1 : i32 to vector<16x1xi32>
    %4 = arith.cmpi slt, %2, %3 : vector<16x1xi32>
    %c0 = arith.constant 0 : index
    %c0_0 = arith.constant 0 : index
    %c0_1 = arith.constant 0 : index
    %5 = vector.load %arg2[%c0, %c0_0, %c0_1] : memref<1x16x32xbf16, #tpu.memory_space<vmem>>, vector<1x16x32xbf16>
    %6 = vector.shape_cast %5 : vector<1x16x32xbf16> to vector<16x32xbf16>
    %cst = arith.constant 0.000000e+00 : bf16
    %7 = vector.shape_cast %4 : vector<16x1xi1> to vector<16x1xi1>
    %8 = vector.broadcast %7 : vector<16x1xi1> to vector<16x32xi1>
    %9 = vector.broadcast %cst : bf16 to vector<16x32xbf16>
    %10 = arith.select %8, %6, %9 : vector<16x32xi1>, vector<16x32xbf16>
    %c0_2 = arith.constant 0 : index
    %c0_3 = arith.constant 0 : index
    %11 = vector.load %arg4[%c0_2, %c0_3] : memref<1x64xf32, #tpu.memory_space<vmem>>, vector<1x64xf32>
    %cst_4 = arith.constant 0.000000e+00 : f32
    %12 = vector.broadcast %cst_4 : f32 to vector<16x64xf32>
    %c0_5 = arith.constant 0 : index
    %c0_6 = arith.constant 0 : index
    %c0_7 = arith.constant 0 : index
    %13 = vector.load %arg3[%c0_5, %c0_6, %c0_7] : memref<3x32x64xbf16, #tpu.memory_space<vmem>>, vector<1x32x64xbf16>
    %14 = vector.shape_cast %13 : vector<1x32x64xbf16> to vector<32x64xbf16>
    %cst_8 = arith.constant dense<0.000000e+00> : vector<16x64xf32>
    %15 = tpu.matmul %10, %14, %cst_8 {dimension_numbers = #tpu.dot_dimension_numbers<[1], [0], [0], [1], [0, 0, 1, 1], [], []>} : vector<16x32xbf16>, vector<32x64xbf16>, vector<16x64xf32> -> vector<16x64xf32>
    %cst_9 = arith.constant 0.000000e+00 : f32
    %16 = vector.broadcast %cst_9 : f32 to vector<1x64xf32>
    %17 = vector.extract_strided_slice %15 {offsets = [0, 0], sizes = [15, 64], strides = [1, 1]} : vector<16x64xf32> to vector<15x64xf32>
    %18 = tpu.concatenate %16, %17 in 0 : vector<1x64xf32>, vector<15x64xf32> -> vector<16x64xf32>
    %19 = arith.addf %12, %18 : vector<16x64xf32>
    %c1 = arith.constant 1 : index
    %c0_10 = arith.constant 0 : index
    %c0_11 = arith.constant 0 : index
    %20 = vector.load %arg3[%c1, %c0_10, %c0_11] : memref<3x32x64xbf16, #tpu.memory_space<vmem>>, vector<1x32x64xbf16>
    %21 = vector.shape_cast %20 : vector<1x32x64xbf16> to vector<32x64xbf16>
    %cst_12 = arith.constant dense<0.000000e+00> : vector<16x64xf32>
    %22 = tpu.matmul %10, %21, %cst_12 {dimension_numbers = #tpu.dot_dimension_numbers<[1], [0], [0], [1], [0, 0, 1, 1], [], []>} : vector<16x32xbf16>, vector<32x64xbf16>, vector<16x64xf32> -> vector<16x64xf32>
    %23 = arith.addf %19, %22 : vector<16x64xf32>
    %c2 = arith.constant 2 : index
    %c0_13 = arith.constant 0 : index
    %c0_14 = arith.constant 0 : index
    %24 = vector.load %arg3[%c2, %c0_13, %c0_14] : memref<3x32x64xbf16, #tpu.memory_space<vmem>>, vector<1x32x64xbf16>
    %25 = vector.shape_cast %24 : vector<1x32x64xbf16> to vector<32x64xbf16>
    %cst_15 = arith.constant dense<0.000000e+00> : vector<16x64xf32>
    %26 = tpu.matmul %10, %25, %cst_15 {dimension_numbers = #tpu.dot_dimension_numbers<[1], [0], [0], [1], [0, 0, 1, 1], [], []>} : vector<16x32xbf16>, vector<32x64xbf16>, vector<16x64xf32> -> vector<16x64xf32>
    %cst_16 = arith.constant 0.000000e+00 : f32
    %27 = vector.broadcast %cst_16 : f32 to vector<1x64xf32>
    %28 = vector.extract_strided_slice %26 {offsets = [1, 0], sizes = [15, 64], strides = [1, 1]} : vector<16x64xf32> to vector<15x64xf32>
    %29 = tpu.concatenate %28, %27 in 0 : vector<15x64xf32>, vector<1x64xf32> -> vector<16x64xf32>
    %30 = arith.addf %23, %29 : vector<16x64xf32>
    %31 = vector.broadcast %11 : vector<1x64xf32> to vector<16x64xf32>
    %32 = arith.addf %30, %31 : vector<16x64xf32>
    %cst_17 = arith.constant 0.000000e+00 : f32
    %33 = vector.broadcast %cst_17 : f32 to vector<16x64xf32>
    %34 = arith.maximumf %32, %33 : vector<16x64xf32>
    %cst_18 = arith.constant 0.000000e+00 : f32
    %35 = vector.shape_cast %4 : vector<16x1xi1> to vector<16x1xi1>
    %36 = vector.broadcast %35 : vector<16x1xi1> to vector<16x64xi1>
    %37 = vector.broadcast %cst_18 : f32 to vector<16x64xf32>
    %38 = arith.select %36, %34, %37 : vector<16x64xi1>, vector<16x64xf32>
    %39 = arith.truncf %38 : vector<16x64xf32> to vector<16x64xbf16>
    %c0_19 = arith.constant 0 : index
    %c0_20 = arith.constant 0 : index
    %40 = vector.load %arg6[%c0_19, %c0_20] : memref<1x32xf32, #tpu.memory_space<vmem>>, vector<1x32xf32>
    %cst_21 = arith.constant 0.000000e+00 : f32
    %41 = vector.broadcast %cst_21 : f32 to vector<16x32xf32>
    %c0_22 = arith.constant 0 : index
    %c0_23 = arith.constant 0 : index
    %c0_24 = arith.constant 0 : index
    %42 = vector.load %arg5[%c0_22, %c0_23, %c0_24] : memref<3x64x32xbf16, #tpu.memory_space<vmem>>, vector<1x64x32xbf16>
    %43 = vector.shape_cast %42 : vector<1x64x32xbf16> to vector<64x32xbf16>
    %cst_25 = arith.constant dense<0.000000e+00> : vector<16x32xf32>
    %44 = tpu.matmul %39, %43, %cst_25 {dimension_numbers = #tpu.dot_dimension_numbers<[1], [0], [0], [1], [0, 0, 1, 1], [], []>} : vector<16x64xbf16>, vector<64x32xbf16>, vector<16x32xf32> -> vector<16x32xf32>
    %cst_26 = arith.constant 0.000000e+00 : f32
    %45 = vector.broadcast %cst_26 : f32 to vector<1x32xf32>
    %46 = vector.extract_strided_slice %44 {offsets = [0, 0], sizes = [15, 32], strides = [1, 1]} : vector<16x32xf32> to vector<15x32xf32>
    %47 = tpu.concatenate %45, %46 in 0 : vector<1x32xf32>, vector<15x32xf32> -> vector<16x32xf32>
    %48 = arith.addf %41, %47 : vector<16x32xf32>
    %c1_27 = arith.constant 1 : index
    %c0_28 = arith.constant 0 : index
    %c0_29 = arith.constant 0 : index
    %49 = vector.load %arg5[%c1_27, %c0_28, %c0_29] : memref<3x64x32xbf16, #tpu.memory_space<vmem>>, vector<1x64x32xbf16>
    %50 = vector.shape_cast %49 : vector<1x64x32xbf16> to vector<64x32xbf16>
    %cst_30 = arith.constant dense<0.000000e+00> : vector<16x32xf32>
    %51 = tpu.matmul %39, %50, %cst_30 {dimension_numbers = #tpu.dot_dimension_numbers<[1], [0], [0], [1], [0, 0, 1, 1], [], []>} : vector<16x64xbf16>, vector<64x32xbf16>, vector<16x32xf32> -> vector<16x32xf32>
    %52 = arith.addf %48, %51 : vector<16x32xf32>
    %c2_31 = arith.constant 2 : index
    %c0_32 = arith.constant 0 : index
    %c0_33 = arith.constant 0 : index
    %53 = vector.load %arg5[%c2_31, %c0_32, %c0_33] : memref<3x64x32xbf16, #tpu.memory_space<vmem>>, vector<1x64x32xbf16>
    %54 = vector.shape_cast %53 : vector<1x64x32xbf16> to vector<64x32xbf16>
    %cst_34 = arith.constant dense<0.000000e+00> : vector<16x32xf32>
    %55 = tpu.matmul %39, %54, %cst_34 {dimension_numbers = #tpu.dot_dimension_numbers<[1], [0], [0], [1], [0, 0, 1, 1], [], []>} : vector<16x64xbf16>, vector<64x32xbf16>, vector<16x32xf32> -> vector<16x32xf32>
    %cst_35 = arith.constant 0.000000e+00 : f32
    %56 = vector.broadcast %cst_35 : f32 to vector<1x32xf32>
    %57 = vector.extract_strided_slice %55 {offsets = [1, 0], sizes = [15, 32], strides = [1, 1]} : vector<16x32xf32> to vector<15x32xf32>
    %58 = tpu.concatenate %57, %56 in 0 : vector<15x32xf32>, vector<1x32xf32> -> vector<16x32xf32>
    %59 = arith.addf %52, %58 : vector<16x32xf32>
    %60 = vector.broadcast %40 : vector<1x32xf32> to vector<16x32xf32>
    %61 = arith.addf %59, %60 : vector<16x32xf32>
    %62 = arith.extf %6 : vector<16x32xbf16> to vector<16x32xf32>
    %63 = arith.addf %62, %61 : vector<16x32xf32>
    %c0_36 = arith.constant 0 : index
    %c0_37 = arith.constant 0 : index
    %64 = vector.load %arg7[%c0_36, %c0_37] : memref<1x32xf32, #tpu.memory_space<vmem>>, vector<1x32xf32>
    %c0_38 = arith.constant 0 : index
    %c0_39 = arith.constant 0 : index
    %65 = vector.load %arg8[%c0_38, %c0_39] : memref<1x32xf32, #tpu.memory_space<vmem>>, vector<1x32xf32>
    %cst_40 = arith.constant dense<0.000000e+00> : vector<16xf32>
    %66 = vector.multi_reduction <add>, %63, %cst_40 [1] : vector<16x32xf32> to vector<16xf32>
    %67 = vector.shape_cast %66 : vector<16xf32> to vector<16x1xf32>
    %cst_41 = arith.constant 3.200000e+01 : f32
    %68 = vector.broadcast %cst_41 : f32 to vector<16x1xf32>
    %69 = arith.divf %67, %68 : vector<16x1xf32>
    %70 = vector.broadcast %69 : vector<16x1xf32> to vector<16x32xf32>
    %71 = arith.subf %63, %70 : vector<16x32xf32>
    %72 = arith.mulf %71, %71 : vector<16x32xf32>
    %cst_42 = arith.constant dense<0.000000e+00> : vector<16xf32>
    %73 = vector.multi_reduction <add>, %72, %cst_42 [1] : vector<16x32xf32> to vector<16xf32>
    %74 = vector.shape_cast %73 : vector<16xf32> to vector<16x1xf32>
    %cst_43 = arith.constant 3.200000e+01 : f32
    %75 = vector.broadcast %cst_43 : f32 to vector<16x1xf32>
    %76 = arith.divf %74, %75 : vector<16x1xf32>
    %77 = vector.broadcast %69 : vector<16x1xf32> to vector<16x32xf32>
    %78 = arith.subf %63, %77 : vector<16x32xf32>
    %cst_44 = arith.constant 9.99999974E-6 : f32
    %79 = vector.broadcast %cst_44 : f32 to vector<16x1xf32>
    %80 = arith.addf %76, %79 : vector<16x1xf32>
    %81 = math.rsqrt %80 : vector<16x1xf32>
    %82 = vector.broadcast %81 : vector<16x1xf32> to vector<16x32xf32>
    %83 = arith.mulf %78, %82 : vector<16x32xf32>
    %84 = vector.broadcast %64 : vector<1x32xf32> to vector<16x32xf32>
    %85 = arith.mulf %83, %84 : vector<16x32xf32>
    %86 = vector.broadcast %65 : vector<1x32xf32> to vector<16x32xf32>
    %87 = arith.addf %85, %86 : vector<16x32xf32>
    %cst_45 = arith.constant 0.000000e+00 : f32
    %88 = vector.shape_cast %4 : vector<16x1xi1> to vector<16x1xi1>
    %89 = vector.broadcast %88 : vector<16x1xi1> to vector<16x32xi1>
    %90 = vector.broadcast %cst_45 : f32 to vector<16x32xf32>
    %91 = arith.select %89, %87, %90 : vector<16x32xi1>, vector<16x32xf32>
    %92 = arith.truncf %91 : vector<16x32xf32> to vector<16x32xbf16>
    %c0_46 = arith.constant 0 : index
    %c0_47 = arith.constant 0 : index
    %c0_48 = arith.constant 0 : index
    %93 = vector.load %arg9[%c0_46, %c0_47, %c0_48] : memref<1x16x32xbf16, #tpu.memory_space<vmem>>, vector<1x16x32xbf16>
    %94 = vector.shape_cast %93 : vector<1x16x32xbf16> to vector<16x32xbf16>
    %95 = vector.shape_cast %92 : vector<16x32xbf16> to vector<1x16x32xbf16>
    tpu.vector_store %arg9[%c0_46, %c0_47, %c0_48], %95 {strides = array<i32>} : memref<1x16x32xbf16, #tpu.memory_space<vmem>>, vector<1x16x32xbf16>,
    return
  }
  func.func @transform_0(%arg0: i32, %arg1: memref<2xi32, #tpu.memory_space<smem>>) -> (i32, i32, i32) {
    %c0_i32 = arith.constant 0 : i32
    %c0_i32_0 = arith.constant 0 : i32
    %c0_i32_1 = arith.constant 0 : i32
    return %arg0, %c0_i32, %c0_i32_0 : i32, i32, i32
  }
  func.func @transform_1(%arg0: i32, %arg1: memref<2xi32, #tpu.memory_space<smem>>) -> (i32, i32, i32) {
    %c0_i32 = arith.constant 0 : i32
    %c0_i32_0 = arith.constant 0 : i32
    %c0_i32_1 = arith.constant 0 : i32
    %c0_i32_2 = arith.constant 0 : i32
    return %c0_i32, %c0_i32_0, %c0_i32_1 : i32, i32, i32
  }
  func.func @transform_2(%arg0: i32, %arg1: memref<2xi32, #tpu.memory_space<smem>>) -> (i32, i32) {
    %c0_i32 = arith.constant 0 : i32
    %c0_i32_0 = arith.constant 0 : i32
    %c0_i32_1 = arith.constant 0 : i32
    return %c0_i32, %c0_i32_0 : i32, i32
  }
  func.func @transform_3(%arg0: i32, %arg1: memref<2xi32, #tpu.memory_space<smem>>) -> (i32, i32, i32) {
    %c0_i32 = arith.constant 0 : i32
    %c0_i32_0 = arith.constant 0 : i32
    %c0_i32_1 = arith.constant 0 : i32
    %c0_i32_2 = arith.constant 0 : i32
    return %c0_i32, %c0_i32_0, %c0_i32_1 : i32, i32, i32
  }
  func.func @transform_4(%arg0: i32, %arg1: memref<2xi32, #tpu.memory_space<smem>>) -> (i32, i32) {
    %c0_i32 = arith.constant 0 : i32
    %c0_i32_0 = arith.constant 0 : i32
    %c0_i32_1 = arith.constant 0 : i32
    return %c0_i32, %c0_i32_0 : i32, i32
  }
  func.func @transform_5(%arg0: i32, %arg1: memref<2xi32, #tpu.memory_space<smem>>) -> (i32, i32) {
    %c0_i32 = arith.constant 0 : i32
    %c0_i32_0 = arith.constant 0 : i32
    %c0_i32_1 = arith.constant 0 : i32
    return %c0_i32, %c0_i32_0 : i32, i32
  }
  func.func @transform_6(%arg0: i32, %arg1: memref<2xi32, #tpu.memory_space<smem>>) -> (i32, i32) {
    %c0_i32 = arith.constant 0 : i32
    %c0_i32_0 = arith.constant 0 : i32
    %c0_i32_1 = arith.constant 0 : i32
    return %c0_i32, %c0_i32_0 : i32, i32
  }
  func.func @transform_7(%arg0: i32, %arg1: memref<2xi32, #tpu.memory_space<smem>>) -> (i32, i32, i32) {
    %c0_i32 = arith.constant 0 : i32
    %c0_i32_0 = arith.constant 0 : i32
    %c0_i32_1 = arith.constant 0 : i32
    return %arg0, %c0_i32, %c0_i32_0 : i32, i32, i32
  }
}

module attributes {stable_mosaic.version = 11 : i64} {
  func.func @_linear_kernel(%arg0: i32, %arg1: i32, %arg2: memref<2xi32, #tpu.memory_space<smem>>, %arg3: memref<1x16x32xbf16, #tpu.memory_space<vmem>>, %arg4: memref<32x16xbf16, #tpu.memory_space<vmem>>, %arg5: memref<1x16xf32, #tpu.memory_space<vmem>>, %arg6: memref<1x16x16xbf16, #tpu.memory_space<vmem>>) attributes {dimension_semantics = [#tpu.dimension_semantics<parallel>, #tpu.dimension_semantics<parallel>], iteration_bounds = array<i64: 2, 1>, scalar_prefetch = 1 : i64, scratch_operands = 0 : i64, tpu.core_type = #tpu.core_type<tc>, window_params = [{transform_indices = @transform_0, window_bounds = array<i64: 1, 16, 32>}, {pipeline_mode = #tpu.pipeline_mode<synchronous>, transform_indices = @transform_1, window_bounds = array<i64: 32, 16>}, {pipeline_mode = #tpu.pipeline_mode<synchronous>, transform_indices = @transform_2, window_bounds = array<i64: 1, 16>}, {transform_indices = @transform_3, window_bounds = array<i64: 1, 16, 16>}]} {
    %c0 = arith.constant 0 : index
    %c0_0 = arith.constant 0 : index
    %c0_1 = arith.constant 0 : index
    %0 = vector.load %arg3[%c0, %c0_0, %c0_1] : memref<1x16x32xbf16, #tpu.memory_space<vmem>>, vector<1x16x32xbf16>
    %1 = vector.shape_cast %0 : vector<1x16x32xbf16> to vector<16x32xbf16>
    %c0_2 = arith.constant 0 : index
    %c0_3 = arith.constant 0 : index
    %2 = vector.load %arg4[%c0_2, %c0_3] : memref<32x16xbf16, #tpu.memory_space<vmem>>, vector<32x16xbf16>
    %cst = arith.constant dense<0.000000e+00> : vector<16x16xf32>
    %3 = tpu.matmul %1, %2, %cst {dimension_numbers = #tpu.dot_dimension_numbers<[1], [0], [0], [1], [0, 0, 1, 1], [], []>} : vector<16x32xbf16>, vector<32x16xbf16>, vector<16x16xf32> -> vector<16x16xf32>
    %c0_4 = arith.constant 0 : index
    %c0_5 = arith.constant 0 : index
    %4 = vector.load %arg5[%c0_4, %c0_5] : memref<1x16xf32, #tpu.memory_space<vmem>>, vector<1x16xf32>
    %5 = vector.broadcast %4 : vector<1x16xf32> to vector<16x16xf32>
    %6 = arith.addf %3, %5 : vector<16x16xf32>
    %c16_i32 = arith.constant 16 : i32
    %7 = arith.muli %arg1, %c16_i32 : i32
    %8 = tpu.iota {dimensions = array<i32: 0>} : vector<16x16xi32>
    %9 = vector.broadcast %7 : i32 to vector<16x16xi32>
    %10 = arith.addi %9, %8 : vector<16x16xi32>
    %11 = arith.index_cast %arg0 : i32 to index
    %12 = memref.load %arg2[%11] : memref<2xi32, #tpu.memory_space<smem>>
    %13 = vector.broadcast %12 : i32 to vector<16x16xi32>
    %14 = arith.cmpi slt, %10, %13 : vector<16x16xi32>
    %cst_6 = arith.constant 0.000000e+00 : f32
    %15 = vector.broadcast %cst_6 : f32 to vector<16x16xf32>
    %16 = arith.select %14, %6, %15 : vector<16x16xi1>, vector<16x16xf32>
    %17 = arith.truncf %16 : vector<16x16xf32> to vector<16x16xbf16>
    %c0_7 = arith.constant 0 : index
    %c0_8 = arith.constant 0 : index
    %c0_9 = arith.constant 0 : index
    %18 = vector.load %arg6[%c0_7, %c0_8, %c0_9] : memref<1x16x16xbf16, #tpu.memory_space<vmem>>, vector<1x16x16xbf16>
    %19 = vector.shape_cast %18 : vector<1x16x16xbf16> to vector<16x16xbf16>
    %20 = vector.shape_cast %17 : vector<16x16xbf16> to vector<1x16x16xbf16>
    tpu.vector_store %arg6[%c0_7, %c0_8, %c0_9], %20 {strides = array<i32>} : memref<1x16x16xbf16, #tpu.memory_space<vmem>>, vector<1x16x16xbf16>,
    return
  }
  func.func @transform_0(%arg0: i32, %arg1: i32, %arg2: memref<2xi32, #tpu.memory_space<smem>>) -> (i32, i32, i32) {
    %c0_i32 = arith.constant 0 : i32
    %c0_i32_0 = arith.constant 0 : i32
    return %arg0, %arg1, %c0_i32 : i32, i32, i32
  }
  func.func @transform_1(%arg0: i32, %arg1: i32, %arg2: memref<2xi32, #tpu.memory_space<smem>>) -> (i32, i32) {
    %c0_i32 = arith.constant 0 : i32
    %c0_i32_0 = arith.constant 0 : i32
    %c0_i32_1 = arith.constant 0 : i32
    return %c0_i32, %c0_i32_0 : i32, i32
  }
  func.func @transform_2(%arg0: i32, %arg1: i32, %arg2: memref<2xi32, #tpu.memory_space<smem>>) -> (i32, i32) {
    %c0_i32 = arith.constant 0 : i32
    %c0_i32_0 = arith.constant 0 : i32
    %c0_i32_1 = arith.constant 0 : i32
    return %c0_i32, %c0_i32_0 : i32, i32
  }
  func.func @transform_3(%arg0: i32, %arg1: i32, %arg2: memref<2xi32, #tpu.memory_space<smem>>) -> (i32, i32, i32) {
    %c0_i32 = arith.constant 0 : i32
    %c0_i32_0 = arith.constant 0 : i32
    return %arg0, %arg1, %c0_i32 : i32, i32, i32
  }
}

</mosaic_0001>

<llo_original>
// kernel: text_encoder_forward.9
$region0: #{text_encoder_forward.9}
  #allocation0 [shape = 'u32[]', space=smem, size = 0x4, offset = 0x4, fixed_abs, tag = 'smem constant byte address 0x4 - core index']
  #allocation1 [shape = 'u32[144,128]{1,0:T(1,128)}', space=vmem, size = 0x12000, scoped, tag = 'internal scratch']
  #allocation2 [shape = 's32[1]{0}', space=sflag, size = 0x4, scoped, tag = 'scoped memory for text_encoder_forward.9']
  #allocation3 [shape = 'u8[512]{0}', space=smem, size = 0x200, scoped, tag = 'prefetched SMEM operand 0']
  %s0 = inlined_call_operand.vmem [shape: s32[2], index: 0, kind: input, shape index: {}]
  %s1 = inlined_call_operand.vmem [shape: bf16[2,16,32], index: 1, kind: input, shape index: {}]
  %s2 = inlined_call_operand.vmem [shape: bf16[32,16], index: 2, kind: input, shape index: {}]
  %s3 = inlined_call_operand.vmem [shape: f32[1,16], index: 3, kind: input, shape index: {}]
  %s4 = inlined_call_operand.vmem [shape: bf16[2,16,16], index: 4, kind: output, shape index: {}]
  %s5 = sld [smem:[#allocation0]]
  $region45: #{text_encoder_forward.9} parent=0
    _
  %s7 = ssub.s32 1, %s5
  %s8 = scalar_select 0, %s7, %s5
  %s9 = sshll.u32 %s0, 4
  %s10 = int_to_ptr.vmem [resolvable:$true] %s9
  %12 = dma.vmem_to_smem %s10, 16, [#allocation3], [#allocation2]
  %13 = dma.done [#allocation2], 16
  %14 = sfence
  loop: start=0, step=1, limit=4
  $region2: #{text_encoder_forward.9} parent=0 // loop_pre_header
    _
  $region3: #{text_encoder_forward.9} parent=0 // loop_header
    %s16 = sphi 0, %s20
    %p17 = scmp.ge.s32.totalorder %s16, 4
    %s23 = sphi 0, %s35
    %s24 = sphi 0, %s31
    %s25 = sphi 0, %s23
    %s26 = sphi 0, %s24
    %s27 = sphi 0, %s25
    %s28 = sphi 0, %s26
    %s40 = sphi 0, %s42
    %s43 = sphi 0, %s40
    %s44 = sphi 0, %s43
    %s60 = sphi 0, %s44
    %s64 = sphi 0, %s64
    %s66 = sphi 0, %s64
    %s67 = sphi 0, %s66
    %s81 = sphi 0, %s67
    %s85 = sphi 0, %s85
    %s87 = sphi 0, %s85
    %s88 = sphi 0, %s87
    %s102 = sphi 0, %s88
    %s110 = sphi 0, %s112
    %s113 = sphi 0, %s110
    %s114 = sphi 0, %s113
    %s130 = sphi 0, %s114
  $region4: #{text_encoder_forward.9} parent=0 // loop_header_branch
    %19 = sbr.rel (%p17) target = $region8
  $region5: #{text_encoder_forward.9} parent=0 // loop_body
    %s21 = ssub.s32 %s16, 1
    %s22 = ssub.s32 %s16, 2
    %s29 = sadd.s32 1, %s24
    %p30 = scmp.ge.s32.totalorder %s29, 1
    %s31 = scalar_select %p30, 0, %s29
    %s32 = sadd.s32 1, %s23
    %s33 = scalar_select %p30, %s32, %s23
    %p34 = scmp.ge.s32.totalorder %s33, 2
    %s35 = scalar_select %p34, 0, %s33
    %s36 = ssub.s32 %s23, %s35
    %s37 = ssub.s32 %s24, %s31
    %s38 = sor.u32 %s36, %s37
    %p39 = scmp.eq.s32.totalorder %s38, 0
    %s41 = sadd.s32 %s40, 1
    %s42 = scalar_select %p39, %s40, %s41
    %p45 = pneg %p39
    %p46 = scmp.eq.s32.totalorder %s16, 1
    %p47 = por %p45, %p46
    %p48 = scmp.ne.s32.totalorder %s40, %s43
    %p49 = scmp.eq.s32.totalorder %s16, 0
    %p50 = por %p48, %p49
    %p51 = scmp.ne.s32.totalorder %s40, %s43
    %p52 = scmp.eq.s32.totalorder %s21, 1
    %p53 = por %p51, %p52
    %p54 = scmp.ne.s32.totalorder %s43, %s44
    %p55 = scmp.eq.s32.totalorder %s21, 0
    %p56 = por %p54, %p55
    %p57 = scmp.ne.s32.totalorder %s43, %s44
    %p58 = scmp.eq.s32.totalorder %s22, 1
    %p59 = por %p57, %p58
    %p61 = scmp.ne.s32.totalorder %s44, %s60
    %p62 = scmp.eq.s32.totalorder %s22, 0
    %p63 = por %p61, %p62
    %s65 = sadd.s32 %s64, 1
    %p68 = scmp.eq.s32.totalorder %s16, 1
    %p69 = scmp.ne.s32.totalorder %s64, %s66
    %p70 = scmp.eq.s32.totalorder %s16, 0
    %p71 = por %p69, %p70
    %p72 = scmp.ne.s32.totalorder %s64, %s66
    %p73 = scmp.eq.s32.totalorder %s21, 1
    %p74 = por %p72, %p73
    %p75 = scmp.ne.s32.totalorder %s66, %s67
    %p76 = scmp.eq.s32.totalorder %s21, 0
    %p77 = por %p75, %p76
    %p78 = scmp.ne.s32.totalorder %s66, %s67
    %p79 = scmp.eq.s32.totalorder %s22, 1
    %p80 = por %p78, %p79
    %p82 = scmp.ne.s32.totalorder %s67, %s81
    %p83 = scmp.eq.s32.totalorder %s22, 0
    %p84 = por %p82, %p83
    %s86 = sadd.s32 %s85, 1
    %p89 = scmp.eq.s32.totalorder %s16, 1
    %p90 = scmp.ne.s32.totalorder %s85, %s87
    %p91 = scmp.eq.s32.totalorder %s16, 0
    %p92 = por %p90, %p91
    %p93 = scmp.ne.s32.totalorder %s85, %s87
    %p94 = scmp.eq.s32.totalorder %s21, 1
    %p95 = por %p93, %p94
    %p96 = scmp.ne.s32.totalorder %s87, %s88
    %p97 = scmp.eq.s32.totalorder %s21, 0
    %p98 = por %p96, %p97
    %p99 = scmp.ne.s32.totalorder %s87, %s88
    %p100 = scmp.eq.s32.totalorder %s22, 1
    %p101 = por %p99, %p100
    %p103 = scmp.ne.s32.totalorder %s88, %s102
    %p104 = scmp.eq.s32.totalorder %s22, 0
    %p105 = por %p103, %p104
    %s106 = ssub.s32 %s23, %s35
    %s107 = ssub.s32 %s24, %s31
    %s108 = sor.u32 %s106, %s107
    %p109 = scmp.eq.s32.totalorder %s108, 0
    %s111 = sadd.s32 %s110, 1
    %s112 = scalar_select %p109, %s110, %s111
    %p115 = pneg %p109
    %p116 = scmp.eq.s32.totalorder %s16, 1
    %p117 = por %p115, %p116
    %p118 = scmp.ne.s32.totalorder %s110, %s113
    %p119 = scmp.eq.s32.totalorder %s16, 0
    %p120 = por %p118, %p119
    %p121 = scmp.ne.s32.totalorder %s110, %s113
    %p122 = scmp.eq.s32.totalorder %s21, 1
    %p123 = por %p121, %p122
    %p124 = scmp.ne.s32.totalorder %s113, %s114
    %p125 = scmp.eq.s32.totalorder %s21, 0
    %p126 = por %p124, %p125
    %p127 = scmp.ne.s32.totalorder %s113, %s114
    %p128 = scmp.eq.s32.totalorder %s22, 1
    %p129 = por %p127, %p128
    %p131 = scmp.ne.s32.totalorder %s114, %s130
    %p132 = scmp.eq.s32.totalorder %s22, 0
    %p133 = por %p131, %p132
    %p134 = scmp.le.s32.totalorder 1, %s16
    %p135 = scmp.lt.s32.totalorder %s16, 3
    %p136 = pnand %p134, %p135
    %p137 = pneg %p136
    // Predicated region
    $region9: #{text_encoder_forward.9} parent=5 // pred_check
      _
    $region10: #{text_encoder_forward.9} parent=5 // pred_check_branch
      %139 = sbr.rel (%p136) target = $region12
    $region11: #{text_encoder_forward.9} parent=5 // pred_region
      %s140 = ssub.s32 %s16, 1
      // Predicated region
      $region13: #{text_encoder_forward.9} parent=11 // pred_check
        %p141 = pneg %p77
      $region14: #{text_encoder_forward.9} parent=11 // pred_check_branch
        %143 = sbr.rel (%p141) target = $region16
      $region15: #{text_encoder_forward.9} parent=11 // pred_region
        _
      $region16: #{text_encoder_forward.9} parent=11 // pred_fallthru
        _
      // Predicated region
      $region17: #{text_encoder_forward.9} parent=11 // pred_check
        %p144 = pneg %p98
      $region18: #{text_encoder_forward.9} parent=11 // pred_check_branch
        %146 = sbr.rel (%p144) target = $region20
      $region19: #{text_encoder_forward.9} parent=11 // pred_region
        _
      $region20: #{text_encoder_forward.9} parent=11 // pred_fallthru
        _
    $region12: #{text_encoder_forward.9} parent=5 // pred_fallthru
      _
    %p147 = scmp.lt.s32.totalorder %s16, 2
    // Predicated region
    $region21: #{text_encoder_forward.9} parent=5 // pred_check
      %p148 = pneg %p147
    $region22: #{text_encoder_forward.9} parent=5 // pred_check_branch
      %150 = sbr.rel (%p148) target = $region24
    $region23: #{text_encoder_forward.9} parent=5 // pred_region
      // Predicated region
      $region25: #{text_encoder_forward.9} parent=23 // pred_check
        %p151 = pneg %p50
      $region26: #{text_encoder_forward.9} parent=23 // pred_check_branch
        %153 = sbr.rel (%p151) target = $region28
      $region27: #{text_encoder_forward.9} parent=23 // pred_region
        %s154 = smul.u32 2, %s24
        %p155 = scmp.lt.s32.totalorder %s23, 1
        %s156 = scalar_select %p155, %s23, 1
        %p157 = scmp.lt.s32.totalorder %s154, 1
        %s158 = scalar_select %p157, %s154, 1
        %s159 = smul.addr %s156, 2
        %s160 = sadd.s32 %s158, %s159
        %s161 = smul.addr %s160, 4
        %s162 = scalar_lea.vmem %s1, %s161
        %s163 = smul.u32 2, %s24
      $region28: #{text_encoder_forward.9} parent=23 // pred_fallthru
        _
    $region24: #{text_encoder_forward.9} parent=5 // pred_fallthru
      _
    %p164 = scmp.le.s32.totalorder 1, %s16
    %p165 = scmp.lt.s32.totalorder %s16, 3
    %p166 = pnand %p164, %p165
    %p167 = pneg %p166
    // Predicated region
    $region29: #{text_encoder_forward.9} parent=5 // pred_check
      _
    $region30: #{text_encoder_forward.9} parent=5 // pred_check_branch
      %169 = sbr.rel (%p166) target = $region32
    $region31: #{text_encoder_forward.9} parent=5 // pred_region
      %s170 = ssub.s32 %s16, 1
      %s171 = smul.u32 2, %s26
      %p172 = scmp.lt.s32.totalorder %s25, 1
      %s173 = scalar_select %p172, %s25, 1
      %p174 = scmp.lt.s32.totalorder %s171, 1
      %s175 = scalar_select %p174, %s171, 1
      %s176 = smul.addr %s173, 2
      %s177 = sadd.s32 %s175, %s176
      %s178 = smul.addr %s177, 4
      %s179 = scalar_lea.vmem %s1, %s178
      %p180 = pneg %p56
      %p181 = pneg %p53
      %p182 = pneg %p77
      %p183 = pneg %p74
      %p184 = pneg %p98
      %p185 = pneg %p95
      %p186 = pneg %p126
      %p187 = pneg %p123
      %s188 = smul.u32 2, %s26
      %p189 = scmp.lt.s32.totalorder %s25, 1
      %s190 = scalar_select %p189, %s25, 1
      %p191 = scmp.lt.s32.totalorder %s188, 1
      %s192 = scalar_select %p191, %s188, 1
      %s193 = smul.addr %s190, 2
      %s194 = sadd.s32 %s192, %s193
      %s195 = smul.addr %s194, 4
      %s196 = scalar_lea.vmem %s4, %s195
      %s197 = smul.u32 2, %s26
      %p198 = scmp.lt.s32.totalorder %s25, 1
      %s199 = scalar_select %p198, %s25, 1
      %p200 = scmp.lt.s32.totalorder %s197, 1
      %s201 = scalar_select %p200, %s197, 1
      %s202 = smul.addr %s199, 2
      %s203 = sadd.s32 %s201, %s202
      %s204 = smul.addr %s203, 4
      %s205 = scalar_lea.vmem %s1, %s204
      %s206 = smul.u32 2, %s26
      %s207 = smul.u32 2, %s26
      %p208 = scmp.lt.s32.totalorder %s25, 1
      %s209 = scalar_select %p208, %s25, 1
      %p210 = scmp.lt.s32.totalorder %s207, 1
      %s211 = scalar_select %p210, %s207, 1
      %s212 = smul.addr %s209, 2
      %s213 = sadd.s32 %s211, %s212
      %s214 = smul.addr %s213, 4
      %s215 = scalar_lea.vmem %s4, %s214
      %s216 = smul.u32 2, %s26
      %v218 = vld [vmem:[%s205] sm:$0xf]
      %v219 = vld [vmem:[%s205 + $0x4] sm:$0xf]
      %v220 = vld [vmem:[%s2] sm:$0xf]
      %v221 = vld [vmem:[%s2 + $0x4] sm:$0xf]
      %v222 = vld [vmem:[%s2 + $0x8] sm:$0xf]
      %v223 = vld [vmem:[%s2 + $0xc] sm:$0xf]
      %v224 = vld [vmem:[%s3] sm:$0x1]
      %v226 = vlaneseq
      %v227 = vshrl.u32 %v226, 7
      %v228 = vsub.s32 0, %v227
      %v229 = vrot.slane %v224, %v228
      %v233 = vunpack.c.l.b16 %v218
      %v234 = vunpack.c.l.b16 %v219
      %v235 = vpack.c.b16 %v234, %v233
      %v240 = vunpack.c.l.b16 %v220
      %v241 = vunpack.c.l.b16 %v221
      %v242 = vunpack.c.l.b16 %v222
      %v243 = vunpack.c.l.b16 %v223
      %v244 = vpack.c.b16 %v241, %v240
      %v245 = vpack.c.b16 %v243, %v242
      %vm248 = vcmask 261120
      %v250 = vsel %vm248, %v235, 0
      %252 = vmatprep.subr.bf16.mxu0 0
      %253 = vmatpush1.bf16.msra.mxu0 0
      %254 = vmatprep.subr.bf16.mxu0 0
      %255 = vmatpush1.bf16.msra.mxu0 0
      %256 = vmatprep.subr.bf16.mxu0 0
      %257 = vmatpush1.bf16.msra.mxu0 0
      %258 = vmatprep.subr.bf16.mxu0 0
      %259 = vmatpush1.bf16.msra.mxu0 0
      %260 = vmatprep.subr.bf16.mxu0 0
      %261 = vmatpush1.bf16.msra.mxu0 0
      %262 = vmatprep.subr.bf16.mxu0 0
      %263 = vmatpush1.bf16.msra.mxu0 0
      %264 = vmatprep.subr.bf16.mxu0 0
      %265 = vmatpush1.bf16.msra.mxu0 %v245
      %266 = vmatprep.subr.bf16.mxu0 0
      %267 = vmatpush1.bf16.msra.mxu0 %v244
      %268 = vmatprep.subr.bf16.mxu0 0
      %269 = vmatpush2.bf16.msra.mxu0 0
      %270 = vmatprep.subr.bf16.mxu0 0
      %271 = vmatpush2.bf16.msra.mxu0 0
      %272 = vmatprep.subr.bf16.mxu0 0
      %273 = vmatpush2.bf16.msra.mxu0 0
      %274 = vmatprep.subr.bf16.mxu0 0
      %275 = vmatpush2.bf16.msra.mxu0 0
      %276 = vmatprep.subr.bf16.mxu0 0
      %277 = vmatpush2.bf16.msra.mxu0 0
      %278 = vmatprep.subr.bf16.mxu0 0
      %279 = vmatpush2.bf16.msra.mxu0 0
      %280 = vmatprep.subr.bf16.mxu0 0
      %281 = vmatpush2.bf16.msra.mxu0 0
      %282 = vmatprep.subr.bf16.mxu0 0
      %283 = vmatpush2.bf16.msra.mxu0 0
      %284 = vmatprep.mubr.bf16.mxu0 0
      %285 = vmatmul.mubr.bf16.gmra.mxu0 %v250
      %v286 = vpop.f32.mrf.mxu0
      %v287 = vadd.f32 %v229, %v286
      %v288 = vpop.f32.mrf.mxu0
      %v289 = vpop.f32.mrf.mxu0
      %v290 = vadd.f32 %v229, %v289
      %v291 = vpop.f32.mrf.mxu0
      %292 = vdwg.mxu0
      %s293 = smul.u32 %s26, 16
      %v294 = vlaneseq
      %v295 = vshrl.u32 %v294, 7
      %v296 = vadd.s32 %v295, 8
      %v297 = vstv %s293
      %v298 = vadd.s32 %v297, %v295
      %v299 = vadd.s32 %v297, %v296
      %s300 = sld [smem:[#allocation3 + %s25]]
      %v301 = vstv %s300
      %vm302 = vcmp.lt.s32.totalorder %v298, %v301
      %vm303 = vcmp.lt.s32.totalorder %v299, %v301
      %v304 = vsel %vm302, %v287, 0.0
      %v305 = vsel %vm303, %v290, 0.0
      %v306 = vpack.c.bf16 %v305, %v304
      %v308 = vunpack.c.l.b16 %v306
      %v309 = vunpack.c.h.b16 %v306
      %v310 = vpack.c.b16 %v308, %v308
      %v311 = vpack.c.b16 %v309, %v309
      %vm314 = vcmask 125952
      %315 = vst.msk [vmem:[%s215] sm:$0xf] %vm314, %v310
      %316 = vst.msk [vmem:[%s215 + $0x4] sm:$0xf] %vm314, %v311
      %s317 = smul.u32 2, %s26
      %p318 = scmp.lt.s32.totalorder %s25, 1
      %s319 = scalar_select %p318, %s25, 1
      %p320 = scmp.lt.s32.totalorder %s317, 1
      %s321 = scalar_select %p320, %s317, 1
      %s322 = smul.addr %s319, 2
      %s323 = sadd.s32 %s321, %s322
      %s324 = smul.addr %s323, 4
      %s325 = scalar_lea.vmem %s4, %s324
      // Predicated region
      $region33: #{text_encoder_forward.9} parent=31 // pred_check
        %p326 = pneg %p123
      $region34: #{text_encoder_forward.9} parent=31 // pred_check_branch
        %328 = sbr.rel (%p326) target = $region36
      $region35: #{text_encoder_forward.9} parent=31 // pred_region
        %s329 = smul.u32 2, %s26
      $region36: #{text_encoder_forward.9} parent=31 // pred_fallthru
        _
    $region32: #{text_encoder_forward.9} parent=5 // pred_fallthru
      _
    %p330 = scmp.le.s32.totalorder 2, %s16
    // Predicated region
    $region37: #{text_encoder_forward.9} parent=5 // pred_check
      %p331 = pneg %p330
    $region38: #{text_encoder_forward.9} parent=5 // pred_check_branch
      %333 = sbr.rel (%p331) target = $region40
    $region39: #{text_encoder_forward.9} parent=5 // pred_region
      %s334 = ssub.s32 %s16, 2
      // Predicated region
      $region41: #{text_encoder_forward.9} parent=39 // pred_check
        %p335 = pneg %p129
      $region42: #{text_encoder_forward.9} parent=39 // pred_check_branch
        %337 = sbr.rel (%p335) target = $region44
      $region43: #{text_encoder_forward.9} parent=39 // pred_region
        %s338 = smul.u32 2, %s28
        %p339 = scmp.lt.s32.totalorder %s27, 1
        %s340 = scalar_select %p339, %s27, 1
        %p341 = scmp.lt.s32.totalorder %s338, 1
        %s342 = scalar_select %p341, %s338, 1
        %s343 = smul.addr %s340, 2
        %s344 = sadd.s32 %s342, %s343
        %s345 = smul.addr %s344, 4
        %s346 = scalar_lea.vmem %s4, %s345
      $region44: #{text_encoder_forward.9} parent=39 // pred_fallthru
        _
    $region40: #{text_encoder_forward.9} parent=5 // pred_fallthru
      _
  $region6: #{text_encoder_forward.9} parent=0 // loop_footer
    %s20 = sadd.s32 1, %s16
  $region7: #{text_encoder_forward.9} parent=0 // loop_footer_branch
    %15 = sbr.rel target = $region3
  $region8: #{text_encoder_forward.9} parent=0 // loop_exit
    _

// kernel: text_encoder_forward.6
$region0: #{text_encoder_forward.6}
  #allocation0 [shape = 'u32[]', space=smem, size = 0x4, offset = 0x4, fixed_abs, tag = 'smem constant byte address 0x4 - core index']
  #allocation1 [shape = 'u32[144,128]{1,0:T(1,128)}', space=vmem, size = 0x12000, scoped, tag = 'internal scratch']
  #allocation2 [shape = 's32[1]{0}', space=sflag, size = 0x4, scoped, tag = 'scoped memory for text_encoder_forward.6']
  #allocation3 [shape = 'u8[512]{0}', space=smem, size = 0x200, scoped, tag = 'prefetched SMEM operand 0']
  %s0 = inlined_call_operand.vmem [shape: s32[2], index: 0, kind: input, shape index: {}]
  %s1 = inlined_call_operand.vmem [shape: bf16[2,16,32], index: 1, kind: input, shape index: {}]
  %s2 = inlined_call_operand.vmem [shape: bf16[3,32,64], index: 2, kind: input, shape index: {}]
  %s3 = inlined_call_operand.vmem [shape: f32[1,64], index: 3, kind: input, shape index: {}]
  %s4 = inlined_call_operand.vmem [shape: bf16[3,64,32], index: 4, kind: input, shape index: {}]
  %s5 = inlined_call_operand.vmem [shape: f32[1,32], index: 5, kind: input, shape index: {}]
  %s6 = inlined_call_operand.vmem [shape: f32[1,32], index: 6, kind: input, shape index: {}]
  %s7 = inlined_call_operand.vmem [shape: f32[1,32], index: 7, kind: input, shape index: {}]
  %s8 = inlined_call_operand.vmem [shape: bf16[2,16,32], index: 8, kind: output, shape index: {}]
  %s9 = sld [smem:[#allocation0]]
  $region61: #{text_encoder_forward.6} parent=0
    _
  %s11 = ssub.s32 1, %s9
  %s12 = scalar_select 0, %s11, %s9
  %s13 = sshll.u32 %s0, 4
  %s14 = int_to_ptr.vmem [resolvable:$true] %s13
  %16 = dma.vmem_to_smem %s14, 16, [#allocation3], [#allocation2]
  %17 = dma.done [#allocation2], 16
  %18 = sfence
  loop: start=0, step=1, limit=4
  $region2: #{text_encoder_forward.6} parent=0 // loop_pre_header
    _
  $region3: #{text_encoder_forward.6} parent=0 // loop_header
    %s20 = sphi 0, %s24
    %p21 = scmp.ge.s32.totalorder %s20, 4
    %s30 = sphi 0, %s32
    %s33 = sphi 0, %s30
    %s34 = sphi 0, %s33
    %s50 = sphi 0, %s34
    %s54 = sphi 0, %s54
    %s56 = sphi 0, %s54
    %s57 = sphi 0, %s56
    %s71 = sphi 0, %s57
    %s75 = sphi 0, %s75
    %s77 = sphi 0, %s75
    %s78 = sphi 0, %s77
    %s92 = sphi 0, %s78
    %s96 = sphi 0, %s96
    %s98 = sphi 0, %s96
    %s99 = sphi 0, %s98
    %s113 = sphi 0, %s99
    %s117 = sphi 0, %s117
    %s119 = sphi 0, %s117
    %s120 = sphi 0, %s119
    %s134 = sphi 0, %s120
    %s138 = sphi 0, %s138
    %s140 = sphi 0, %s138
    %s141 = sphi 0, %s140
    %s155 = sphi 0, %s141
    %s159 = sphi 0, %s159
    %s161 = sphi 0, %s159
    %s162 = sphi 0, %s161
    %s176 = sphi 0, %s162
    %s182 = sphi 0, %s184
    %s185 = sphi 0, %s182
    %s186 = sphi 0, %s185
    %s202 = sphi 0, %s186
  $region4: #{text_encoder_forward.6} parent=0 // loop_header_branch
    %23 = sbr.rel (%p21) target = $region8
  $region5: #{text_encoder_forward.6} parent=0 // loop_body
    %s25 = ssub.s32 %s20, 1
    %s26 = ssub.s32 %s20, 2
    %s27 = sadd.s32 %s20, 1
    %s28 = ssub.s32 %s20, %s27
    %p29 = scmp.eq.s32.totalorder %s28, 0
    %s31 = sadd.s32 %s30, 1
    %s32 = scalar_select %p29, %s30, %s31
    %p35 = pneg %p29
    %p36 = scmp.eq.s32.totalorder %s20, 1
    %p37 = por %p35, %p36
    %p38 = scmp.ne.s32.totalorder %s30, %s33
    %p39 = scmp.eq.s32.totalorder %s20, 0
    %p40 = por %p38, %p39
    %p41 = scmp.ne.s32.totalorder %s30, %s33
    %p42 = scmp.eq.s32.totalorder %s25, 1
    %p43 = por %p41, %p42
    %p44 = scmp.ne.s32.totalorder %s33, %s34
    %p45 = scmp.eq.s32.totalorder %s25, 0
    %p46 = por %p44, %p45
    %p47 = scmp.ne.s32.totalorder %s33, %s34
    %p48 = scmp.eq.s32.totalorder %s26, 1
    %p49 = por %p47, %p48
    %p51 = scmp.ne.s32.totalorder %s34, %s50
    %p52 = scmp.eq.s32.totalorder %s26, 0
    %p53 = por %p51, %p52
    %s55 = sadd.s32 %s54, 1
    %p58 = scmp.eq.s32.totalorder %s20, 1
    %p59 = scmp.ne.s32.totalorder %s54, %s56
    %p60 = scmp.eq.s32.totalorder %s20, 0
    %p61 = por %p59, %p60
    %p62 = scmp.ne.s32.totalorder %s54, %s56
    %p63 = scmp.eq.s32.totalorder %s25, 1
    %p64 = por %p62, %p63
    %p65 = scmp.ne.s32.totalorder %s56, %s57
    %p66 = scmp.eq.s32.totalorder %s25, 0
    %p67 = por %p65, %p66
    %p68 = scmp.ne.s32.totalorder %s56, %s57
    %p69 = scmp.eq.s32.totalorder %s26, 1
    %p70 = por %p68, %p69
    %p72 = scmp.ne.s32.totalorder %s57, %s71
    %p73 = scmp.eq.s32.totalorder %s26, 0
    %p74 = por %p72, %p73
    %s76 = sadd.s32 %s75, 1
    %p79 = scmp.eq.s32.totalorder %s20, 1
    %p80 = scmp.ne.s32.totalorder %s75, %s77
    %p81 = scmp.eq.s32.totalorder %s20, 0
    %p82 = por %p80, %p81
    %p83 = scmp.ne.s32.totalorder %s75, %s77
    %p84 = scmp.eq.s32.totalorder %s25, 1
    %p85 = por %p83, %p84
    %p86 = scmp.ne.s32.totalorder %s77, %s78
    %p87 = scmp.eq.s32.totalorder %s25, 0
    %p88 = por %p86, %p87
    %p89 = scmp.ne.s32.totalorder %s77, %s78
    %p90 = scmp.eq.s32.totalorder %s26, 1
    %p91 = por %p89, %p90
    %p93 = scmp.ne.s32.totalorder %s78, %s92
    %p94 = scmp.eq.s32.totalorder %s26, 0
    %p95 = por %p93, %p94
    %s97 = sadd.s32 %s96, 1
    %p100 = scmp.eq.s32.totalorder %s20, 1
    %p101 = scmp.ne.s32.totalorder %s96, %s98
    %p102 = scmp.eq.s32.totalorder %s20, 0
    %p103 = por %p101, %p102
    %p104 = scmp.ne.s32.totalorder %s96, %s98
    %p105 = scmp.eq.s32.totalorder %s25, 1
    %p106 = por %p104, %p105
    %p107 = scmp.ne.s32.totalorder %s98, %s99
    %p108 = scmp.eq.s32.totalorder %s25, 0
    %p109 = por %p107, %p108
    %p110 = scmp.ne.s32.totalorder %s98, %s99
    %p111 = scmp.eq.s32.totalorder %s26, 1
    %p112 = por %p110, %p111
    %p114 = scmp.ne.s32.totalorder %s99, %s113
    %p115 = scmp.eq.s32.totalorder %s26, 0
    %p116 = por %p114, %p115
    %s118 = sadd.s32 %s117, 1
    %p121 = scmp.eq.s32.totalorder %s20, 1
    %p122 = scmp.ne.s32.totalorder %s117, %s119
    %p123 = scmp.eq.s32.totalorder %s20, 0
    %p124 = por %p122, %p123
    %p125 = scmp.ne.s32.totalorder %s117, %s119
    %p126 = scmp.eq.s32.totalorder %s25, 1
    %p127 = por %p125, %p126
    %p128 = scmp.ne.s32.totalorder %s119, %s120
    %p129 = scmp.eq.s32.totalorder %s25, 0
    %p130 = por %p128, %p129
    %p131 = scmp.ne.s32.totalorder %s119, %s120
    %p132 = scmp.eq.s32.totalorder %s26, 1
    %p133 = por %p131, %p132
    %p135 = scmp.ne.s32.totalorder %s120, %s134
    %p136 = scmp.eq.s32.totalorder %s26, 0
    %p137 = por %p135, %p136
    %s139 = sadd.s32 %s138, 1
    %p142 = scmp.eq.s32.totalorder %s20, 1
    %p143 = scmp.ne.s32.totalorder %s138, %s140
    %p144 = scmp.eq.s32.totalorder %s20, 0
    %p145 = por %p143, %p144
    %p146 = scmp.ne.s32.totalorder %s138, %s140
    %p147 = scmp.eq.s32.totalorder %s25, 1
    %p148 = por %p146, %p147
    %p149 = scmp.ne.s32.totalorder %s140, %s141
    %p150 = scmp.eq.s32.totalorder %s25, 0
    %p151 = por %p149, %p150
    %p152 = scmp.ne.s32.totalorder %s140, %s141
    %p153 = scmp.eq.s32.totalorder %s26, 1
    %p154 = por %p152, %p153
    %p156 = scmp.ne.s32.totalorder %s141, %s155
    %p157 = scmp.eq.s32.totalorder %s26, 0
    %p158 = por %p156, %p157
    %s160 = sadd.s32 %s159, 1
    %p163 = scmp.eq.s32.totalorder %s20, 1
    %p164 = scmp.ne.s32.totalorder %s159, %s161
    %p165 = scmp.eq.s32.totalorder %s20, 0
    %p166 = por %p164, %p165
    %p167 = scmp.ne.s32.totalorder %s159, %s161
    %p168 = scmp.eq.s32.totalorder %s25, 1
    %p169 = por %p167, %p168
    %p170 = scmp.ne.s32.totalorder %s161, %s162
    %p171 = scmp.eq.s32.totalorder %s25, 0
    %p172 = por %p170, %p171
    %p173 = scmp.ne.s32.totalorder %s161, %s162
    %p174 = scmp.eq.s32.totalorder %s26, 1
    %p175 = por %p173, %p174
    %p177 = scmp.ne.s32.totalorder %s162, %s176
    %p178 = scmp.eq.s32.totalorder %s26, 0
    %p179 = por %p177, %p178
    %s180 = ssub.s32 %s20, %s27
    %p181 = scmp.eq.s32.totalorder %s180, 0
    %s183 = sadd.s32 %s182, 1
    %s184 = scalar_select %p181, %s182, %s183
    %p187 = pneg %p181
    %p188 = scmp.eq.s32.totalorder %s20, 1
    %p189 = por %p187, %p188
    %p190 = scmp.ne.s32.totalorder %s182, %s185
    %p191 = scmp.eq.s32.totalorder %s20, 0
    %p192 = por %p190, %p191
    %p193 = scmp.ne.s32.totalorder %s182, %s185
    %p194 = scmp.eq.s32.totalorder %s25, 1
    %p195 = por %p193, %p194
    %p196 = scmp.ne.s32.totalorder %s185, %s186
    %p197 = scmp.eq.s32.totalorder %s25, 0
    %p198 = por %p196, %p197
    %p199 = scmp.ne.s32.totalorder %s185, %s186
    %p200 = scmp.eq.s32.totalorder %s26, 1
    %p201 = por %p199, %p200
    %p203 = scmp.ne.s32.totalorder %s186, %s202
    %p204 = scmp.eq.s32.totalorder %s26, 0
    %p205 = por %p203, %p204
    %p206 = scmp.le.s32.totalorder 1, %s20
    %p207 = scmp.lt.s32.totalorder %s20, 3
    %p208 = pnand %p206, %p207
    %p209 = pneg %p208
    // Predicated region
    $region9: #{text_encoder_forward.6} parent=5 // pred_check
      _
    $region10: #{text_encoder_forward.6} parent=5 // pred_check_branch
      %211 = sbr.rel (%p208) target = $region12
    $region11: #{text_encoder_forward.6} parent=5 // pred_region
      %s212 = ssub.s32 %s20, 1
      // Predicated region
      $region13: #{text_encoder_forward.6} parent=11 // pred_check
        %p213 = pneg %p67
      $region14: #{text_encoder_forward.6} parent=11 // pred_check_branch
        %215 = sbr.rel (%p213) target = $region16
      $region15: #{text_encoder_forward.6} parent=11 // pred_region
        _
      $region16: #{text_encoder_forward.6} parent=11 // pred_fallthru
        _
      // Predicated region
      $region17: #{text_encoder_forward.6} parent=11 // pred_check
        %p216 = pneg %p88
      $region18: #{text_encoder_forward.6} parent=11 // pred_check_branch
        %218 = sbr.rel (%p216) target = $region20
      $region19: #{text_encoder_forward.6} parent=11 // pred_region
        _
      $region20: #{text_encoder_forward.6} parent=11 // pred_fallthru
        _
      // Predicated region
      $region21: #{text_encoder_forward.6} parent=11 // pred_check
        %p219 = pneg %p109
      $region22: #{text_encoder_forward.6} parent=11 // pred_check_branch
        %221 = sbr.rel (%p219) target = $region24
      $region23: #{text_encoder_forward.6} parent=11 // pred_region
        _
      $region24: #{text_encoder_forward.6} parent=11 // pred_fallthru
        _
      // Predicated region
      $region25: #{text_encoder_forward.6} parent=11 // pred_check
        %p222 = pneg %p130
      $region26: #{text_encoder_forward.6} parent=11 // pred_check_branch
        %224 = sbr.rel (%p222) target = $region28
      $region27: #{text_encoder_forward.6} parent=11 // pred_region
        _
      $region28: #{text_encoder_forward.6} parent=11 // pred_fallthru
        _
      // Predicated region
      $region29: #{text_encoder_forward.6} parent=11 // pred_check
        %p225 = pneg %p151
      $region30: #{text_encoder_forward.6} parent=11 // pred_check_branch
        %227 = sbr.rel (%p225) target = $region32
      $region31: #{text_encoder_forward.6} parent=11 // pred_region
        _
      $region32: #{text_encoder_forward.6} parent=11 // pred_fallthru
        _
      // Predicated region
      $region33: #{text_encoder_forward.6} parent=11 // pred_check
        %p228 = pneg %p172
      $region34: #{text_encoder_forward.6} parent=11 // pred_check_branch
        %230 = sbr.rel (%p228) target = $region36
      $region35: #{text_encoder_forward.6} parent=11 // pred_region
        _
      $region36: #{text_encoder_forward.6} parent=11 // pred_fallthru
        _
    $region12: #{text_encoder_forward.6} parent=5 // pred_fallthru
      _
    %p231 = scmp.lt.s32.totalorder %s20, 2
    // Predicated region
    $region37: #{text_encoder_forward.6} parent=5 // pred_check
      %p232 = pneg %p231
    $region38: #{text_encoder_forward.6} parent=5 // pred_check_branch
      %234 = sbr.rel (%p232) target = $region40
    $region39: #{text_encoder_forward.6} parent=5 // pred_region
      // Predicated region
      $region41: #{text_encoder_forward.6} parent=39 // pred_check
        %p235 = pneg %p40
      $region42: #{text_encoder_forward.6} parent=39 // pred_check_branch
        %237 = sbr.rel (%p235) target = $region44
      $region43: #{text_encoder_forward.6} parent=39 // pred_region
        %p238 = scmp.lt.s32.totalorder %s20, 1
        %s239 = scalar_select %p238, %s20, 1
        %s240 = smul.addr %s239, 2
        %s241 = smul.addr %s240, 4
        %s242 = scalar_lea.vmem %s1, %s241
      $region44: #{text_encoder_forward.6} parent=39 // pred_fallthru
        _
    $region40: #{text_encoder_forward.6} parent=5 // pred_fallthru
      _
    %p243 = scmp.le.s32.totalorder 1, %s20
    %p244 = scmp.lt.s32.totalorder %s20, 3
    %p245 = pnand %p243, %p244
    %p246 = pneg %p245
    // Predicated region
    $region45: #{text_encoder_forward.6} parent=5 // pred_check
      _
    $region46: #{text_encoder_forward.6} parent=5 // pred_check_branch
      %248 = sbr.rel (%p245) target = $region48
    $region47: #{text_encoder_forward.6} parent=5 // pred_region
      %s249 = ssub.s32 %s20, 1
      %p250 = scmp.lt.s32.totalorder %s25, 1
      %s251 = scalar_select %p250, %s25, 1
      %s252 = smul.addr %s251, 2
      %s253 = smul.addr %s252, 4
      %s254 = scalar_lea.vmem %s1, %s253
      %p255 = pneg %p46
      %p256 = pneg %p43
      %p257 = pneg %p67
      %p258 = pneg %p64
      %p259 = pneg %p88
      %p260 = pneg %p85
      %p261 = pneg %p109
      %p262 = pneg %p106
      %p263 = pneg %p130
      %p264 = pneg %p127
      %p265 = pneg %p151
      %p266 = pneg %p148
      %p267 = pneg %p172
      %p268 = pneg %p169
      %p269 = pneg %p198
      %p270 = pneg %p195
      %p271 = scmp.lt.s32.totalorder %s25, 1
      %s272 = scalar_select %p271, %s25, 1
      %s273 = smul.addr %s272, 2
      %s274 = smul.addr %s273, 4
      %s275 = scalar_lea.vmem %s8, %s274
      %p276 = scmp.lt.s32.totalorder %s25, 1
      %s277 = scalar_select %p276, %s25, 1
      %s278 = smul.addr %s277, 2
      %s279 = smul.addr %s278, 4
      %s280 = scalar_lea.vmem %s1, %s279
      %p281 = scmp.lt.s32.totalorder %s25, 1
      %s282 = scalar_select %p281, %s25, 1
      %s283 = smul.addr %s282, 2
      %s284 = smul.addr %s283, 4
      %s285 = scalar_lea.vmem %s8, %s284
      %s287 = sld [smem:[#allocation3 + %s25]]
      %v288 = vlaneseq
      %v289 = vshrl.u32 %v288, 7
      %v290 = vadd.s32 %v289, 8
      %v291 = vstv %s287
      %vm292 = vcmp.lt.s32.totalorder %v289, %v291
      %vm293 = vcmp.lt.s32.totalorder %v290, %v291
      %v294 = vld [vmem:[%s280] sm:$0xf]
      %v295 = vld [vmem:[%s280 + $0x4] sm:$0xf]
      %v296 = vsel %vm292, 1, 0
      %v297 = vsel %vm293, 1, 0
      %vm298 = vcmp.eq.s32.totalorder %v296, 1
      %vm299 = vcmp.eq.s32.totalorder %v297, 1
      %vm300 = vmpackc.low %vm298, %vm298
      %vm301 = vmpackc.low %vm299, %vm299
      %v302 = vsel %vm300, %v294, 0
      %v303 = vsel %vm301, %v295, 0
      %v304 = vld [vmem:[%s3] sm:$0x1]
      %v305 = vld [vmem:[%s2] sm:$0xf]
      %v306 = vld [vmem:[%s2 + $0x4] sm:$0xf]
      %v307 = vld [vmem:[%s2 + $0x8] sm:$0xf]
      %v308 = vld [vmem:[%s2 + $0xc] sm:$0xf]
      %v311 = vunpack.c.l.b16 %v302
      %v312 = vunpack.c.l.b16 %v303
      %v313 = vpack.c.b16 %v312, %v311
      %v318 = vunpack.c.l.b16 %v305
      %v319 = vunpack.c.l.b16 %v306
      %v320 = vunpack.c.l.b16 %v307
      %v321 = vunpack.c.l.b16 %v308
      %v322 = vpack.c.b16 %v319, %v318
      %v323 = vpack.c.b16 %v321, %v320
      %vm326 = vcmask 261120
      %v328 = vsel %vm326, %v313, 0
      %330 = vmatprep.subr.bf16.mxu0 0
      %331 = vmatpush1.bf16.msra.mxu0 0
      %332 = vmatprep.subr.bf16.mxu0 0
      %333 = vmatpush1.bf16.msra.mxu0 0
      %334 = vmatprep.subr.bf16.mxu0 0
      %335 = vmatpush1.bf16.msra.mxu0 0
      %336 = vmatprep.subr.bf16.mxu0 0
      %337 = vmatpush1.bf16.msra.mxu0 0
      %338 = vmatprep.subr.bf16.mxu0 0
      %339 = vmatpush1.bf16.msra.mxu0 0
      %340 = vmatprep.subr.bf16.mxu0 0
      %341 = vmatpush1.bf16.msra.mxu0 0
      %342 = vmatprep.subr.bf16.mxu0 0
      %343 = vmatpush1.bf16.msra.mxu0 %v323
      %344 = vmatprep.subr.bf16.mxu0 0
      %345 = vmatpush1.bf16.msra.mxu0 %v322
      %346 = vmatprep.subr.bf16.mxu0 0
      %347 = vmatpush2.bf16.msra.mxu0 0
      %348 = vmatprep.subr.bf16.mxu0 0
      %349 = vmatpush2.bf16.msra.mxu0 0
      %350 = vmatprep.subr.bf16.mxu0 0
      %351 = vmatpush2.bf16.msra.mxu0 0
      %352 = vmatprep.subr.bf16.mxu0 0
      %353 = vmatpush2.bf16.msra.mxu0 0
      %354 = vmatprep.subr.bf16.mxu0 0
      %355 = vmatpush2.bf16.msra.mxu0 0
      %356 = vmatprep.subr.bf16.mxu0 0
      %357 = vmatpush2.bf16.msra.mxu0 0
      %358 = vmatprep.subr.bf16.mxu0 0
      %359 = vmatpush2.bf16.msra.mxu0 0
      %360 = vmatprep.subr.bf16.mxu0 0
      %361 = vmatpush2.bf16.msra.mxu0 0
      %362 = vmatprep.mubr.bf16.mxu0 0
      %363 = vmatmul.mubr.bf16.gmra.mxu0 %v328
      %v364 = vpop.f32.mrf.mxu0
      %v365 = vadd.f32 0.0, %v364
      %v366 = vpop.f32.mrf.mxu0
      %v367 = vpop.f32.mrf.mxu0
      %v368 = vadd.f32 0.0, %v367
      %v369 = vpop.f32.mrf.mxu0
      %370 = vdwg.mxu0
      %vm373 = vcmask 1040384
      %v374 = vrot.slane %v365, 7
      %v375 = vrot.slane %v368, 7
      %v376 = vsel %vm373, %v374, %v375
      %v379 = vsel %vm373, 0.0, %v374
      %v380 = vadd.f32 %v379, 0.0
      %v381 = vadd.f32 %v376, 0.0
      %s382 = scalar_lea.vmem %s2, 16
      %v383 = vld [vmem:[%s382] sm:$0xf]
      %v384 = vld [vmem:[%s382 + $0x4] sm:$0xf]
      %v385 = vld [vmem:[%s382 + $0x8] sm:$0xf]
      %v386 = vld [vmem:[%s382 + $0xc] sm:$0xf]
      %v391 = vunpack.c.l.b16 %v383
      %v392 = vunpack.c.l.b16 %v384
      %v393 = vunpack.c.l.b16 %v385
      %v394 = vunpack.c.l.b16 %v386
      %v395 = vpack.c.b16 %v392, %v391
      %v396 = vpack.c.b16 %v394, %v393
      %399 = vmatprep.subr.bf16.mxu0 0
      %400 = vmatpush1.bf16.msra.mxu0 0
      %401 = vmatprep.subr.bf16.mxu0 0
      %402 = vmatpush1.bf16.msra.mxu0 0
      %403 = vmatprep.subr.bf16.mxu0 0
      %404 = vmatpush1.bf16.msra.mxu0 0
      %405 = vmatprep.subr.bf16.mxu0 0
      %406 = vmatpush1.bf16.msra.mxu0 0
      %407 = vmatprep.subr.bf16.mxu0 0
      %408 = vmatpush1.bf16.msra.mxu0 0
      %409 = vmatprep.subr.bf16.mxu0 0
      %410 = vmatpush1.bf16.msra.mxu0 0
      %411 = vmatprep.subr.bf16.mxu0 0
      %412 = vmatpush1.bf16.msra.mxu0 %v396
      %413 = vmatprep.subr.bf16.mxu0 0
      %414 = vmatpush1.bf16.msra.mxu0 %v395
      %415 = vmatprep.subr.bf16.mxu0 0
      %416 = vmatpush2.bf16.msra.mxu0 0
      %417 = vmatprep.subr.bf16.mxu0 0
      %418 = vmatpush2.bf16.msra.mxu0 0
      %419 = vmatprep.subr.bf16.mxu0 0
      %420 = vmatpush2.bf16.msra.mxu0 0
      %421 = vmatprep.subr.bf16.mxu0 0
      %422 = vmatpush2.bf16.msra.mxu0 0
      %423 = vmatprep.subr.bf16.mxu0 0
      %424 = vmatpush2.bf16.msra.mxu0 0
      %425 = vmatprep.subr.bf16.mxu0 0
      %426 = vmatpush2.bf16.msra.mxu0 0
      %427 = vmatprep.subr.bf16.mxu0 0
      %428 = vmatpush2.bf16.msra.mxu0 0
      %429 = vmatprep.subr.bf16.mxu0 0
      %430 = vmatpush2.bf16.msra.mxu0 0
      %431 = vmatprep.mubr.bf16.mxu0 0
      %432 = vmatmul.mubr.bf16.gmra.mxu0 %v328
      %v433 = vpop.f32.mrf.mxu0
      %v434 = vadd.f32 0.0, %v433
      %v435 = vpop.f32.mrf.mxu0
      %v436 = vpop.f32.mrf.mxu0
      %v437 = vadd.f32 0.0, %v436
      %v438 = vpop.f32.mrf.mxu0
      %439 = vdwg.mxu0
      %v440 = vadd.f32 %v380, %v434
      %v441 = vadd.f32 %v381, %v437
      %s442 = scalar_lea.vmem %s2, 32
      %v443 = vld [vmem:[%s442] sm:$0xf]
      %v444 = vld [vmem:[%s442 + $0x4] sm:$0xf]
      %v445 = vld [vmem:[%s442 + $0x8] sm:$0xf]
      %v446 = vld [vmem:[%s442 + $0xc] sm:$0xf]
      %v451 = vunpack.c.l.b16 %v443
      %v452 = vunpack.c.l.b16 %v444
      %v453 = vunpack.c.l.b16 %v445
      %v454 = vunpack.c.l.b16 %v446
      %v455 = vpack.c.b16 %v452, %v451
      %v456 = vpack.c.b16 %v454, %v453
      %459 = vmatprep.subr.bf16.mxu0 0
      %460 = vmatpush1.bf16.msra.mxu0 0
      %461 = vmatprep.subr.bf16.mxu0 0
      %462 = vmatpush1.bf16.msra.mxu0 0
      %463 = vmatprep.subr.bf16.mxu0 0
      %464 = vmatpush1.bf16.msra.mxu0 0
      %465 = vmatprep.subr.bf16.mxu0 0
      %466 = vmatpush1.bf16.msra.mxu0 0
      %467 = vmatprep.subr.bf16.mxu0 0
      %468 = vmatpush1.bf16.msra.mxu0 0
      %469 = vmatprep.subr.bf16.mxu0 0
      %470 = vmatpush1.bf16.msra.mxu0 0
      %471 = vmatprep.subr.bf16.mxu0 0
      %472 = vmatpush1.bf16.msra.mxu0 %v456
      %473 = vmatprep.subr.bf16.mxu0 0
      %474 = vmatpush1.bf16.msra.mxu0 %v455
      %475 = vmatprep.subr.bf16.mxu0 0
      %476 = vmatpush2.bf16.msra.mxu0 0
      %477 = vmatprep.subr.bf16.mxu0 0
      %478 = vmatpush2.bf16.msra.mxu0 0
      %479 = vmatprep.subr.bf16.mxu0 0
      %480 = vmatpush2.bf16.msra.mxu0 0
      %481 = vmatprep.subr.bf16.mxu0 0
      %482 = vmatpush2.bf16.msra.mxu0 0
      %483 = vmatprep.subr.bf16.mxu0 0
      %484 = vmatpush2.bf16.msra.mxu0 0
      %485 = vmatprep.subr.bf16.mxu0 0
      %486 = vmatpush2.bf16.msra.mxu0 0
      %487 = vmatprep.subr.bf16.mxu0 0
      %488 = vmatpush2.bf16.msra.mxu0 0
      %489 = vmatprep.subr.bf16.mxu0 0
      %490 = vmatpush2.bf16.msra.mxu0 0
      %491 = vmatprep.mubr.bf16.mxu0 0
      %492 = vmatmul.mubr.bf16.gmra.mxu0 %v328
      %v493 = vpop.f32.mrf.mxu0
      %v494 = vadd.f32 0.0, %v493
      %v495 = vpop.f32.mrf.mxu0
      %v496 = vpop.f32.mrf.mxu0
      %v497 = vadd.f32 0.0, %v496
      %v498 = vpop.f32.mrf.mxu0
      %499 = vdwg.mxu0
      %vm502 = vcmask 1046528
      %v503 = vrot.slane %v494, 1
      %v504 = vrot.slane %v497, 1
      %v505 = vsel %vm502, %v503, %v504
      %v508 = vsel %vm502, %v504, 0.0
      %v509 = vadd.f32 %v440, %v505
      %v510 = vadd.f32 %v441, %v508
      %v512 = vlaneseq
      %v513 = vshrl.u32 %v512, 7
      %v514 = vsub.s32 0, %v513
      %v515 = vrot.slane %v304, %v514
      %v517 = vadd.f32 %v509, %v515
      %v518 = vadd.f32 %v510, %v515
      %v519 = vmax.f32 %v517, 0.0
      %v520 = vmax.f32 %v518, 0.0
      %v521 = vsel %vm298, %v519, 0.0
      %v522 = vsel %vm299, %v520, 0.0
      %v523 = vpack.c.bf16 %v522, %v521
      %v524 = vld [vmem:[%s5] sm:$0x1]
      %v525 = vld [vmem:[%s4] sm:$0xf]
      %v526 = vld [vmem:[%s4 + $0x4] sm:$0xf]
      %v527 = vld [vmem:[%s4 + $0x8] sm:$0xf]
      %v528 = vld [vmem:[%s4 + $0xc] sm:$0xf]
      %v529 = vld [vmem:[%s4 + $0x10] sm:$0xf]
      %v530 = vld [vmem:[%s4 + $0x14] sm:$0xf]
      %v531 = vld [vmem:[%s4 + $0x18] sm:$0xf]
      %v532 = vld [vmem:[%s4 + $0x1c] sm:$0xf]
      %v541 = vunpack.c.l.b16 %v525
      %v542 = vunpack.c.l.b16 %v526
      %v543 = vunpack.c.l.b16 %v527
      %v544 = vunpack.c.l.b16 %v528
      %v545 = vunpack.c.l.b16 %v529
      %v546 = vunpack.c.l.b16 %v530
      %v547 = vunpack.c.l.b16 %v531
      %v548 = vunpack.c.l.b16 %v532
      %v549 = vpack.c.b16 %v542, %v541
      %v550 = vpack.c.b16 %v544, %v543
      %v551 = vpack.c.b16 %v546, %v545
      %v552 = vpack.c.b16 %v548, %v547
      %vm557 = vcmask 523264
      %v559 = vsel %vm557, %v523, 0
      %561 = vmatprep.subr.bf16.mxu0 0
      %562 = vmatpush1.bf16.msra.mxu0 0
      %563 = vmatprep.subr.bf16.mxu0 0
      %564 = vmatpush1.bf16.msra.mxu0 0
      %565 = vmatprep.subr.bf16.mxu0 0
      %566 = vmatpush1.bf16.msra.mxu0 0
      %567 = vmatprep.subr.bf16.mxu0 0
      %568 = vmatpush1.bf16.msra.mxu0 0
      %569 = vmatprep.subr.bf16.mxu0 0
      %570 = vmatpush1.bf16.msra.mxu0 %v552
      %571 = vmatprep.subr.bf16.mxu0 0
      %572 = vmatpush1.bf16.msra.mxu0 %v551
      %573 = vmatprep.subr.bf16.mxu0 0
      %574 = vmatpush1.bf16.msra.mxu0 %v550
      %575 = vmatprep.subr.bf16.mxu0 0
      %576 = vmatpush1.bf16.msra.mxu0 %v549
      %577 = vmatprep.subr.bf16.mxu0 0
      %578 = vmatpush2.bf16.msra.mxu0 0
      %579 = vmatprep.subr.bf16.mxu0 0
      %580 = vmatpush2.bf16.msra.mxu0 0
      %581 = vmatprep.subr.bf16.mxu0 0
      %582 = vmatpush2.bf16.msra.mxu0 0
      %583 = vmatprep.subr.bf16.mxu0 0
      %584 = vmatpush2.bf16.msra.mxu0 0
      %585 = vmatprep.subr.bf16.mxu0 0
      %586 = vmatpush2.bf16.msra.mxu0 0
      %587 = vmatprep.subr.bf16.mxu0 0
      %588 = vmatpush2.bf16.msra.mxu0 0
      %589 = vmatprep.subr.bf16.mxu0 0
      %590 = vmatpush2.bf16.msra.mxu0 0
      %591 = vmatprep.subr.bf16.mxu0 0
      %592 = vmatpush2.bf16.msra.mxu0 0
      %593 = vmatprep.mubr.bf16.mxu0 0
      %594 = vmatmul.mubr.bf16.gmra.mxu0 %v559
      %v595 = vpop.f32.mrf.mxu0
      %v596 = vadd.f32 0.0, %v595
      %v597 = vpop.f32.mrf.mxu0
      %v598 = vpop.f32.mrf.mxu0
      %v599 = vadd.f32 0.0, %v598
      %v600 = vpop.f32.mrf.mxu0
      %601 = vdwg.mxu0
      %v604 = vrot.slane %v596, 7
      %v605 = vrot.slane %v599, 7
      %v606 = vsel %vm373, %v604, %v605
      %v609 = vsel %vm373, 0.0, %v604
      %v610 = vadd.f32 %v609, 0.0
      %v611 = vadd.f32 %v606, 0.0
      %s612 = scalar_lea.vmem %s4, 32
      %v613 = vld [vmem:[%s612] sm:$0xf]
      %v614 = vld [vmem:[%s612 + $0x4] sm:$0xf]
      %v615 = vld [vmem:[%s612 + $0x8] sm:$0xf]
      %v616 = vld [vmem:[%s612 + $0xc] sm:$0xf]
      %v617 = vld [vmem:[%s612 + $0x10] sm:$0xf]
      %v618 = vld [vmem:[%s612 + $0x14] sm:$0xf]
      %v619 = vld [vmem:[%s612 + $0x18] sm:$0xf]
      %v620 = vld [vmem:[%s612 + $0x1c] sm:$0xf]
      %v629 = vunpack.c.l.b16 %v613
      %v630 = vunpack.c.l.b16 %v614
      %v631 = vunpack.c.l.b16 %v615
      %v632 = vunpack.c.l.b16 %v616
      %v633 = vunpack.c.l.b16 %v617
      %v634 = vunpack.c.l.b16 %v618
      %v635 = vunpack.c.l.b16 %v619
      %v636 = vunpack.c.l.b16 %v620
      %v637 = vpack.c.b16 %v630, %v629
      %v638 = vpack.c.b16 %v632, %v631
      %v639 = vpack.c.b16 %v634, %v633
      %v640 = vpack.c.b16 %v636, %v635
      %645 = vmatprep.subr.bf16.mxu0 0
      %646 = vmatpush1.bf16.msra.mxu0 0
      %647 = vmatprep.subr.bf16.mxu0 0
      %648 = vmatpush1.bf16.msra.mxu0 0
      %649 = vmatprep.subr.bf16.mxu0 0
      %650 = vmatpush1.bf16.msra.mxu0 0
      %651 = vmatprep.subr.bf16.mxu0 0
      %652 = vmatpush1.bf16.msra.mxu0 0
      %653 = vmatprep.subr.bf16.mxu0 0
      %654 = vmatpush1.bf16.msra.mxu0 %v640
      %655 = vmatprep.subr.bf16.mxu0 0
      %656 = vmatpush1.bf16.msra.mxu0 %v639
      %657 = vmatprep.subr.bf16.mxu0 0
      %658 = vmatpush1.bf16.msra.mxu0 %v638
      %659 = vmatprep.subr.bf16.mxu0 0
      %660 = vmatpush1.bf16.msra.mxu0 %v637
      %661 = vmatprep.subr.bf16.mxu0 0
      %662 = vmatpush2.bf16.msra.mxu0 0
      %663 = vmatprep.subr.bf16.mxu0 0
      %664 = vmatpush2.bf16.msra.mxu0 0
      %665 = vmatprep.subr.bf16.mxu0 0
      %666 = vmatpush2.bf16.msra.mxu0 0
      %667 = vmatprep.subr.bf16.mxu0 0
      %668 = vmatpush2.bf16.msra.mxu0 0
      %669 = vmatprep.subr.bf16.mxu0 0
      %670 = vmatpush2.bf16.msra.mxu0 0
      %671 = vmatprep.subr.bf16.mxu0 0
      %672 = vmatpush2.bf16.msra.mxu0 0
      %673 = vmatprep.subr.bf16.mxu0 0
      %674 = vmatpush2.bf16.msra.mxu0 0
      %675 = vmatprep.subr.bf16.mxu0 0
      %676 = vmatpush2.bf16.msra.mxu0 0
      %677 = vmatprep.mubr.bf16.mxu0 0
      %678 = vmatmul.mubr.bf16.gmra.mxu0 %v559
      %v679 = vpop.f32.mrf.mxu0
      %v680 = vadd.f32 0.0, %v679
      %v681 = vpop.f32.mrf.mxu0
      %v682 = vpop.f32.mrf.mxu0
      %v683 = vadd.f32 0.0, %v682
      %v684 = vpop.f32.mrf.mxu0
      %685 = vdwg.mxu0
      %v686 = vadd.f32 %v610, %v680
      %v687 = vadd.f32 %v611, %v683
      %s688 = scalar_lea.vmem %s4, 64
      %v689 = vld [vmem:[%s688] sm:$0xf]
      %v690 = vld [vmem:[%s688 + $0x4] sm:$0xf]
      %v691 = vld [vmem:[%s688 + $0x8] sm:$0xf]
      %v692 = vld [vmem:[%s688 + $0xc] sm:$0xf]
      %v693 = vld [vmem:[%s688 + $0x10] sm:$0xf]
      %v694 = vld [vmem:[%s688 + $0x14] sm:$0xf]
      %v695 = vld [vmem:[%s688 + $0x18] sm:$0xf]
      %v696 = vld [vmem:[%s688 + $0x1c] sm:$0xf]
      %v705 = vunpack.c.l.b16 %v689
      %v706 = vunpack.c.l.b16 %v690
      %v707 = vunpack.c.l.b16 %v691
      %v708 = vunpack.c.l.b16 %v692
      %v709 = vunpack.c.l.b16 %v693
      %v710 = vunpack.c.l.b16 %v694
      %v711 = vunpack.c.l.b16 %v695
      %v712 = vunpack.c.l.b16 %v696
      %v713 = vpack.c.b16 %v706, %v705
      %v714 = vpack.c.b16 %v708, %v707
      %v715 = vpack.c.b16 %v710, %v709
      %v716 = vpack.c.b16 %v712, %v711
      %721 = vmatprep.subr.bf16.mxu0 0
      %722 = vmatpush1.bf16.msra.mxu0 0
      %723 = vmatprep.subr.bf16.mxu0 0
      %724 = vmatpush1.bf16.msra.mxu0 0
      %725 = vmatprep.subr.bf16.mxu0 0
      %726 = vmatpush1.bf16.msra.mxu0 0
      %727 = vmatprep.subr.bf16.mxu0 0
      %728 = vmatpush1.bf16.msra.mxu0 0
      %729 = vmatprep.subr.bf16.mxu0 0
      %730 = vmatpush1.bf16.msra.mxu0 %v716
      %731 = vmatprep.subr.bf16.mxu0 0
      %732 = vmatpush1.bf16.msra.mxu0 %v715
      %733 = vmatprep.subr.bf16.mxu0 0
      %734 = vmatpush1.bf16.msra.mxu0 %v714
      %735 = vmatprep.subr.bf16.mxu0 0
      %736 = vmatpush1.bf16.msra.mxu0 %v713
      %737 = vmatprep.subr.bf16.mxu0 0
      %738 = vmatpush2.bf16.msra.mxu0 0
      %739 = vmatprep.subr.bf16.mxu0 0
      %740 = vmatpush2.bf16.msra.mxu0 0
      %741 = vmatprep.subr.bf16.mxu0 0
      %742 = vmatpush2.bf16.msra.mxu0 0
      %743 = vmatprep.subr.bf16.mxu0 0
      %744 = vmatpush2.bf16.msra.mxu0 0
      %745 = vmatprep.subr.bf16.mxu0 0
      %746 = vmatpush2.bf16.msra.mxu0 0
      %747 = vmatprep.subr.bf16.mxu0 0
      %748 = vmatpush2.bf16.msra.mxu0 0
      %749 = vmatprep.subr.bf16.mxu0 0
      %750 = vmatpush2.bf16.msra.mxu0 0
      %751 = vmatprep.subr.bf16.mxu0 0
      %752 = vmatpush2.bf16.msra.mxu0 0
      %753 = vmatprep.mubr.bf16.mxu0 0
      %754 = vmatmul.mubr.bf16.gmra.mxu0 %v559
      %v755 = vpop.f32.mrf.mxu0
      %v756 = vadd.f32 0.0, %v755
      %v757 = vpop.f32.mrf.mxu0
      %v758 = vpop.f32.mrf.mxu0
      %v759 = vadd.f32 0.0, %v758
      %v760 = vpop.f32.mrf.mxu0
      %761 = vdwg.mxu0
      %v764 = vrot.slane %v756, 1
      %v765 = vrot.slane %v759, 1
      %v766 = vsel %vm502, %v764, %v765
      %v769 = vsel %vm502, %v765, 0.0
      %v770 = vadd.f32 %v686, %v766
      %v771 = vadd.f32 %v687, %v769
      %v773 = vlaneseq
      %v774 = vshrl.u32 %v773, 7
      %v775 = vsub.s32 0, %v774
      %v776 = vrot.slane %v524, %v775
      %v778 = vadd.f32 %v770, %v776
      %v779 = vadd.f32 %v771, %v776
      %v780 = vunpack.c.l.bf16 %v294
      %v781 = vunpack.c.l.bf16 %v295
      %v782 = vadd.f32 %v780, %v778
      %v783 = vadd.f32 %v781, %v779
      %v784 = vld [vmem:[%s6] sm:$0x1]
      %v785 = vld [vmem:[%s7] sm:$0x1]
      %v786 = vsel %vm326, %v782, 0.0
      %787 = vadd.xlane.f32.xlu0 %v786
      %v788 = vpop.xlane.xlu0 %787
      %v789 = vsel %vm326, %v783, 0.0
      %790 = vadd.xlane.f32.xlu0 %v789
      %v791 = vpop.xlane.xlu0 %790
      %v792 = vrcp.pop 32.0
      %v793 = vmul.f32 %v788, %v792
      %v794 = vmul.f32 %v791, %v792
      %v795 = vsub.f32 %v782, %v793
      %v796 = vsub.f32 %v783, %v794
      %v797 = vmul.f32 %v795, %v795
      %v798 = vmul.f32 %v796, %v796
      %v799 = vsel %vm326, %v797, 0.0
      %800 = vadd.xlane.f32.xlu0 %v799
      %v801 = vpop.xlane.xlu0 %800
      %v802 = vsel %vm326, %v798, 0.0
      %803 = vadd.xlane.f32.xlu0 %v802
      %v804 = vpop.xlane.xlu0 %803
      %v805 = vmul.f32 %v801, %v792
      %v806 = vmul.f32 %v804, %v792
      %v807 = vadd.f32 %v805, 1e-05
      %v808 = vadd.f32 %v806, 1e-05
      %v809 = vrsqrt.pop %v807
      %v810 = vrsqrt.pop %v808
      %v811 = vmul.f32 %v795, %v809
      %v812 = vmul.f32 %v796, %v810
      %v814 = vlaneseq
      %v815 = vshrl.u32 %v814, 7
      %v816 = vsub.s32 0, %v815
      %v817 = vrot.slane %v784, %v816
      %v819 = vmul.f32 %v811, %v817
      %v820 = vmul.f32 %v812, %v817
      %v822 = vlaneseq
      %v823 = vshrl.u32 %v822, 7
      %v824 = vsub.s32 0, %v823
      %v825 = vrot.slane %v785, %v824
      %v827 = vadd.f32 %v819, %v825
      %v828 = vadd.f32 %v820, %v825
      %v829 = vpack.c.bf16 %v828, %v827
      %v831 = vunpack.c.l.b16 %v829
      %v832 = vunpack.c.h.b16 %v829
      %v833 = vpack.c.b16 %v831, %v831
      %v834 = vpack.c.b16 %v832, %v832
      %vm837 = vcmask 257024
      %838 = vst.msk [vmem:[%s285] sm:$0xf] %vm837, %v833
      %839 = vst.msk [vmem:[%s285 + $0x4] sm:$0xf] %vm837, %v834
      %p840 = scmp.lt.s32.totalorder %s25, 1
      %s841 = scalar_select %p840, %s25, 1
      %s842 = smul.addr %s841, 2
      %s843 = smul.addr %s842, 4
      %s844 = scalar_lea.vmem %s8, %s843
      // Predicated region
      $region49: #{text_encoder_forward.6} parent=47 // pred_check
        %p845 = pneg %p195
      $region50: #{text_encoder_forward.6} parent=47 // pred_check_branch
        %847 = sbr.rel (%p845) target = $region52
      $region51: #{text_encoder_forward.6} parent=47 // pred_region
        _
      $region52: #{text_encoder_forward.6} parent=47 // pred_fallthru
        _
    $region48: #{text_encoder_forward.6} parent=5 // pred_fallthru
      _
    %p848 = scmp.le.s32.totalorder 2, %s20
    // Predicated region
    $region53: #{text_encoder_forward.6} parent=5 // pred_check
      %p849 = pneg %p848
    $region54: #{text_encoder_forward.6} parent=5 // pred_check_branch
      %851 = sbr.rel (%p849) target = $region56
    $region55: #{text_encoder_forward.6} parent=5 // pred_region
      %s852 = ssub.s32 %s20, 2
      // Predicated region
      $region57: #{text_encoder_forward.6} parent=55 // pred_check
        %p853 = pneg %p201
      $region58: #{text_encoder_forward.6} parent=55 // pred_check_branch
        %855 = sbr.rel (%p853) target = $region60
      $region59: #{text_encoder_forward.6} parent=55 // pred_region
        %p856 = scmp.lt.s32.totalorder %s26, 1
        %s857 = scalar_select %p856, %s26, 1
        %s858 = smul.addr %s857, 2
        %s859 = smul.addr %s858, 4
        %s860 = scalar_lea.vmem %s8, %s859
      $region60: #{text_encoder_forward.6} parent=55 // pred_fallthru
        _
    $region56: #{text_encoder_forward.6} parent=5 // pred_fallthru
      _
  $region6: #{text_encoder_forward.6} parent=0 // loop_footer
    %s24 = sadd.s32 1, %s20
  $region7: #{text_encoder_forward.6} parent=0 // loop_footer_branch
    %19 = sbr.rel target = $region3
  $region8: #{text_encoder_forward.6} parent=0 // loop_exit
    _

// kernel: text_encoder_forward.8
$region0: #{text_encoder_forward.8}
  #allocation0 [shape = 'u32[]', space=smem, size = 0x4, offset = 0x4, fixed_abs, tag = 'smem constant byte address 0x4 - core index']
  #allocation1 [shape = 'u32[144,128]{1,0:T(1,128)}', space=vmem, size = 0x12000, scoped, tag = 'internal scratch']
  #allocation2 [shape = 's32[1]{0}', space=sflag, size = 0x4, scoped, tag = 'scoped memory for text_encoder_forward.8']
  #allocation3 [shape = 'u8[512]{0}', space=smem, size = 0x200, scoped, tag = 'prefetched SMEM operand 0']
  %s0 = inlined_call_operand.vmem [shape: s32[2], index: 0, kind: input, shape index: {}]
  %s1 = inlined_call_operand.vmem [shape: bf16[2,16,32], index: 1, kind: input, shape index: {}]
  %s2 = inlined_call_operand.vmem [shape: bf16[3,32,64], index: 2, kind: input, shape index: {}]
  %s3 = inlined_call_operand.vmem [shape: f32[1,64], index: 3, kind: input, shape index: {}]
  %s4 = inlined_call_operand.vmem [shape: bf16[3,64,32], index: 4, kind: input, shape index: {}]
  %s5 = inlined_call_operand.vmem [shape: f32[1,32], index: 5, kind: input, shape index: {}]
  %s6 = inlined_call_operand.vmem [shape: f32[1,32], index: 6, kind: input, shape index: {}]
  %s7 = inlined_call_operand.vmem [shape: f32[1,32], index: 7, kind: input, shape index: {}]
  %s8 = inlined_call_operand.vmem [shape: bf16[2,16,32], index: 8, kind: output, shape index: {}]
  %s9 = sld [smem:[#allocation0]]
  $region61: #{text_encoder_forward.8} parent=0
    _
  %s11 = ssub.s32 1, %s9
  %s12 = scalar_select 0, %s11, %s9
  %s13 = sshll.u32 %s0, 4
  %s14 = int_to_ptr.vmem [resolvable:$true] %s13
  %16 = dma.vmem_to_smem %s14, 16, [#allocation3], [#allocation2]
  %17 = dma.done [#allocation2], 16
  %18 = sfence
  loop: start=0, step=1, limit=4
  $region2: #{text_encoder_forward.8} parent=0 // loop_pre_header
    _
  $region3: #{text_encoder_forward.8} parent=0 // loop_header
    %s20 = sphi 0, %s24
    %p21 = scmp.ge.s32.totalorder %s20, 4
    %s30 = sphi 0, %s32
    %s33 = sphi 0, %s30
    %s34 = sphi 0, %s33
    %s50 = sphi 0, %s34
    %s54 = sphi 0, %s54
    %s56 = sphi 0, %s54
    %s57 = sphi 0, %s56
    %s71 = sphi 0, %s57
    %s75 = sphi 0, %s75
    %s77 = sphi 0, %s75
    %s78 = sphi 0, %s77
    %s92 = sphi 0, %s78
    %s96 = sphi 0, %s96
    %s98 = sphi 0, %s96
    %s99 = sphi 0, %s98
    %s113 = sphi 0, %s99
    %s117 = sphi 0, %s117
    %s119 = sphi 0, %s117
    %s120 = sphi 0, %s119
    %s134 = sphi 0, %s120
    %s138 = sphi 0, %s138
    %s140 = sphi 0, %s138
    %s141 = sphi 0, %s140
    %s155 = sphi 0, %s141
    %s159 = sphi 0, %s159
    %s161 = sphi 0, %s159
    %s162 = sphi 0, %s161
    %s176 = sphi 0, %s162
    %s182 = sphi 0, %s184
    %s185 = sphi 0, %s182
    %s186 = sphi 0, %s185
    %s202 = sphi 0, %s186
  $region4: #{text_encoder_forward.8} parent=0 // loop_header_branch
    %23 = sbr.rel (%p21) target = $region8
  $region5: #{text_encoder_forward.8} parent=0 // loop_body
    %s25 = ssub.s32 %s20, 1
    %s26 = ssub.s32 %s20, 2
    %s27 = sadd.s32 %s20, 1
    %s28 = ssub.s32 %s20, %s27
    %p29 = scmp.eq.s32.totalorder %s28, 0
    %s31 = sadd.s32 %s30, 1
    %s32 = scalar_select %p29, %s30, %s31
    %p35 = pneg %p29
    %p36 = scmp.eq.s32.totalorder %s20, 1
    %p37 = por %p35, %p36
    %p38 = scmp.ne.s32.totalorder %s30, %s33
    %p39 = scmp.eq.s32.totalorder %s20, 0
    %p40 = por %p38, %p39
    %p41 = scmp.ne.s32.totalorder %s30, %s33
    %p42 = scmp.eq.s32.totalorder %s25, 1
    %p43 = por %p41, %p42
    %p44 = scmp.ne.s32.totalorder %s33, %s34
    %p45 = scmp.eq.s32.totalorder %s25, 0
    %p46 = por %p44, %p45
    %p47 = scmp.ne.s32.totalorder %s33, %s34
    %p48 = scmp.eq.s32.totalorder %s26, 1
    %p49 = por %p47, %p48
    %p51 = scmp.ne.s32.totalorder %s34, %s50
    %p52 = scmp.eq.s32.totalorder %s26, 0
    %p53 = por %p51, %p52
    %s55 = sadd.s32 %s54, 1
    %p58 = scmp.eq.s32.totalorder %s20, 1
    %p59 = scmp.ne.s32.totalorder %s54, %s56
    %p60 = scmp.eq.s32.totalorder %s20, 0
    %p61 = por %p59, %p60
    %p62 = scmp.ne.s32.totalorder %s54, %s56
    %p63 = scmp.eq.s32.totalorder %s25, 1
    %p64 = por %p62, %p63
    %p65 = scmp.ne.s32.totalorder %s56, %s57
    %p66 = scmp.eq.s32.totalorder %s25, 0
    %p67 = por %p65, %p66
    %p68 = scmp.ne.s32.totalorder %s56, %s57
    %p69 = scmp.eq.s32.totalorder %s26, 1
    %p70 = por %p68, %p69
    %p72 = scmp.ne.s32.totalorder %s57, %s71
    %p73 = scmp.eq.s32.totalorder %s26, 0
    %p74 = por %p72, %p73
    %s76 = sadd.s32 %s75, 1
    %p79 = scmp.eq.s32.totalorder %s20, 1
    %p80 = scmp.ne.s32.totalorder %s75, %s77
    %p81 = scmp.eq.s32.totalorder %s20, 0
    %p82 = por %p80, %p81
    %p83 = scmp.ne.s32.totalorder %s75, %s77
    %p84 = scmp.eq.s32.totalorder %s25, 1
    %p85 = por %p83, %p84
    %p86 = scmp.ne.s32.totalorder %s77, %s78
    %p87 = scmp.eq.s32.totalorder %s25, 0
    %p88 = por %p86, %p87
    %p89 = scmp.ne.s32.totalorder %s77, %s78
    %p90 = scmp.eq.s32.totalorder %s26, 1
    %p91 = por %p89, %p90
    %p93 = scmp.ne.s32.totalorder %s78, %s92
    %p94 = scmp.eq.s32.totalorder %s26, 0
    %p95 = por %p93, %p94
    %s97 = sadd.s32 %s96, 1
    %p100 = scmp.eq.s32.totalorder %s20, 1
    %p101 = scmp.ne.s32.totalorder %s96, %s98
    %p102 = scmp.eq.s32.totalorder %s20, 0
    %p103 = por %p101, %p102
    %p104 = scmp.ne.s32.totalorder %s96, %s98
    %p105 = scmp.eq.s32.totalorder %s25, 1
    %p106 = por %p104, %p105
    %p107 = scmp.ne.s32.totalorder %s98, %s99
    %p108 = scmp.eq.s32.totalorder %s25, 0
    %p109 = por %p107, %p108
    %p110 = scmp.ne.s32.totalorder %s98, %s99
    %p111 = scmp.eq.s32.totalorder %s26, 1
    %p112 = por %p110, %p111
    %p114 = scmp.ne.s32.totalorder %s99, %s113
    %p115 = scmp.eq.s32.totalorder %s26, 0
    %p116 = por %p114, %p115
    %s118 = sadd.s32 %s117, 1
    %p121 = scmp.eq.s32.totalorder %s20, 1
    %p122 = scmp.ne.s32.totalorder %s117, %s119
    %p123 = scmp.eq.s32.totalorder %s20, 0
    %p124 = por %p122, %p123
    %p125 = scmp.ne.s32.totalorder %s117, %s119
    %p126 = scmp.eq.s32.totalorder %s25, 1
    %p127 = por %p125, %p126
    %p128 = scmp.ne.s32.totalorder %s119, %s120
    %p129 = scmp.eq.s32.totalorder %s25, 0
    %p130 = por %p128, %p129
    %p131 = scmp.ne.s32.totalorder %s119, %s120
    %p132 = scmp.eq.s32.totalorder %s26, 1
    %p133 = por %p131, %p132
    %p135 = scmp.ne.s32.totalorder %s120, %s134
    %p136 = scmp.eq.s32.totalorder %s26, 0
    %p137 = por %p135, %p136
    %s139 = sadd.s32 %s138, 1
    %p142 = scmp.eq.s32.totalorder %s20, 1
    %p143 = scmp.ne.s32.totalorder %s138, %s140
    %p144 = scmp.eq.s32.totalorder %s20, 0
    %p145 = por %p143, %p144
    %p146 = scmp.ne.s32.totalorder %s138, %s140
    %p147 = scmp.eq.s32.totalorder %s25, 1
    %p148 = por %p146, %p147
    %p149 = scmp.ne.s32.totalorder %s140, %s141
    %p150 = scmp.eq.s32.totalorder %s25, 0
    %p151 = por %p149, %p150
    %p152 = scmp.ne.s32.totalorder %s140, %s141
    %p153 = scmp.eq.s32.totalorder %s26, 1
    %p154 = por %p152, %p153
    %p156 = scmp.ne.s32.totalorder %s141, %s155
    %p157 = scmp.eq.s32.totalorder %s26, 0
    %p158 = por %p156, %p157
    %s160 = sadd.s32 %s159, 1
    %p163 = scmp.eq.s32.totalorder %s20, 1
    %p164 = scmp.ne.s32.totalorder %s159, %s161
    %p165 = scmp.eq.s32.totalorder %s20, 0
    %p166 = por %p164, %p165
    %p167 = scmp.ne.s32.totalorder %s159, %s161
    %p168 = scmp.eq.s32.totalorder %s25, 1
    %p169 = por %p167, %p168
    %p170 = scmp.ne.s32.totalorder %s161, %s162
    %p171 = scmp.eq.s32.totalorder %s25, 0
    %p172 = por %p170, %p171
    %p173 = scmp.ne.s32.totalorder %s161, %s162
    %p174 = scmp.eq.s32.totalorder %s26, 1
    %p175 = por %p173, %p174
    %p177 = scmp.ne.s32.totalorder %s162, %s176
    %p178 = scmp.eq.s32.totalorder %s26, 0
    %p179 = por %p177, %p178
    %s180 = ssub.s32 %s20, %s27
    %p181 = scmp.eq.s32.totalorder %s180, 0
    %s183 = sadd.s32 %s182, 1
    %s184 = scalar_select %p181, %s182, %s183
    %p187 = pneg %p181
    %p188 = scmp.eq.s32.totalorder %s20, 1
    %p189 = por %p187, %p188
    %p190 = scmp.ne.s32.totalorder %s182, %s185
    %p191 = scmp.eq.s32.totalorder %s20, 0
    %p192 = por %p190, %p191
    %p193 = scmp.ne.s32.totalorder %s182, %s185
    %p194 = scmp.eq.s32.totalorder %s25, 1
    %p195 = por %p193, %p194
    %p196 = scmp.ne.s32.totalorder %s185, %s186
    %p197 = scmp.eq.s32.totalorder %s25, 0
    %p198 = por %p196, %p197
    %p199 = scmp.ne.s32.totalorder %s185, %s186
    %p200 = scmp.eq.s32.totalorder %s26, 1
    %p201 = por %p199, %p200
    %p203 = scmp.ne.s32.totalorder %s186, %s202
    %p204 = scmp.eq.s32.totalorder %s26, 0
    %p205 = por %p203, %p204
    %p206 = scmp.le.s32.totalorder 1, %s20
    %p207 = scmp.lt.s32.totalorder %s20, 3
    %p208 = pnand %p206, %p207
    %p209 = pneg %p208
    // Predicated region
    $region9: #{text_encoder_forward.8} parent=5 // pred_check
      _
    $region10: #{text_encoder_forward.8} parent=5 // pred_check_branch
      %211 = sbr.rel (%p208) target = $region12
    $region11: #{text_encoder_forward.8} parent=5 // pred_region
      %s212 = ssub.s32 %s20, 1
      // Predicated region
      $region13: #{text_encoder_forward.8} parent=11 // pred_check
        %p213 = pneg %p67
      $region14: #{text_encoder_forward.8} parent=11 // pred_check_branch
        %215 = sbr.rel (%p213) target = $region16
      $region15: #{text_encoder_forward.8} parent=11 // pred_region
        _
      $region16: #{text_encoder_forward.8} parent=11 // pred_fallthru
        _
      // Predicated region
      $region17: #{text_encoder_forward.8} parent=11 // pred_check
        %p216 = pneg %p88
      $region18: #{text_encoder_forward.8} parent=11 // pred_check_branch
        %218 = sbr.rel (%p216) target = $region20
      $region19: #{text_encoder_forward.8} parent=11 // pred_region
        _
      $region20: #{text_encoder_forward.8} parent=11 // pred_fallthru
        _
      // Predicated region
      $region21: #{text_encoder_forward.8} parent=11 // pred_check
        %p219 = pneg %p109
      $region22: #{text_encoder_forward.8} parent=11 // pred_check_branch
        %221 = sbr.rel (%p219) target = $region24
      $region23: #{text_encoder_forward.8} parent=11 // pred_region
        _
      $region24: #{text_encoder_forward.8} parent=11 // pred_fallthru
        _
      // Predicated region
      $region25: #{text_encoder_forward.8} parent=11 // pred_check
        %p222 = pneg %p130
      $region26: #{text_encoder_forward.8} parent=11 // pred_check_branch
        %224 = sbr.rel (%p222) target = $region28
      $region27: #{text_encoder_forward.8} parent=11 // pred_region
        _
      $region28: #{text_encoder_forward.8} parent=11 // pred_fallthru
        _
      // Predicated region
      $region29: #{text_encoder_forward.8} parent=11 // pred_check
        %p225 = pneg %p151
      $region30: #{text_encoder_forward.8} parent=11 // pred_check_branch
        %227 = sbr.rel (%p225) target = $region32
      $region31: #{text_encoder_forward.8} parent=11 // pred_region
        _
      $region32: #{text_encoder_forward.8} parent=11 // pred_fallthru
        _
      // Predicated region
      $region33: #{text_encoder_forward.8} parent=11 // pred_check
        %p228 = pneg %p172
      $region34: #{text_encoder_forward.8} parent=11 // pred_check_branch
        %230 = sbr.rel (%p228) target = $region36
      $region35: #{text_encoder_forward.8} parent=11 // pred_region
        _
      $region36: #{text_encoder_forward.8} parent=11 // pred_fallthru
        _
    $region12: #{text_encoder_forward.8} parent=5 // pred_fallthru
      _
    %p231 = scmp.lt.s32.totalorder %s20, 2
    // Predicated region
    $region37: #{text_encoder_forward.8} parent=5 // pred_check
      %p232 = pneg %p231
    $region38: #{text_encoder_forward.8} parent=5 // pred_check_branch
      %234 = sbr.rel (%p232) target = $region40
    $region39: #{text_encoder_forward.8} parent=5 // pred_region
      // Predicated region
      $region41: #{text_encoder_forward.8} parent=39 // pred_check
        %p235 = pneg %p40
      $region42: #{text_encoder_forward.8} parent=39 // pred_check_branch
        %237 = sbr.rel (%p235) target = $region44
      $region43: #{text_encoder_forward.8} parent=39 // pred_region
        %p238 = scmp.lt.s32.totalorder %s20, 1
        %s239 = scalar_select %p238, %s20, 1
        %s240 = smul.addr %s239, 2
        %s241 = smul.addr %s240, 4
        %s242 = scalar_lea.vmem %s1, %s241
      $region44: #{text_encoder_forward.8} parent=39 // pred_fallthru
        _
    $region40: #{text_encoder_forward.8} parent=5 // pred_fallthru
      _
    %p243 = scmp.le.s32.totalorder 1, %s20
    %p244 = scmp.lt.s32.totalorder %s20, 3
    %p245 = pnand %p243, %p244
    %p246 = pneg %p245
    // Predicated region
    $region45: #{text_encoder_forward.8} parent=5 // pred_check
      _
    $region46: #{text_encoder_forward.8} parent=5 // pred_check_branch
      %248 = sbr.rel (%p245) target = $region48
    $region47: #{text_encoder_forward.8} parent=5 // pred_region
      %s249 = ssub.s32 %s20, 1
      %p250 = scmp.lt.s32.totalorder %s25, 1
      %s251 = scalar_select %p250, %s25, 1
      %s252 = smul.addr %s251, 2
      %s253 = smul.addr %s252, 4
      %s254 = scalar_lea.vmem %s1, %s253
      %p255 = pneg %p46
      %p256 = pneg %p43
      %p257 = pneg %p67
      %p258 = pneg %p64
      %p259 = pneg %p88
      %p260 = pneg %p85
      %p261 = pneg %p109
      %p262 = pneg %p106
      %p263 = pneg %p130
      %p264 = pneg %p127
      %p265 = pneg %p151
      %p266 = pneg %p148
      %p267 = pneg %p172
      %p268 = pneg %p169
      %p269 = pneg %p198
      %p270 = pneg %p195
      %p271 = scmp.lt.s32.totalorder %s25, 1
      %s272 = scalar_select %p271, %s25, 1
      %s273 = smul.addr %s272, 2
      %s274 = smul.addr %s273, 4
      %s275 = scalar_lea.vmem %s8, %s274
      %p276 = scmp.lt.s32.totalorder %s25, 1
      %s277 = scalar_select %p276, %s25, 1
      %s278 = smul.addr %s277, 2
      %s279 = smul.addr %s278, 4
      %s280 = scalar_lea.vmem %s1, %s279
      %p281 = scmp.lt.s32.totalorder %s25, 1
      %s282 = scalar_select %p281, %s25, 1
      %s283 = smul.addr %s282, 2
      %s284 = smul.addr %s283, 4
      %s285 = scalar_lea.vmem %s8, %s284
      %s287 = sld [smem:[#allocation3 + %s25]]
      %v288 = vlaneseq
      %v289 = vshrl.u32 %v288, 7
      %v290 = vadd.s32 %v289, 8
      %v291 = vstv %s287
      %vm292 = vcmp.lt.s32.totalorder %v289, %v291
      %vm293 = vcmp.lt.s32.totalorder %v290, %v291
      %v294 = vld [vmem:[%s280] sm:$0xf]
      %v295 = vld [vmem:[%s280 + $0x4] sm:$0xf]
      %v296 = vsel %vm292, 1, 0
      %v297 = vsel %vm293, 1, 0
      %vm298 = vcmp.eq.s32.totalorder %v296, 1
      %vm299 = vcmp.eq.s32.totalorder %v297, 1
      %vm300 = vmpackc.low %vm298, %vm298
      %vm301 = vmpackc.low %vm299, %vm299
      %v302 = vsel %vm300, %v294, 0
      %v303 = vsel %vm301, %v295, 0
      %v304 = vld [vmem:[%s3] sm:$0x1]
      %v305 = vld [vmem:[%s2] sm:$0xf]
      %v306 = vld [vmem:[%s2 + $0x4] sm:$0xf]
      %v307 = vld [vmem:[%s2 + $0x8] sm:$0xf]
      %v308 = vld [vmem:[%s2 + $0xc] sm:$0xf]
      %v311 = vunpack.c.l.b16 %v302
      %v312 = vunpack.c.l.b16 %v303
      %v313 = vpack.c.b16 %v312, %v311
      %v318 = vunpack.c.l.b16 %v305
      %v319 = vunpack.c.l.b16 %v306
      %v320 = vunpack.c.l.b16 %v307
      %v321 = vunpack.c.l.b16 %v308
      %v322 = vpack.c.b16 %v319, %v318
      %v323 = vpack.c.b16 %v321, %v320
      %vm326 = vcmask 261120
      %v328 = vsel %vm326, %v313, 0
      %330 = vmatprep.subr.bf16.mxu0 0
      %331 = vmatpush1.bf16.msra.mxu0 0
      %332 = vmatprep.subr.bf16.mxu0 0
      %333 = vmatpush1.bf16.msra.mxu0 0
      %334 = vmatprep.subr.bf16.mxu0 0
      %335 = vmatpush1.bf16.msra.mxu0 0
      %336 = vmatprep.subr.bf16.mxu0 0
      %337 = vmatpush1.bf16.msra.mxu0 0
      %338 = vmatprep.subr.bf16.mxu0 0
      %339 = vmatpush1.bf16.msra.mxu0 0
      %340 = vmatprep.subr.bf16.mxu0 0
      %341 = vmatpush1.bf16.msra.mxu0 0
      %342 = vmatprep.subr.bf16.mxu0 0
      %343 = vmatpush1.bf16.msra.mxu0 %v323
      %344 = vmatprep.subr.bf16.mxu0 0
      %345 = vmatpush1.bf16.msra.mxu0 %v322
      %346 = vmatprep.subr.bf16.mxu0 0
      %347 = vmatpush2.bf16.msra.mxu0 0
      %348 = vmatprep.subr.bf16.mxu0 0
      %349 = vmatpush2.bf16.msra.mxu0 0
      %350 = vmatprep.subr.bf16.mxu0 0
      %351 = vmatpush2.bf16.msra.mxu0 0
      %352 = vmatprep.subr.bf16.mxu0 0
      %353 = vmatpush2.bf16.msra.mxu0 0
      %354 = vmatprep.subr.bf16.mxu0 0
      %355 = vmatpush2.bf16.msra.mxu0 0
      %356 = vmatprep.subr.bf16.mxu0 0
      %357 = vmatpush2.bf16.msra.mxu0 0
      %358 = vmatprep.subr.bf16.mxu0 0
      %359 = vmatpush2.bf16.msra.mxu0 0
      %360 = vmatprep.subr.bf16.mxu0 0
      %361 = vmatpush2.bf16.msra.mxu0 0
      %362 = vmatprep.mubr.bf16.mxu0 0
      %363 = vmatmul.mubr.bf16.gmra.mxu0 %v328
      %v364 = vpop.f32.mrf.mxu0
      %v365 = vadd.f32 0.0, %v364
      %v366 = vpop.f32.mrf.mxu0
      %v367 = vpop.f32.mrf.mxu0
      %v368 = vadd.f32 0.0, %v367
      %v369 = vpop.f32.mrf.mxu0
      %370 = vdwg.mxu0
      %vm373 = vcmask 1040384
      %v374 = vrot.slane %v365, 7
      %v375 = vrot.slane %v368, 7
      %v376 = vsel %vm373, %v374, %v375
      %v379 = vsel %vm373, 0.0, %v374
      %v380 = vadd.f32 %v379, 0.0
      %v381 = vadd.f32 %v376, 0.0
      %s382 = scalar_lea.vmem %s2, 16
      %v383 = vld [vmem:[%s382] sm:$0xf]
      %v384 = vld [vmem:[%s382 + $0x4] sm:$0xf]
      %v385 = vld [vmem:[%s382 + $0x8] sm:$0xf]
      %v386 = vld [vmem:[%s382 + $0xc] sm:$0xf]
      %v391 = vunpack.c.l.b16 %v383
      %v392 = vunpack.c.l.b16 %v384
      %v393 = vunpack.c.l.b16 %v385
      %v394 = vunpack.c.l.b16 %v386
      %v395 = vpack.c.b16 %v392, %v391
      %v396 = vpack.c.b16 %v394, %v393
      %399 = vmatprep.subr.bf16.mxu0 0
      %400 = vmatpush1.bf16.msra.mxu0 0
      %401 = vmatprep.subr.bf16.mxu0 0
      %402 = vmatpush1.bf16.msra.mxu0 0
      %403 = vmatprep.subr.bf16.mxu0 0
      %404 = vmatpush1.bf16.msra.mxu0 0
      %405 = vmatprep.subr.bf16.mxu0 0
      %406 = vmatpush1.bf16.msra.mxu0 0
      %407 = vmatprep.subr.bf16.mxu0 0
      %408 = vmatpush1.bf16.msra.mxu0 0
      %409 = vmatprep.subr.bf16.mxu0 0
      %410 = vmatpush1.bf16.msra.mxu0 0
      %411 = vmatprep.subr.bf16.mxu0 0
      %412 = vmatpush1.bf16.msra.mxu0 %v396
      %413 = vmatprep.subr.bf16.mxu0 0
      %414 = vmatpush1.bf16.msra.mxu0 %v395
      %415 = vmatprep.subr.bf16.mxu0 0
      %416 = vmatpush2.bf16.msra.mxu0 0
      %417 = vmatprep.subr.bf16.mxu0 0
      %418 = vmatpush2.bf16.msra.mxu0 0
      %419 = vmatprep.subr.bf16.mxu0 0
      %420 = vmatpush2.bf16.msra.mxu0 0
      %421 = vmatprep.subr.bf16.mxu0 0
      %422 = vmatpush2.bf16.msra.mxu0 0
      %423 = vmatprep.subr.bf16.mxu0 0
      %424 = vmatpush2.bf16.msra.mxu0 0
      %425 = vmatprep.subr.bf16.mxu0 0
      %426 = vmatpush2.bf16.msra.mxu0 0
      %427 = vmatprep.subr.bf16.mxu0 0
      %428 = vmatpush2.bf16.msra.mxu0 0
      %429 = vmatprep.subr.bf16.mxu0 0
      %430 = vmatpush2.bf16.msra.mxu0 0
      %431 = vmatprep.mubr.bf16.mxu0 0
      %432 = vmatmul.mubr.bf16.gmra.mxu0 %v328
      %v433 = vpop.f32.mrf.mxu0
      %v434 = vadd.f32 0.0, %v433
      %v435 = vpop.f32.mrf.mxu0
      %v436 = vpop.f32.mrf.mxu0
      %v437 = vadd.f32 0.0, %v436
      %v438 = vpop.f32.mrf.mxu0
      %439 = vdwg.mxu0
      %v440 = vadd.f32 %v380, %v434
      %v441 = vadd.f32 %v381, %v437
      %s442 = scalar_lea.vmem %s2, 32
      %v443 = vld [vmem:[%s442] sm:$0xf]
      %v444 = vld [vmem:[%s442 + $0x4] sm:$0xf]
      %v445 = vld [vmem:[%s442 + $0x8] sm:$0xf]
      %v446 = vld [vmem:[%s442 + $0xc] sm:$0xf]
      %v451 = vunpack.c.l.b16 %v443
      %v452 = vunpack.c.l.b16 %v444
      %v453 = vunpack.c.l.b16 %v445
      %v454 = vunpack.c.l.b16 %v446
      %v455 = vpack.c.b16 %v452, %v451
      %v456 = vpack.c.b16 %v454, %v453
      %459 = vmatprep.subr.bf16.mxu0 0
      %460 = vmatpush1.bf16.msra.mxu0 0
      %461 = vmatprep.subr.bf16.mxu0 0
      %462 = vmatpush1.bf16.msra.mxu0 0
      %463 = vmatprep.subr.bf16.mxu0 0
      %464 = vmatpush1.bf16.msra.mxu0 0
      %465 = vmatprep.subr.bf16.mxu0 0
      %466 = vmatpush1.bf16.msra.mxu0 0
      %467 = vmatprep.subr.bf16.mxu0 0
      %468 = vmatpush1.bf16.msra.mxu0 0
      %469 = vmatprep.subr.bf16.mxu0 0
      %470 = vmatpush1.bf16.msra.mxu0 0
      %471 = vmatprep.subr.bf16.mxu0 0
      %472 = vmatpush1.bf16.msra.mxu0 %v456
      %473 = vmatprep.subr.bf16.mxu0 0
      %474 = vmatpush1.bf16.msra.mxu0 %v455
      %475 = vmatprep.subr.bf16.mxu0 0
      %476 = vmatpush2.bf16.msra.mxu0 0
      %477 = vmatprep.subr.bf16.mxu0 0
      %478 = vmatpush2.bf16.msra.mxu0 0
      %479 = vmatprep.subr.bf16.mxu0 0
      %480 = vmatpush2.bf16.msra.mxu0 0
      %481 = vmatprep.subr.bf16.mxu0 0
      %482 = vmatpush2.bf16.msra.mxu0 0
      %483 = vmatprep.subr.bf16.mxu0 0
      %484 = vmatpush2.bf16.msra.mxu0 0
      %485 = vmatprep.subr.bf16.mxu0 0
      %486 = vmatpush2.bf16.msra.mxu0 0
      %487 = vmatprep.subr.bf16.mxu0 0
      %488 = vmatpush2.bf16.msra.mxu0 0
      %489 = vmatprep.subr.bf16.mxu0 0
      %490 = vmatpush2.bf16.msra.mxu0 0
      %491 = vmatprep.mubr.bf16.mxu0 0
      %492 = vmatmul.mubr.bf16.gmra.mxu0 %v328
      %v493 = vpop.f32.mrf.mxu0
      %v494 = vadd.f32 0.0, %v493
      %v495 = vpop.f32.mrf.mxu0
      %v496 = vpop.f32.mrf.mxu0
      %v497 = vadd.f32 0.0, %v496
      %v498 = vpop.f32.mrf.mxu0
      %499 = vdwg.mxu0
      %vm502 = vcmask 1046528
      %v503 = vrot.slane %v494, 1
      %v504 = vrot.slane %v497, 1
      %v505 = vsel %vm502, %v503, %v504
      %v508 = vsel %vm502, %v504, 0.0
      %v509 = vadd.f32 %v440, %v505
      %v510 = vadd.f32 %v441, %v508
      %v512 = vlaneseq
      %v513 = vshrl.u32 %v512, 7
      %v514 = vsub.s32 0, %v513
      %v515 = vrot.slane %v304, %v514
      %v517 = vadd.f32 %v509, %v515
      %v518 = vadd.f32 %v510, %v515
      %v519 = vmax.f32 %v517, 0.0
      %v520 = vmax.f32 %v518, 0.0
      %v521 = vsel %vm298, %v519, 0.0
      %v522 = vsel %vm299, %v520, 0.0
      %v523 = vpack.c.bf16 %v522, %v521
      %v524 = vld [vmem:[%s5] sm:$0x1]
      %v525 = vld [vmem:[%s4] sm:$0xf]
      %v526 = vld [vmem:[%s4 + $0x4] sm:$0xf]
      %v527 = vld [vmem:[%s4 + $0x8] sm:$0xf]
      %v528 = vld [vmem:[%s4 + $0xc] sm:$0xf]
      %v529 = vld [vmem:[%s4 + $0x10] sm:$0xf]
      %v530 = vld [vmem:[%s4 + $0x14] sm:$0xf]
      %v531 = vld [vmem:[%s4 + $0x18] sm:$0xf]
      %v532 = vld [vmem:[%s4 + $0x1c] sm:$0xf]
      %v541 = vunpack.c.l.b16 %v525
      %v542 = vunpack.c.l.b16 %v526
      %v543 = vunpack.c.l.b16 %v527
      %v544 = vunpack.c.l.b16 %v528
      %v545 = vunpack.c.l.b16 %v529
      %v546 = vunpack.c.l.b16 %v530
      %v547 = vunpack.c.l.b16 %v531
      %v548 = vunpack.c.l.b16 %v532
      %v549 = vpack.c.b16 %v542, %v541
      %v550 = vpack.c.b16 %v544, %v543
      %v551 = vpack.c.b16 %v546, %v545
      %v552 = vpack.c.b16 %v548, %v547
      %vm557 = vcmask 523264
      %v559 = vsel %vm557, %v523, 0
      %561 = vmatprep.subr.bf16.mxu0 0
      %562 = vmatpush1.bf16.msra.mxu0 0
      %563 = vmatprep.subr.bf16.mxu0 0
      %564 = vmatpush1.bf16.msra.mxu0 0
      %565 = vmatprep.subr.bf16.mxu0 0
      %566 = vmatpush1.bf16.msra.mxu0 0
      %567 = vmatprep.subr.bf16.mxu0 0
      %568 = vmatpush1.bf16.msra.mxu0 0
      %569 = vmatprep.subr.bf16.mxu0 0
      %570 = vmatpush1.bf16.msra.mxu0 %v552
      %571 = vmatprep.subr.bf16.mxu0 0
      %572 = vmatpush1.bf16.msra.mxu0 %v551
      %573 = vmatprep.subr.bf16.mxu0 0
      %574 = vmatpush1.bf16.msra.mxu0 %v550
      %575 = vmatprep.subr.bf16.mxu0 0
      %576 = vmatpush1.bf16.msra.mxu0 %v549
      %577 = vmatprep.subr.bf16.mxu0 0
      %578 = vmatpush2.bf16.msra.mxu0 0
      %579 = vmatprep.subr.bf16.mxu0 0
      %580 = vmatpush2.bf16.msra.mxu0 0
      %581 = vmatprep.subr.bf16.mxu0 0
      %582 = vmatpush2.bf16.msra.mxu0 0
      %583 = vmatprep.subr.bf16.mxu0 0
      %584 = vmatpush2.bf16.msra.mxu0 0
      %585 = vmatprep.subr.bf16.mxu0 0
      %586 = vmatpush2.bf16.msra.mxu0 0
      %587 = vmatprep.subr.bf16.mxu0 0
      %588 = vmatpush2.bf16.msra.mxu0 0
      %589 = vmatprep.subr.bf16.mxu0 0
      %590 = vmatpush2.bf16.msra.mxu0 0
      %591 = vmatprep.subr.bf16.mxu0 0
      %592 = vmatpush2.bf16.msra.mxu0 0
      %593 = vmatprep.mubr.bf16.mxu0 0
      %594 = vmatmul.mubr.bf16.gmra.mxu0 %v559
      %v595 = vpop.f32.mrf.mxu0
      %v596 = vadd.f32 0.0, %v595
      %v597 = vpop.f32.mrf.mxu0
      %v598 = vpop.f32.mrf.mxu0
      %v599 = vadd.f32 0.0, %v598
      %v600 = vpop.f32.mrf.mxu0
      %601 = vdwg.mxu0
      %v604 = vrot.slane %v596, 7
      %v605 = vrot.slane %v599, 7
      %v606 = vsel %vm373, %v604, %v605
      %v609 = vsel %vm373, 0.0, %v604
      %v610 = vadd.f32 %v609, 0.0
      %v611 = vadd.f32 %v606, 0.0
      %s612 = scalar_lea.vmem %s4, 32
      %v613 = vld [vmem:[%s612] sm:$0xf]
      %v614 = vld [vmem:[%s612 + $0x4] sm:$0xf]
      %v615 = vld [vmem:[%s612 + $0x8] sm:$0xf]
      %v616 = vld [vmem:[%s612 + $0xc] sm:$0xf]
      %v617 = vld [vmem:[%s612 + $0x10] sm:$0xf]
      %v618 = vld [vmem:[%s612 + $0x14] sm:$0xf]
      %v619 = vld [vmem:[%s612 + $0x18] sm:$0xf]
      %v620 = vld [vmem:[%s612 + $0x1c] sm:$0xf]
      %v629 = vunpack.c.l.b16 %v613
      %v630 = vunpack.c.l.b16 %v614
      %v631 = vunpack.c.l.b16 %v615
      %v632 = vunpack.c.l.b16 %v616
      %v633 = vunpack.c.l.b16 %v617
      %v634 = vunpack.c.l.b16 %v618
      %v635 = vunpack.c.l.b16 %v619
      %v636 = vunpack.c.l.b16 %v620
      %v637 = vpack.c.b16 %v630, %v629
      %v638 = vpack.c.b16 %v632, %v631
      %v639 = vpack.c.b16 %v634, %v633
      %v640 = vpack.c.b16 %v636, %v635
      %645 = vmatprep.subr.bf16.mxu0 0
      %646 = vmatpush1.bf16.msra.mxu0 0
      %647 = vmatprep.subr.bf16.mxu0 0
      %648 = vmatpush1.bf16.msra.mxu0 0
      %649 = vmatprep.subr.bf16.mxu0 0
      %650 = vmatpush1.bf16.msra.mxu0 0
      %651 = vmatprep.subr.bf16.mxu0 0
      %652 = vmatpush1.bf16.msra.mxu0 0
      %653 = vmatprep.subr.bf16.mxu0 0
      %654 = vmatpush1.bf16.msra.mxu0 %v640
      %655 = vmatprep.subr.bf16.mxu0 0
      %656 = vmatpush1.bf16.msra.mxu0 %v639
      %657 = vmatprep.subr.bf16.mxu0 0
      %658 = vmatpush1.bf16.msra.mxu0 %v638
      %659 = vmatprep.subr.bf16.mxu0 0
      %660 = vmatpush1.bf16.msra.mxu0 %v637
      %661 = vmatprep.subr.bf16.mxu0 0
      %662 = vmatpush2.bf16.msra.mxu0 0
      %663 = vmatprep.subr.bf16.mxu0 0
      %664 = vmatpush2.bf16.msra.mxu0 0
      %665 = vmatprep.subr.bf16.mxu0 0
      %666 = vmatpush2.bf16.msra.mxu0 0
      %667 = vmatprep.subr.bf16.mxu0 0
      %668 = vmatpush2.bf16.msra.mxu0 0
      %669 = vmatprep.subr.bf16.mxu0 0
      %670 = vmatpush2.bf16.msra.mxu0 0
      %671 = vmatprep.subr.bf16.mxu0 0
      %672 = vmatpush2.bf16.msra.mxu0 0
      %673 = vmatprep.subr.bf16.mxu0 0
      %674 = vmatpush2.bf16.msra.mxu0 0
      %675 = vmatprep.subr.bf16.mxu0 0
      %676 = vmatpush2.bf16.msra.mxu0 0
      %677 = vmatprep.mubr.bf16.mxu0 0
      %678 = vmatmul.mubr.bf16.gmra.mxu0 %v559
      %v679 = vpop.f32.mrf.mxu0
      %v680 = vadd.f32 0.0, %v679
      %v681 = vpop.f32.mrf.mxu0
      %v682 = vpop.f32.mrf.mxu0
      %v683 = vadd.f32 0.0, %v682
      %v684 = vpop.f32.mrf.mxu0
      %685 = vdwg.mxu0
      %v686 = vadd.f32 %v610, %v680
      %v687 = vadd.f32 %v611, %v683
      %s688 = scalar_lea.vmem %s4, 64
      %v689 = vld [vmem:[%s688] sm:$0xf]
      %v690 = vld [vmem:[%s688 + $0x4] sm:$0xf]
      %v691 = vld [vmem:[%s688 + $0x8] sm:$0xf]
      %v692 = vld [vmem:[%s688 + $0xc] sm:$0xf]
      %v693 = vld [vmem:[%s688 + $0x10] sm:$0xf]
      %v694 = vld [vmem:[%s688 + $0x14] sm:$0xf]
      %v695 = vld [vmem:[%s688 + $0x18] sm:$0xf]
      %v696 = vld [vmem:[%s688 + $0x1c] sm:$0xf]
      %v705 = vunpack.c.l.b16 %v689
      %v706 = vunpack.c.l.b16 %v690
      %v707 = vunpack.c.l.b16 %v691
      %v708 = vunpack.c.l.b16 %v692
      %v709 = vunpack.c.l.b16 %v693
      %v710 = vunpack.c.l.b16 %v694
      %v711 = vunpack.c.l.b16 %v695
      %v712 = vunpack.c.l.b16 %v696
      %v713 = vpack.c.b16 %v706, %v705
      %v714 = vpack.c.b16 %v708, %v707
      %v715 = vpack.c.b16 %v710, %v709
      %v716 = vpack.c.b16 %v712, %v711
      %721 = vmatprep.subr.bf16.mxu0 0
      %722 = vmatpush1.bf16.msra.mxu0 0
      %723 = vmatprep.subr.bf16.mxu0 0
      %724 = vmatpush1.bf16.msra.mxu0 0
      %725 = vmatprep.subr.bf16.mxu0 0
      %726 = vmatpush1.bf16.msra.mxu0 0
      %727 = vmatprep.subr.bf16.mxu0 0
      %728 = vmatpush1.bf16.msra.mxu0 0
      %729 = vmatprep.subr.bf16.mxu0 0
      %730 = vmatpush1.bf16.msra.mxu0 %v716
      %731 = vmatprep.subr.bf16.mxu0 0
      %732 = vmatpush1.bf16.msra.mxu0 %v715
      %733 = vmatprep.subr.bf16.mxu0 0
      %734 = vmatpush1.bf16.msra.mxu0 %v714
      %735 = vmatprep.subr.bf16.mxu0 0
      %736 = vmatpush1.bf16.msra.mxu0 %v713
      %737 = vmatprep.subr.bf16.mxu0 0
      %738 = vmatpush2.bf16.msra.mxu0 0
      %739 = vmatprep.subr.bf16.mxu0 0
      %740 = vmatpush2.bf16.msra.mxu0 0
      %741 = vmatprep.subr.bf16.mxu0 0
      %742 = vmatpush2.bf16.msra.mxu0 0
      %743 = vmatprep.subr.bf16.mxu0 0
      %744 = vmatpush2.bf16.msra.mxu0 0
      %745 = vmatprep.subr.bf16.mxu0 0
      %746 = vmatpush2.bf16.msra.mxu0 0
      %747 = vmatprep.subr.bf16.mxu0 0
      %748 = vmatpush2.bf16.msra.mxu0 0
      %749 = vmatprep.subr.bf16.mxu0 0
      %750 = vmatpush2.bf16.msra.mxu0 0
      %751 = vmatprep.subr.bf16.mxu0 0
      %752 = vmatpush2.bf16.msra.mxu0 0
      %753 = vmatprep.mubr.bf16.mxu0 0
      %754 = vmatmul.mubr.bf16.gmra.mxu0 %v559
      %v755 = vpop.f32.mrf.mxu0
      %v756 = vadd.f32 0.0, %v755
      %v757 = vpop.f32.mrf.mxu0
      %v758 = vpop.f32.mrf.mxu0
      %v759 = vadd.f32 0.0, %v758
      %v760 = vpop.f32.mrf.mxu0
      %761 = vdwg.mxu0
      %v764 = vrot.slane %v756, 1
      %v765 = vrot.slane %v759, 1
      %v766 = vsel %vm502, %v764, %v765
      %v769 = vsel %vm502, %v765, 0.0
      %v770 = vadd.f32 %v686, %v766
      %v771 = vadd.f32 %v687, %v769
      %v773 = vlaneseq
      %v774 = vshrl.u32 %v773, 7
      %v775 = vsub.s32 0, %v774
      %v776 = vrot.slane %v524, %v775
      %v778 = vadd.f32 %v770, %v776
      %v779 = vadd.f32 %v771, %v776
      %v780 = vunpack.c.l.bf16 %v294
      %v781 = vunpack.c.l.bf16 %v295
      %v782 = vadd.f32 %v780, %v778
      %v783 = vadd.f32 %v781, %v779
      %v784 = vld [vmem:[%s6] sm:$0x1]
      %v785 = vld [vmem:[%s7] sm:$0x1]
      %v786 = vsel %vm326, %v782, 0.0
      %787 = vadd.xlane.f32.xlu0 %v786
      %v788 = vpop.xlane.xlu0 %787
      %v789 = vsel %vm326, %v783, 0.0
      %790 = vadd.xlane.f32.xlu0 %v789
      %v791 = vpop.xlane.xlu0 %790
      %v792 = vrcp.pop 32.0
      %v793 = vmul.f32 %v788, %v792
      %v794 = vmul.f32 %v791, %v792
      %v795 = vsub.f32 %v782, %v793
      %v796 = vsub.f32 %v783, %v794
      %v797 = vmul.f32 %v795, %v795
      %v798 = vmul.f32 %v796, %v796
      %v799 = vsel %vm326, %v797, 0.0
      %800 = vadd.xlane.f32.xlu0 %v799
      %v801 = vpop.xlane.xlu0 %800
      %v802 = vsel %vm326, %v798, 0.0
      %803 = vadd.xlane.f32.xlu0 %v802
      %v804 = vpop.xlane.xlu0 %803
      %v805 = vmul.f32 %v801, %v792
      %v806 = vmul.f32 %v804, %v792
      %v807 = vadd.f32 %v805, 1e-05
      %v808 = vadd.f32 %v806, 1e-05
      %v809 = vrsqrt.pop %v807
      %v810 = vrsqrt.pop %v808
      %v811 = vmul.f32 %v795, %v809
      %v812 = vmul.f32 %v796, %v810
      %v814 = vlaneseq
      %v815 = vshrl.u32 %v814, 7
      %v816 = vsub.s32 0, %v815
      %v817 = vrot.slane %v784, %v816
      %v819 = vmul.f32 %v811, %v817
      %v820 = vmul.f32 %v812, %v817
      %v822 = vlaneseq
      %v823 = vshrl.u32 %v822, 7
      %v824 = vsub.s32 0, %v823
      %v825 = vrot.slane %v785, %v824
      %v827 = vadd.f32 %v819, %v825
      %v828 = vadd.f32 %v820, %v825
      %v829 = vsel %vm298, %v827, 0.0
      %v830 = vsel %vm299, %v828, 0.0
      %v831 = vpack.c.bf16 %v830, %v829
      %v833 = vunpack.c.l.b16 %v831
      %v834 = vunpack.c.h.b16 %v831
      %v835 = vpack.c.b16 %v833, %v833
      %v836 = vpack.c.b16 %v834, %v834
      %vm839 = vcmask 257024
      %840 = vst.msk [vmem:[%s285] sm:$0xf] %vm839, %v835
      %841 = vst.msk [vmem:[%s285 + $0x4] sm:$0xf] %vm839, %v836
      %p842 = scmp.lt.s32.totalorder %s25, 1
      %s843 = scalar_select %p842, %s25, 1
      %s844 = smul.addr %s843, 2
      %s845 = smul.addr %s844, 4
      %s846 = scalar_lea.vmem %s8, %s845
      // Predicated region
      $region49: #{text_encoder_forward.8} parent=47 // pred_check
        %p847 = pneg %p195
      $region50: #{text_encoder_forward.8} parent=47 // pred_check_branch
        %849 = sbr.rel (%p847) target = $region52
      $region51: #{text_encoder_forward.8} parent=47 // pred_region
        _
      $region52: #{text_encoder_forward.8} parent=47 // pred_fallthru
        _
    $region48: #{text_encoder_forward.8} parent=5 // pred_fallthru
      _
    %p850 = scmp.le.s32.totalorder 2, %s20
    // Predicated region
    $region53: #{text_encoder_forward.8} parent=5 // pred_check
      %p851 = pneg %p850
    $region54: #{text_encoder_forward.8} parent=5 // pred_check_branch
      %853 = sbr.rel (%p851) target = $region56
    $region55: #{text_encoder_forward.8} parent=5 // pred_region
      %s854 = ssub.s32 %s20, 2
      // Predicated region
      $region57: #{text_encoder_forward.8} parent=55 // pred_check
        %p855 = pneg %p201
      $region58: #{text_encoder_forward.8} parent=55 // pred_check_branch
        %857 = sbr.rel (%p855) target = $region60
      $region59: #{text_encoder_forward.8} parent=55 // pred_region
        %p858 = scmp.lt.s32.totalorder %s26, 1
        %s859 = scalar_select %p858, %s26, 1
        %s860 = smul.addr %s859, 2
        %s861 = smul.addr %s860, 4
        %s862 = scalar_lea.vmem %s8, %s861
      $region60: #{text_encoder_forward.8} parent=55 // pred_fallthru
        _
    $region56: #{text_encoder_forward.8} parent=5 // pred_fallthru
      _
  $region6: #{text_encoder_forward.8} parent=0 // loop_footer
    %s24 = sadd.s32 1, %s20
  $region7: #{text_encoder_forward.8} parent=0 // loop_footer_branch
    %19 = sbr.rel target = $region3
  $region8: #{text_encoder_forward.8} parent=0 // loop_exit
    _

// kernel: text_encoder_forward.5
$region0: #{text_encoder_forward.5}
  #allocation0 [shape = 'u32[]', space=smem, size = 0x4, offset = 0x4, fixed_abs, tag = 'smem constant byte address 0x4 - core index']
  #allocation1 [shape = 'u32[144,128]{1,0:T(1,128)}', space=vmem, size = 0x12000, scoped, tag = 'internal scratch']
  #allocation2 [shape = 'f32[16,32]{1,0:T(8,128)}', space=vmem, size = 0x2000, scoped, tag = 'scratch operand']
  #allocation3 [shape = 's32[1]{0}', space=sflag, size = 0x4, scoped, tag = 'scoped memory for text_encoder_forward.5']
  #allocation4 [shape = 'u8[512]{0}', space=smem, size = 0x200, scoped, tag = 'prefetched SMEM operand 0']
  %s0 = inlined_call_operand.vmem [shape: s32[2], index: 0, kind: input, shape index: {}]
  %s1 = inlined_call_operand.vmem [shape: bf16[2,16,32], index: 1, kind: input, shape index: {}]
  %s2 = inlined_call_operand.vmem [shape: bf16[32,96], index: 2, kind: input, shape index: {}]
  %s3 = inlined_call_operand.vmem [shape: f32[1,96], index: 3, kind: input, shape index: {}]
  %s4 = inlined_call_operand.vmem [shape: bf16[9,16], index: 4, kind: input, shape index: {}]
  %s5 = inlined_call_operand.vmem [shape: bf16[9,16], index: 5, kind: input, shape index: {}]
  %s6 = inlined_call_operand.vmem [shape: bf16[32,32], index: 6, kind: input, shape index: {}]
  %s7 = inlined_call_operand.vmem [shape: f32[1,32], index: 7, kind: input, shape index: {}]
  %s8 = inlined_call_operand.vmem [shape: f32[1,32], index: 8, kind: input, shape index: {}]
  %s9 = inlined_call_operand.vmem [shape: f32[1,32], index: 9, kind: input, shape index: {}]
  %s10 = inlined_call_operand.vmem [shape: bf16[2,16,32], index: 10, kind: output, shape index: {}]
  %s11 = sld [smem:[#allocation0]]
  $region69: #{text_encoder_forward.5} parent=0
    _
  %s13 = ssub.s32 1, %s11
  %s14 = scalar_select 0, %s13, %s11
  %s15 = sshll.u32 %s0, 4
  %s16 = int_to_ptr.vmem [resolvable:$true] %s15
  %18 = dma.vmem_to_smem %s16, 16, [#allocation4], [#allocation3]
  %19 = dma.done [#allocation3], 16
  %20 = sfence
  loop: start=0, step=1, limit=4
  $region2: #{text_encoder_forward.5} parent=0 // loop_pre_header
    _
  $region3: #{text_encoder_forward.5} parent=0 // loop_header
    %s22 = sphi 0, %s26
    %p23 = scmp.ge.s32.totalorder %s22, 4
    %s32 = sphi 0, %s34
    %s35 = sphi 0, %s32
    %s36 = sphi 0, %s35
    %s52 = sphi 0, %s36
    %s56 = sphi 0, %s56
    %s58 = sphi 0, %s56
    %s59 = sphi 0, %s58
    %s73 = sphi 0, %s59
    %s77 = sphi 0, %s77
    %s79 = sphi 0, %s77
    %s80 = sphi 0, %s79
    %s94 = sphi 0, %s80
    %s98 = sphi 0, %s98
    %s100 = sphi 0, %s98
    %s101 = sphi 0, %s100
    %s115 = sphi 0, %s101
    %s119 = sphi 0, %s119
    %s121 = sphi 0, %s119
    %s122 = sphi 0, %s121
    %s136 = sphi 0, %s122
    %s140 = sphi 0, %s140
    %s142 = sphi 0, %s140
    %s143 = sphi 0, %s142
    %s157 = sphi 0, %s143
    %s161 = sphi 0, %s161
    %s163 = sphi 0, %s161
    %s164 = sphi 0, %s163
    %s178 = sphi 0, %s164
    %s182 = sphi 0, %s182
    %s184 = sphi 0, %s182
    %s185 = sphi 0, %s184
    %s199 = sphi 0, %s185
    %s203 = sphi 0, %s203
    %s205 = sphi 0, %s203
    %s206 = sphi 0, %s205
    %s220 = sphi 0, %s206
    %s226 = sphi 0, %s228
    %s229 = sphi 0, %s226
    %s230 = sphi 0, %s229
    %s246 = sphi 0, %s230
  $region4: #{text_encoder_forward.5} parent=0 // loop_header_branch
    %25 = sbr.rel (%p23) target = $region8
  $region5: #{text_encoder_forward.5} parent=0 // loop_body
    %s27 = ssub.s32 %s22, 1
    %s28 = ssub.s32 %s22, 2
    %s29 = sadd.s32 %s22, 1
    %s30 = ssub.s32 %s22, %s29
    %p31 = scmp.eq.s32.totalorder %s30, 0
    %s33 = sadd.s32 %s32, 1
    %s34 = scalar_select %p31, %s32, %s33
    %p37 = pneg %p31
    %p38 = scmp.eq.s32.totalorder %s22, 1
    %p39 = por %p37, %p38
    %p40 = scmp.ne.s32.totalorder %s32, %s35
    %p41 = scmp.eq.s32.totalorder %s22, 0
    %p42 = por %p40, %p41
    %p43 = scmp.ne.s32.totalorder %s32, %s35
    %p44 = scmp.eq.s32.totalorder %s27, 1
    %p45 = por %p43, %p44
    %p46 = scmp.ne.s32.totalorder %s35, %s36
    %p47 = scmp.eq.s32.totalorder %s27, 0
    %p48 = por %p46, %p47
    %p49 = scmp.ne.s32.totalorder %s35, %s36
    %p50 = scmp.eq.s32.totalorder %s28, 1
    %p51 = por %p49, %p50
    %p53 = scmp.ne.s32.totalorder %s36, %s52
    %p54 = scmp.eq.s32.totalorder %s28, 0
    %p55 = por %p53, %p54
    %s57 = sadd.s32 %s56, 1
    %p60 = scmp.eq.s32.totalorder %s22, 1
    %p61 = scmp.ne.s32.totalorder %s56, %s58
    %p62 = scmp.eq.s32.totalorder %s22, 0
    %p63 = por %p61, %p62
    %p64 = scmp.ne.s32.totalorder %s56, %s58
    %p65 = scmp.eq.s32.totalorder %s27, 1
    %p66 = por %p64, %p65
    %p67 = scmp.ne.s32.totalorder %s58, %s59
    %p68 = scmp.eq.s32.totalorder %s27, 0
    %p69 = por %p67, %p68
    %p70 = scmp.ne.s32.totalorder %s58, %s59
    %p71 = scmp.eq.s32.totalorder %s28, 1
    %p72 = por %p70, %p71
    %p74 = scmp.ne.s32.totalorder %s59, %s73
    %p75 = scmp.eq.s32.totalorder %s28, 0
    %p76 = por %p74, %p75
    %s78 = sadd.s32 %s77, 1
    %p81 = scmp.eq.s32.totalorder %s22, 1
    %p82 = scmp.ne.s32.totalorder %s77, %s79
    %p83 = scmp.eq.s32.totalorder %s22, 0
    %p84 = por %p82, %p83
    %p85 = scmp.ne.s32.totalorder %s77, %s79
    %p86 = scmp.eq.s32.totalorder %s27, 1
    %p87 = por %p85, %p86
    %p88 = scmp.ne.s32.totalorder %s79, %s80
    %p89 = scmp.eq.s32.totalorder %s27, 0
    %p90 = por %p88, %p89
    %p91 = scmp.ne.s32.totalorder %s79, %s80
    %p92 = scmp.eq.s32.totalorder %s28, 1
    %p93 = por %p91, %p92
    %p95 = scmp.ne.s32.totalorder %s80, %s94
    %p96 = scmp.eq.s32.totalorder %s28, 0
    %p97 = por %p95, %p96
    %s99 = sadd.s32 %s98, 1
    %p102 = scmp.eq.s32.totalorder %s22, 1
    %p103 = scmp.ne.s32.totalorder %s98, %s100
    %p104 = scmp.eq.s32.totalorder %s22, 0
    %p105 = por %p103, %p104
    %p106 = scmp.ne.s32.totalorder %s98, %s100
    %p107 = scmp.eq.s32.totalorder %s27, 1
    %p108 = por %p106, %p107
    %p109 = scmp.ne.s32.totalorder %s100, %s101
    %p110 = scmp.eq.s32.totalorder %s27, 0
    %p111 = por %p109, %p110
    %p112 = scmp.ne.s32.totalorder %s100, %s101
    %p113 = scmp.eq.s32.totalorder %s28, 1
    %p114 = por %p112, %p113
    %p116 = scmp.ne.s32.totalorder %s101, %s115
    %p117 = scmp.eq.s32.totalorder %s28, 0
    %p118 = por %p116, %p117
    %s120 = sadd.s32 %s119, 1
    %p123 = scmp.eq.s32.totalorder %s22, 1
    %p124 = scmp.ne.s32.totalorder %s119, %s121
    %p125 = scmp.eq.s32.totalorder %s22, 0
    %p126 = por %p124, %p125
    %p127 = scmp.ne.s32.totalorder %s119, %s121
    %p128 = scmp.eq.s32.totalorder %s27, 1
    %p129 = por %p127, %p128
    %p130 = scmp.ne.s32.totalorder %s121, %s122
    %p131 = scmp.eq.s32.totalorder %s27, 0
    %p132 = por %p130, %p131
    %p133 = scmp.ne.s32.totalorder %s121, %s122
    %p134 = scmp.eq.s32.totalorder %s28, 1
    %p135 = por %p133, %p134
    %p137 = scmp.ne.s32.totalorder %s122, %s136
    %p138 = scmp.eq.s32.totalorder %s28, 0
    %p139 = por %p137, %p138
    %s141 = sadd.s32 %s140, 1
    %p144 = scmp.eq.s32.totalorder %s22, 1
    %p145 = scmp.ne.s32.totalorder %s140, %s142
    %p146 = scmp.eq.s32.totalorder %s22, 0
    %p147 = por %p145, %p146
    %p148 = scmp.ne.s32.totalorder %s140, %s142
    %p149 = scmp.eq.s32.totalorder %s27, 1
    %p150 = por %p148, %p149
    %p151 = scmp.ne.s32.totalorder %s142, %s143
    %p152 = scmp.eq.s32.totalorder %s27, 0
    %p153 = por %p151, %p152
    %p154 = scmp.ne.s32.totalorder %s142, %s143
    %p155 = scmp.eq.s32.totalorder %s28, 1
    %p156 = por %p154, %p155
    %p158 = scmp.ne.s32.totalorder %s143, %s157
    %p159 = scmp.eq.s32.totalorder %s28, 0
    %p160 = por %p158, %p159
    %s162 = sadd.s32 %s161, 1
    %p165 = scmp.eq.s32.totalorder %s22, 1
    %p166 = scmp.ne.s32.totalorder %s161, %s163
    %p167 = scmp.eq.s32.totalorder %s22, 0
    %p168 = por %p166, %p167
    %p169 = scmp.ne.s32.totalorder %s161, %s163
    %p170 = scmp.eq.s32.totalorder %s27, 1
    %p171 = por %p169, %p170
    %p172 = scmp.ne.s32.totalorder %s163, %s164
    %p173 = scmp.eq.s32.totalorder %s27, 0
    %p174 = por %p172, %p173
    %p175 = scmp.ne.s32.totalorder %s163, %s164
    %p176 = scmp.eq.s32.totalorder %s28, 1
    %p177 = por %p175, %p176
    %p179 = scmp.ne.s32.totalorder %s164, %s178
    %p180 = scmp.eq.s32.totalorder %s28, 0
    %p181 = por %p179, %p180
    %s183 = sadd.s32 %s182, 1
    %p186 = scmp.eq.s32.totalorder %s22, 1
    %p187 = scmp.ne.s32.totalorder %s182, %s184
    %p188 = scmp.eq.s32.totalorder %s22, 0
    %p189 = por %p187, %p188
    %p190 = scmp.ne.s32.totalorder %s182, %s184
    %p191 = scmp.eq.s32.totalorder %s27, 1
    %p192 = por %p190, %p191
    %p193 = scmp.ne.s32.totalorder %s184, %s185
    %p194 = scmp.eq.s32.totalorder %s27, 0
    %p195 = por %p193, %p194
    %p196 = scmp.ne.s32.totalorder %s184, %s185
    %p197 = scmp.eq.s32.totalorder %s28, 1
    %p198 = por %p196, %p197
    %p200 = scmp.ne.s32.totalorder %s185, %s199
    %p201 = scmp.eq.s32.totalorder %s28, 0
    %p202 = por %p200, %p201
    %s204 = sadd.s32 %s203, 1
    %p207 = scmp.eq.s32.totalorder %s22, 1
    %p208 = scmp.ne.s32.totalorder %s203, %s205
    %p209 = scmp.eq.s32.totalorder %s22, 0
    %p210 = por %p208, %p209
    %p211 = scmp.ne.s32.totalorder %s203, %s205
    %p212 = scmp.eq.s32.totalorder %s27, 1
    %p213 = por %p211, %p212
    %p214 = scmp.ne.s32.totalorder %s205, %s206
    %p215 = scmp.eq.s32.totalorder %s27, 0
    %p216 = por %p214, %p215
    %p217 = scmp.ne.s32.totalorder %s205, %s206
    %p218 = scmp.eq.s32.totalorder %s28, 1
    %p219 = por %p217, %p218
    %p221 = scmp.ne.s32.totalorder %s206, %s220
    %p222 = scmp.eq.s32.totalorder %s28, 0
    %p223 = por %p221, %p222
    %s224 = ssub.s32 %s22, %s29
    %p225 = scmp.eq.s32.totalorder %s224, 0
    %s227 = sadd.s32 %s226, 1
    %s228 = scalar_select %p225, %s226, %s227
    %p231 = pneg %p225
    %p232 = scmp.eq.s32.totalorder %s22, 1
    %p233 = por %p231, %p232
    %p234 = scmp.ne.s32.totalorder %s226, %s229
    %p235 = scmp.eq.s32.totalorder %s22, 0
    %p236 = por %p234, %p235
    %p237 = scmp.ne.s32.totalorder %s226, %s229
    %p238 = scmp.eq.s32.totalorder %s27, 1
    %p239 = por %p237, %p238
    %p240 = scmp.ne.s32.totalorder %s229, %s230
    %p241 = scmp.eq.s32.totalorder %s27, 0
    %p242 = por %p240, %p241
    %p243 = scmp.ne.s32.totalorder %s229, %s230
    %p244 = scmp.eq.s32.totalorder %s28, 1
    %p245 = por %p243, %p244
    %p247 = scmp.ne.s32.totalorder %s230, %s246
    %p248 = scmp.eq.s32.totalorder %s28, 0
    %p249 = por %p247, %p248
    %p250 = scmp.le.s32.totalorder 1, %s22
    %p251 = scmp.lt.s32.totalorder %s22, 3
    %p252 = pnand %p250, %p251
    %p253 = pneg %p252
    // Predicated region
    $region9: #{text_encoder_forward.5} parent=5 // pred_check
      _
    $region10: #{text_encoder_forward.5} parent=5 // pred_check_branch
      %255 = sbr.rel (%p252) target = $region12
    $region11: #{text_encoder_forward.5} parent=5 // pred_region
      %s256 = ssub.s32 %s22, 1
      // Predicated region
      $region13: #{text_encoder_forward.5} parent=11 // pred_check
        %p257 = pneg %p69
      $region14: #{text_encoder_forward.5} parent=11 // pred_check_branch
        %259 = sbr.rel (%p257) target = $region16
      $region15: #{text_encoder_forward.5} parent=11 // pred_region
        _
      $region16: #{text_encoder_forward.5} parent=11 // pred_fallthru
        _
      // Predicated region
      $region17: #{text_encoder_forward.5} parent=11 // pred_check
        %p260 = pneg %p90
      $region18: #{text_encoder_forward.5} parent=11 // pred_check_branch
        %262 = sbr.rel (%p260) target = $region20
      $region19: #{text_encoder_forward.5} parent=11 // pred_region
        _
      $region20: #{text_encoder_forward.5} parent=11 // pred_fallthru
        _
      // Predicated region
      $region21: #{text_encoder_forward.5} parent=11 // pred_check
        %p263 = pneg %p111
      $region22: #{text_encoder_forward.5} parent=11 // pred_check_branch
        %265 = sbr.rel (%p263) target = $region24
      $region23: #{text_encoder_forward.5} parent=11 // pred_region
        _
      $region24: #{text_encoder_forward.5} parent=11 // pred_fallthru
        _
      // Predicated region
      $region25: #{text_encoder_forward.5} parent=11 // pred_check
        %p266 = pneg %p132
      $region26: #{text_encoder_forward.5} parent=11 // pred_check_branch
        %268 = sbr.rel (%p266) target = $region28
      $region27: #{text_encoder_forward.5} parent=11 // pred_region
        _
      $region28: #{text_encoder_forward.5} parent=11 // pred_fallthru
        _
      // Predicated region
      $region29: #{text_encoder_forward.5} parent=11 // pred_check
        %p269 = pneg %p153
      $region30: #{text_encoder_forward.5} parent=11 // pred_check_branch
        %271 = sbr.rel (%p269) target = $region32
      $region31: #{text_encoder_forward.5} parent=11 // pred_region
        _
      $region32: #{text_encoder_forward.5} parent=11 // pred_fallthru
        _
      // Predicated region
      $region33: #{text_encoder_forward.5} parent=11 // pred_check
        %p272 = pneg %p174
      $region34: #{text_encoder_forward.5} parent=11 // pred_check_branch
        %274 = sbr.rel (%p272) target = $region36
      $region35: #{text_encoder_forward.5} parent=11 // pred_region
        _
      $region36: #{text_encoder_forward.5} parent=11 // pred_fallthru
        _
      // Predicated region
      $region37: #{text_encoder_forward.5} parent=11 // pred_check
        %p275 = pneg %p195
      $region38: #{text_encoder_forward.5} parent=11 // pred_check_branch
        %277 = sbr.rel (%p275) target = $region40
      $region39: #{text_encoder_forward.5} parent=11 // pred_region
        _
      $region40: #{text_encoder_forward.5} parent=11 // pred_fallthru
        _
      // Predicated region
      $region41: #{text_encoder_forward.5} parent=11 // pred_check
        %p278 = pneg %p216
      $region42: #{text_encoder_forward.5} parent=11 // pred_check_branch
        %280 = sbr.rel (%p278) target = $region44
      $region43: #{text_encoder_forward.5} parent=11 // pred_region
        _
      $region44: #{text_encoder_forward.5} parent=11 // pred_fallthru
        _
    $region12: #{text_encoder_forward.5} parent=5 // pred_fallthru
      _
    %p281 = scmp.lt.s32.totalorder %s22, 2
    // Predicated region
    $region45: #{text_encoder_forward.5} parent=5 // pred_check
      %p282 = pneg %p281
    $region46: #{text_encoder_forward.5} parent=5 // pred_check_branch
      %284 = sbr.rel (%p282) target = $region48
    $region47: #{text_encoder_forward.5} parent=5 // pred_region
      // Predicated region
      $region49: #{text_encoder_forward.5} parent=47 // pred_check
        %p285 = pneg %p42
      $region50: #{text_encoder_forward.5} parent=47 // pred_check_branch
        %287 = sbr.rel (%p285) target = $region52
      $region51: #{text_encoder_forward.5} parent=47 // pred_region
        %p288 = scmp.lt.s32.totalorder %s22, 1
        %s289 = scalar_select %p288, %s22, 1
        %s290 = smul.addr %s289, 2
        %s291 = smul.addr %s290, 4
        %s292 = scalar_lea.vmem %s1, %s291
      $region52: #{text_encoder_forward.5} parent=47 // pred_fallthru
        _
    $region48: #{text_encoder_forward.5} parent=5 // pred_fallthru
      _
    %p293 = scmp.le.s32.totalorder 1, %s22
    %p294 = scmp.lt.s32.totalorder %s22, 3
    %p295 = pnand %p293, %p294
    %p296 = pneg %p295
    // Predicated region
    $region53: #{text_encoder_forward.5} parent=5 // pred_check
      _
    $region54: #{text_encoder_forward.5} parent=5 // pred_check_branch
      %298 = sbr.rel (%p295) target = $region56
    $region55: #{text_encoder_forward.5} parent=5 // pred_region
      %s299 = ssub.s32 %s22, 1
      %p300 = scmp.lt.s32.totalorder %s27, 1
      %s301 = scalar_select %p300, %s27, 1
      %s302 = smul.addr %s301, 2
      %s303 = smul.addr %s302, 4
      %s304 = scalar_lea.vmem %s1, %s303
      %p305 = pneg %p48
      %p306 = pneg %p45
      %p307 = pneg %p69
      %p308 = pneg %p66
      %p309 = pneg %p90
      %p310 = pneg %p87
      %p311 = pneg %p111
      %p312 = pneg %p108
      %p313 = pneg %p132
      %p314 = pneg %p129
      %p315 = pneg %p153
      %p316 = pneg %p150
      %p317 = pneg %p174
      %p318 = pneg %p171
      %p319 = pneg %p195
      %p320 = pneg %p192
      %p321 = pneg %p216
      %p322 = pneg %p213
      %p323 = pneg %p242
      %p324 = pneg %p239
      %p325 = scmp.lt.s32.totalorder %s27, 1
      %s326 = scalar_select %p325, %s27, 1
      %s327 = smul.addr %s326, 2
      %s328 = smul.addr %s327, 4
      %s329 = scalar_lea.vmem %s10, %s328
      %p330 = scmp.lt.s32.totalorder %s27, 1
      %s331 = scalar_select %p330, %s27, 1
      %s332 = smul.addr %s331, 2
      %s333 = smul.addr %s332, 4
      %s334 = scalar_lea.vmem %s1, %s333
      %p335 = scmp.lt.s32.totalorder %s27, 1
      %s336 = scalar_select %p335, %s27, 1
      %s337 = smul.addr %s336, 2
      %s338 = smul.addr %s337, 4
      %s339 = scalar_lea.vmem %s10, %s338
      %s341 = sld [smem:[#allocation4 + %s27]]
      %v342 = vld [vmem:[%s334] sm:$0xf]
      %v343 = vld [vmem:[%s334 + $0x4] sm:$0xf]
      %v344 = vld [vmem:[%s2] sm:$0xf]
      %v345 = vld [vmem:[%s2 + $0x4] sm:$0xf]
      %v346 = vld [vmem:[%s2 + $0x8] sm:$0xf]
      %v347 = vld [vmem:[%s2 + $0xc] sm:$0xf]
      %v348 = vld [vmem:[%s3] sm:$0x1]
      %v350 = vlaneseq
      %v351 = vshrl.u32 %v350, 7
      %v352 = vsub.s32 0, %v351
      %v353 = vrot.slane %v348, %v352
      %v357 = vunpack.c.l.b16 %v342
      %v358 = vunpack.c.l.b16 %v343
      %v359 = vpack.c.b16 %v358, %v357
      %v364 = vunpack.c.l.b16 %v344
      %v365 = vunpack.c.l.b16 %v345
      %v366 = vunpack.c.l.b16 %v346
      %v367 = vunpack.c.l.b16 %v347
      %v368 = vpack.c.b16 %v365, %v364
      %v369 = vpack.c.b16 %v367, %v366
      %vm372 = vcmask 261120
      %v374 = vsel %vm372, %v359, 0
      %376 = vmatprep.subr.bf16.mxu0 0
      %377 = vmatpush1.bf16.msra.mxu0 0
      %378 = vmatprep.subr.bf16.mxu0 0
      %379 = vmatpush1.bf16.msra.mxu0 0
      %380 = vmatprep.subr.bf16.mxu0 0
      %381 = vmatpush1.bf16.msra.mxu0 0
      %382 = vmatprep.subr.bf16.mxu0 0
      %383 = vmatpush1.bf16.msra.mxu0 0
      %384 = vmatprep.subr.bf16.mxu0 0
      %385 = vmatpush1.bf16.msra.mxu0 0
      %386 = vmatprep.subr.bf16.mxu0 0
      %387 = vmatpush1.bf16.msra.mxu0 0
      %388 = vmatprep.subr.bf16.mxu0 0
      %389 = vmatpush1.bf16.msra.mxu0 %v369
      %390 = vmatprep.subr.bf16.mxu0 0
      %391 = vmatpush1.bf16.msra.mxu0 %v368
      %392 = vmatprep.subr.bf16.mxu0 0
      %393 = vmatpush2.bf16.msra.mxu0 0
      %394 = vmatprep.subr.bf16.mxu0 0
      %395 = vmatpush2.bf16.msra.mxu0 0
      %396 = vmatprep.subr.bf16.mxu0 0
      %397 = vmatpush2.bf16.msra.mxu0 0
      %398 = vmatprep.subr.bf16.mxu0 0
      %399 = vmatpush2.bf16.msra.mxu0 0
      %400 = vmatprep.subr.bf16.mxu0 0
      %401 = vmatpush2.bf16.msra.mxu0 0
      %402 = vmatprep.subr.bf16.mxu0 0
      %403 = vmatpush2.bf16.msra.mxu0 0
      %404 = vmatprep.subr.bf16.mxu0 0
      %405 = vmatpush2.bf16.msra.mxu0 0
      %406 = vmatprep.subr.bf16.mxu0 0
      %407 = vmatpush2.bf16.msra.mxu0 0
      %408 = vmatprep.mubr.bf16.mxu0 0
      %409 = vmatmul.mubr.bf16.gmra.mxu0 %v374
      %v410 = vpop.f32.mrf.mxu0
      %v411 = vadd.f32 %v353, %v410
      %v412 = vpop.f32.mrf.mxu0
      %v413 = vpop.f32.mrf.mxu0
      %v414 = vadd.f32 %v353, %v413
      %v415 = vpop.f32.mrf.mxu0
      %416 = vdwg.mxu0
      %v417 = vlaneseq
      %v418 = vand.u32 %v417, 127
      %v419 = vlaneseq
      %v420 = vshrl.u32 %v419, 7
      %v421 = vadd.s32 %v420, 8
      %v422 = vsub.s32 %v418, %v420
      %v423 = vsub.s32 %v418, %v421
      %v424 = vstv %s341
      %vm425 = vcmp.lt.s32.totalorder %v418, %v424
      %vm426 = vcmp.eq.s32.totalorder %v422, 4294967292
      %vm427 = vcmp.eq.s32.totalorder %v423, 4294967292
      %vm428 = vcmp.eq.s32.totalorder %v422, 4294967293
      %vm429 = vcmp.eq.s32.totalorder %v423, 4294967293
      %vm430 = vcmp.eq.s32.totalorder %v422, 4294967294
      %vm431 = vcmp.eq.s32.totalorder %v423, 4294967294
      %vm432 = vcmp.eq.s32.totalorder %v422, 4294967295
      %vm433 = vcmp.eq.s32.totalorder %v423, 4294967295
      %vm434 = vcmp.eq.s32.totalorder %v422, 0
      %vm435 = vcmp.eq.s32.totalorder %v423, 0
      %vm436 = vcmp.eq.s32.totalorder %v422, 1
      %vm437 = vcmp.eq.s32.totalorder %v423, 1
      %vm438 = vcmp.eq.s32.totalorder %v422, 2
      %vm439 = vcmp.eq.s32.totalorder %v423, 2
      %vm440 = vcmp.eq.s32.totalorder %v422, 3
      %vm441 = vcmp.eq.s32.totalorder %v423, 3
      %vm442 = vcmp.eq.s32.totalorder %v422, 4
      %vm443 = vcmp.eq.s32.totalorder %v423, 4
      %v444 = vld [vmem:[%s4] sm:$0xf]
      %v445 = vld [vmem:[%s4 + $0x4] sm:$0x1]
      %v446 = vunpack.c.l.bf16 %v444
      %v447 = vunpack.c.l.bf16 %v445
      %v448 = vld [vmem:[%s5] sm:$0xf]
      %v449 = vld [vmem:[%s5 + $0x4] sm:$0x1]
      %v450 = vunpack.c.l.bf16 %v448
      %v451 = vunpack.c.l.bf16 %v449
      %v452 = vmul.f32 %v411, 0.25
      %v453 = vmul.f32 %v414, 0.25
      %vm454 = vcmask 130048
      %v456 = vsel %vm454, %v452, 0
      %v459 = vsel %vm454, %v453, 0
      %v462 = vsel %vm454, %v446, 0
      %v465 = vsel %vm454, %v447, 0
      %467 = vmatprep.subr.mxu0 0.0
      %468 = vmatpush1.xpose.msra.mxu0 0.0
      %469 = vmatprep.subr.mxu0 0.0
      %470 = vmatpush1.xpose.msra.mxu0 0.0
      %471 = vmatprep.subr.mxu0 0.0
      %472 = vmatpush1.xpose.msra.mxu0 0.0
      %473 = vmatprep.subr.mxu0 0.0
      %474 = vmatpush1.xpose.msra.mxu0 0.0
      %475 = vmatprep.subr.mxu0 0.0
      %476 = vmatpush1.xpose.msra.mxu0 0.0
      %477 = vmatprep.subr.mxu0 0.0
      %478 = vmatpush1.xpose.msra.mxu0 0.0
      %479 = vmatprep.subr.mxu0 0.0
      %480 = vmatpush1.xpose.msra.mxu0 0.0
      %481 = vmatprep.subr.mxu0 0.0
      %482 = vmatpush1.xpose.msra.mxu0 0.0
      %483 = vmatprep.subr.mxu0 0.0
      %484 = vmatpush1.xpose.msra.mxu0 0.0
      %485 = vmatprep.subr.mxu0 0.0
      %486 = vmatpush1.xpose.msra.mxu0 0.0
      %487 = vmatprep.subr.mxu0 0.0
      %488 = vmatpush1.xpose.msra.mxu0 0.0
      %489 = vmatprep.subr.mxu0 0.0
      %490 = vmatpush1.xpose.msra.mxu0 0.0
      %491 = vmatprep.subr.mxu0 0.0
      %492 = vmatpush1.xpose.msra.mxu0 0.0
      %493 = vmatprep.subr.mxu0 0.0
      %494 = vmatpush1.xpose.msra.mxu0 0.0
      %495 = vmatprep.subr.mxu0 0.0
      %496 = vmatpush1.xpose.msra.mxu0 %v465
      %497 = vmatprep.subr.mxu0 0.0
      %498 = vmatpush1.xpose.msra.mxu0 %v462
      %499 = vmatprep.subr.mxu0 0.0
      %500 = vmatpush2.xpose.msra.mxu0 0.0
      %501 = vmatprep.subr.mxu0 0.0
      %502 = vmatpush2.xpose.msra.mxu0 0.0
      %503 = vmatprep.subr.mxu0 0.0
      %504 = vmatpush2.xpose.msra.mxu0 0.0
      %505 = vmatprep.subr.mxu0 0.0
      %506 = vmatpush2.xpose.msra.mxu0 0.0
      %507 = vmatprep.subr.mxu0 0.0
      %508 = vmatpush2.xpose.msra.mxu0 0.0
      %509 = vmatprep.subr.mxu0 0.0
      %510 = vmatpush2.xpose.msra.mxu0 0.0
      %511 = vmatprep.subr.mxu0 0.0
      %512 = vmatpush2.xpose.msra.mxu0 0.0
      %513 = vmatprep.subr.mxu0 0.0
      %514 = vmatpush2.xpose.msra.mxu0 0.0
      %515 = vmatprep.subr.mxu0 0.0
      %516 = vmatpush2.xpose.msra.mxu0 0.0
      %517 = vmatprep.subr.mxu0 0.0
      %518 = vmatpush2.xpose.msra.mxu0 0.0
      %519 = vmatprep.subr.mxu0 0.0
      %520 = vmatpush2.xpose.msra.mxu0 0.0
      %521 = vmatprep.subr.mxu0 0.0
      %522 = vmatpush2.xpose.msra.mxu0 0.0
      %523 = vmatprep.subr.mxu0 0.0
      %524 = vmatpush2.xpose.msra.mxu0 0.0
      %525 = vmatprep.subr.mxu0 0.0
      %526 = vmatpush2.xpose.msra.mxu0 0.0
      %527 = vmatprep.subr.mxu0 0.0
      %528 = vmatpush2.xpose.msra.mxu0 0.0
      %529 = vmatprep.subr.mxu0 0.0
      %530 = vmatpush2.xpose.msra.mxu0 0.0
      %531 = vmatprep.mubr.f32.mxu0 0.0
      %532 = vmatmul.mubr.f32.gmra.mxu0 %v456
      %v533 = vpop.f32.mrf.mxu0
      %v534 = vadd.f32 0.0, %v533
      %v535 = vpop.f32.mrf.mxu0
      %536 = vmatprep.mubr.f32.mxu0 0.0
      %537 = vmatmul.mubr.f32.gmra.mxu0 %v459
      %v538 = vpop.f32.mrf.mxu0
      %v539 = vadd.f32 0.0, %v538
      %v540 = vpop.f32.mrf.mxu0
      %541 = vdwg.mxu0
      %543 = vset.pattern.permute.xlu0 0
      %544 = vperm.xlu0 %543, %v534
      %v545 = vpop.permute.xlu0 %544
      %548 = vset.pattern.permute.xlu0 0
      %549 = vperm.xlu0 %548, %v539
      %v550 = vpop.permute.xlu0 %549
      %v552 = vsel %vm426, %v545, 0.0
      %v553 = vsel %vm427, %v550, 0.0
      %556 = vrot.lane.b32.xlu0 %v411, 96
      %v557 = vpop.permute.xlu0 %556
      %558 = vrot.lane.b32.xlu0 %v414, 96
      %v559 = vpop.permute.xlu0 %558
      %v560 = vsel %vm454, %v557, 0
      %v562 = vsel %vm454, %v559, 0
      %564 = vmatprep.subr.mxu0 0.0
      %565 = vmatpush1.xpose.msra.mxu0 0.0
      %566 = vmatprep.subr.mxu0 0.0
      %567 = vmatpush1.xpose.msra.mxu0 0.0
      %568 = vmatprep.subr.mxu0 0.0
      %569 = vmatpush1.xpose.msra.mxu0 0.0
      %570 = vmatprep.subr.mxu0 0.0
      %571 = vmatpush1.xpose.msra.mxu0 0.0
      %572 = vmatprep.subr.mxu0 0.0
      %573 = vmatpush1.xpose.msra.mxu0 0.0
      %574 = vmatprep.subr.mxu0 0.0
      %575 = vmatpush1.xpose.msra.mxu0 0.0
      %576 = vmatprep.subr.mxu0 0.0
      %577 = vmatpush1.xpose.msra.mxu0 0.0
      %578 = vmatprep.subr.mxu0 0.0
      %579 = vmatpush1.xpose.msra.mxu0 0.0
      %580 = vmatprep.subr.mxu0 0.0
      %581 = vmatpush1.xpose.msra.mxu0 0.0
      %582 = vmatprep.subr.mxu0 0.0
      %583 = vmatpush1.xpose.msra.mxu0 0.0
      %584 = vmatprep.subr.mxu0 0.0
      %585 = vmatpush1.xpose.msra.mxu0 0.0
      %586 = vmatprep.subr.mxu0 0.0
      %587 = vmatpush1.xpose.msra.mxu0 0.0
      %588 = vmatprep.subr.mxu0 0.0
      %589 = vmatpush1.xpose.msra.mxu0 0.0
      %590 = vmatprep.subr.mxu0 0.0
      %591 = vmatpush1.xpose.msra.mxu0 0.0
      %592 = vmatprep.subr.mxu0 0.0
      %593 = vmatpush1.xpose.msra.mxu0 %v562
      %594 = vmatprep.subr.mxu0 0.0
      %595 = vmatpush1.xpose.msra.mxu0 %v560
      %596 = vmatprep.subr.mxu0 0.0
      %597 = vmatpush2.xpose.msra.mxu0 0.0
      %598 = vmatprep.subr.mxu0 0.0
      %599 = vmatpush2.xpose.msra.mxu0 0.0
      %600 = vmatprep.subr.mxu0 0.0
      %601 = vmatpush2.xpose.msra.mxu0 0.0
      %602 = vmatprep.subr.mxu0 0.0
      %603 = vmatpush2.xpose.msra.mxu0 0.0
      %604 = vmatprep.subr.mxu0 0.0
      %605 = vmatpush2.xpose.msra.mxu0 0.0
      %606 = vmatprep.subr.mxu0 0.0
      %607 = vmatpush2.xpose.msra.mxu0 0.0
      %608 = vmatprep.subr.mxu0 0.0
      %609 = vmatpush2.xpose.msra.mxu0 0.0
      %610 = vmatprep.subr.mxu0 0.0
      %611 = vmatpush2.xpose.msra.mxu0 0.0
      %612 = vmatprep.subr.mxu0 0.0
      %613 = vmatpush2.xpose.msra.mxu0 0.0
      %614 = vmatprep.subr.mxu0 0.0
      %615 = vmatpush2.xpose.msra.mxu0 0.0
      %616 = vmatprep.subr.mxu0 0.0
      %617 = vmatpush2.xpose.msra.mxu0 0.0
      %618 = vmatprep.subr.mxu0 0.0
      %619 = vmatpush2.xpose.msra.mxu0 0.0
      %620 = vmatprep.subr.mxu0 0.0
      %621 = vmatpush2.xpose.msra.mxu0 0.0
      %622 = vmatprep.subr.mxu0 0.0
      %623 = vmatpush2.xpose.msra.mxu0 0.0
      %624 = vmatprep.subr.mxu0 0.0
      %625 = vmatpush2.xpose.msra.mxu0 0.0
      %626 = vmatprep.subr.mxu0 0.0
      %627 = vmatpush2.xpose.msra.mxu0 0.0
      %628 = vmatprep.mubr.f32.mxu0 0.0
      %629 = vmatmul.mubr.f32.gmra.mxu0 %v456
      %v630 = vpop.f32.mrf.mxu0
      %v631 = vadd.f32 %v552, %v630
      %v632 = vpop.f32.mrf.mxu0
      %633 = vmatprep.mubr.f32.mxu0 0.0
      %634 = vmatmul.mubr.f32.gmra.mxu0 %v459
      %v635 = vpop.f32.mrf.mxu0
      %v636 = vadd.f32 %v553, %v635
      %v637 = vpop.f32.mrf.mxu0
      %638 = vdwg.mxu0
      %639 = vset.pattern.permute.xlu0 1
      %640 = vperm.xlu0 %639, %v534
      %v641 = vpop.permute.xlu0 %640
      %643 = vset.pattern.permute.xlu0 1
      %644 = vperm.xlu0 %643, %v539
      %v645 = vpop.permute.xlu0 %644
      %v647 = vsel %vm428, %v641, 0.0
      %v648 = vsel %vm429, %v645, 0.0
      %v649 = vadd.f32 %v631, %v647
      %v650 = vadd.f32 %v636, %v648
      %651 = vset.pattern.permute.xlu0 2
      %652 = vperm.xlu0 %651, %v534
      %v653 = vpop.permute.xlu0 %652
      %655 = vset.pattern.permute.xlu0 2
      %656 = vperm.xlu0 %655, %v539
      %v657 = vpop.permute.xlu0 %656
      %v659 = vsel %vm430, %v653, 0.0
      %v660 = vsel %vm431, %v657, 0.0
      %v661 = vadd.f32 %v649, %v659
      %v662 = vadd.f32 %v650, %v660
      %663 = vset.pattern.permute.xlu0 3
      %664 = vperm.xlu0 %663, %v534
      %v665 = vpop.permute.xlu0 %664
      %667 = vset.pattern.permute.xlu0 3
      %668 = vperm.xlu0 %667, %v539
      %v669 = vpop.permute.xlu0 %668
      %v671 = vsel %vm432, %v665, 0.0
      %v672 = vsel %vm433, %v669, 0.0
      %v673 = vadd.f32 %v661, %v671
      %v674 = vadd.f32 %v662, %v672
      %675 = vset.pattern.permute.xlu0 4
      %676 = vperm.xlu0 %675, %v534
      %v677 = vpop.permute.xlu0 %676
      %679 = vset.pattern.permute.xlu0 4
      %680 = vperm.xlu0 %679, %v539
      %v681 = vpop.permute.xlu0 %680
      %v683 = vsel %vm434, %v677, 0.0
      %v684 = vsel %vm435, %v681, 0.0
      %v685 = vadd.f32 %v673, %v683
      %v686 = vadd.f32 %v674, %v684
      %687 = vset.pattern.permute.xlu0 5
      %688 = vperm.xlu0 %687, %v534
      %v689 = vpop.permute.xlu0 %688
      %691 = vset.pattern.permute.xlu0 5
      %692 = vperm.xlu0 %691, %v539
      %v693 = vpop.permute.xlu0 %692
      %v695 = vsel %vm436, %v689, 0.0
      %v696 = vsel %vm437, %v693, 0.0
      %v697 = vadd.f32 %v685, %v695
      %v698 = vadd.f32 %v686, %v696
      %699 = vset.pattern.permute.xlu0 6
      %700 = vperm.xlu0 %699, %v534
      %v701 = vpop.permute.xlu0 %700
      %703 = vset.pattern.permute.xlu0 6
      %704 = vperm.xlu0 %703, %v539
      %v705 = vpop.permute.xlu0 %704
      %v707 = vsel %vm438, %v701, 0.0
      %v708 = vsel %vm439, %v705, 0.0
      %v709 = vadd.f32 %v697, %v707
      %v710 = vadd.f32 %v698, %v708
      %711 = vset.pattern.permute.xlu0 7
      %712 = vperm.xlu0 %711, %v534
      %v713 = vpop.permute.xlu0 %712
      %715 = vset.pattern.permute.xlu0 7
      %716 = vperm.xlu0 %715, %v539
      %v717 = vpop.permute.xlu0 %716
      %v719 = vsel %vm440, %v713, 0.0
      %v720 = vsel %vm441, %v717, 0.0
      %v721 = vadd.f32 %v709, %v719
      %v722 = vadd.f32 %v710, %v720
      %723 = vset.pattern.permute.xlu0 8
      %724 = vperm.xlu0 %723, %v534
      %v725 = vpop.permute.xlu0 %724
      %727 = vset.pattern.permute.xlu0 8
      %728 = vperm.xlu0 %727, %v539
      %v729 = vpop.permute.xlu0 %728
      %v731 = vsel %vm442, %v725, 0.0
      %v732 = vsel %vm443, %v729, 0.0
      %v733 = vadd.f32 %v721, %v731
      %v734 = vadd.f32 %v722, %v732
      %v735 = vsel %vm425, 1, 0
      %vm736 = vcmp.eq.s32.totalorder %v735, 1
      %v737 = vsel %vm736, %v733, -10000.0
      %v738 = vsel %vm736, %v734, -10000.0
      %v739 = vsel %vm454, %v737, -inf
      %740 = vmax.xlane.f32.xlu0 %v739
      %v741 = vpop.xlane.xlu0 %740
      %v742 = vsel %vm454, %v738, -inf
      %743 = vmax.xlane.f32.xlu0 %v742
      %v744 = vpop.xlane.xlu0 %743
      %v745 = vsub.f32 %v737, %v741
      %v746 = vsub.f32 %v738, %v744
      %v747 = vmul.f32 %v745, 1.442695
      %v748 = vpow.pop %v747
      %v749 = vmul.f32 %v746, 1.442695
      %v750 = vpow.pop %v749
      %v751 = vsel %vm454, %v748, 0.0
      %752 = vadd.xlane.f32.xlu0 %v751
      %v753 = vpop.xlane.xlu0 %752
      %v754 = vsel %vm454, %v750, 0.0
      %755 = vadd.xlane.f32.xlu0 %v754
      %v756 = vpop.xlane.xlu0 %755
      %v757 = vrcp.pop %v753
      %v758 = vmul.f32 %v748, %v757
      %v759 = vrcp.pop %v756
      %v760 = vmul.f32 %v750, %v759
      %v761 = vsel %vm426, %v758, 0.0
      %v762 = vsel %vm427, %v760, 0.0
      %v763 = vsel %vm454, %v761, 0.0
      %764 = vadd.xlane.f32.xlu0 %v763
      %v765 = vpop.xlane.xlu0 %764
      %v766 = vsel %vm454, %v762, 0.0
      %767 = vadd.xlane.f32.xlu0 %v766
      %v768 = vpop.xlane.xlu0 %767
      %v769 = vsel %vm428, %v758, 0.0
      %v770 = vsel %vm429, %v760, 0.0
      %v771 = vsel %vm454, %v769, 0.0
      %772 = vadd.xlane.f32.xlu0 %v771
      %v773 = vpop.xlane.xlu0 %772
      %v774 = vsel %vm454, %v770, 0.0
      %775 = vadd.xlane.f32.xlu0 %v774
      %v776 = vpop.xlane.xlu0 %775
      %v777 = vsel %vm430, %v758, 0.0
      %v778 = vsel %vm431, %v760, 0.0
      %v779 = vsel %vm454, %v777, 0.0
      %780 = vadd.xlane.f32.xlu0 %v779
      %v781 = vpop.xlane.xlu0 %780
      %v782 = vsel %vm454, %v778, 0.0
      %783 = vadd.xlane.f32.xlu0 %v782
      %v784 = vpop.xlane.xlu0 %783
      %v785 = vsel %vm432, %v758, 0.0
      %v786 = vsel %vm433, %v760, 0.0
      %v787 = vsel %vm454, %v785, 0.0
      %788 = vadd.xlane.f32.xlu0 %v787
      %v789 = vpop.xlane.xlu0 %788
      %v790 = vsel %vm454, %v786, 0.0
      %791 = vadd.xlane.f32.xlu0 %v790
      %v792 = vpop.xlane.xlu0 %791
      %v793 = vsel %vm434, %v758, 0.0
      %v794 = vsel %vm435, %v760, 0.0
      %v795 = vsel %vm454, %v793, 0.0
      %796 = vadd.xlane.f32.xlu0 %v795
      %v797 = vpop.xlane.xlu0 %796
      %v798 = vsel %vm454, %v794, 0.0
      %799 = vadd.xlane.f32.xlu0 %v798
      %v800 = vpop.xlane.xlu0 %799
      %v801 = vsel %vm436, %v758, 0.0
      %v802 = vsel %vm437, %v760, 0.0
      %v803 = vsel %vm454, %v801, 0.0
      %804 = vadd.xlane.f32.xlu0 %v803
      %v805 = vpop.xlane.xlu0 %804
      %v806 = vsel %vm454, %v802, 0.0
      %807 = vadd.xlane.f32.xlu0 %v806
      %v808 = vpop.xlane.xlu0 %807
      %v809 = vsel %vm438, %v758, 0.0
      %v810 = vsel %vm439, %v760, 0.0
      %v811 = vsel %vm454, %v809, 0.0
      %812 = vadd.xlane.f32.xlu0 %v811
      %v813 = vpop.xlane.xlu0 %812
      %v814 = vsel %vm454, %v810, 0.0
      %815 = vadd.xlane.f32.xlu0 %v814
      %v816 = vpop.xlane.xlu0 %815
      %v817 = vsel %vm440, %v758, 0.0
      %v818 = vsel %vm441, %v760, 0.0
      %v819 = vsel %vm454, %v817, 0.0
      %820 = vadd.xlane.f32.xlu0 %v819
      %v821 = vpop.xlane.xlu0 %820
      %v822 = vsel %vm454, %v818, 0.0
      %823 = vadd.xlane.f32.xlu0 %v822
      %v824 = vpop.xlane.xlu0 %823
      %v825 = vsel %vm442, %v758, 0.0
      %v826 = vsel %vm443, %v760, 0.0
      %v827 = vsel %vm454, %v825, 0.0
      %828 = vadd.xlane.f32.xlu0 %v827
      %v829 = vpop.xlane.xlu0 %828
      %v830 = vsel %vm454, %v826, 0.0
      %831 = vadd.xlane.f32.xlu0 %v830
      %v832 = vpop.xlane.xlu0 %831
      %vm833 = vcmask 7168
      %v834 = vsel %vm833, %v765, %v773
      %v835 = vsel %vm833, %v768, %v776
      %vm836 = vcmask 15360
      %v837 = vsel %vm836, %v834, %v781
      %v838 = vsel %vm836, %v835, %v784
      %vm839 = vcmask 23552
      %v840 = vsel %vm839, %v837, %v789
      %v841 = vsel %vm839, %v838, %v792
      %vm842 = vcmask 31744
      %v843 = vsel %vm842, %v840, %v797
      %v844 = vsel %vm842, %v841, %v800
      %vm845 = vcmask 39936
      %v846 = vsel %vm845, %v843, %v805
      %v847 = vsel %vm845, %v844, %v808
      %vm848 = vcmask 48128
      %v849 = vsel %vm848, %v846, %v813
      %v850 = vsel %vm848, %v847, %v816
      %vm851 = vcmask 56320
      %v852 = vsel %vm851, %v849, %v821
      %v853 = vsel %vm851, %v850, %v824
      %vm854 = vcmask 64512
      %v855 = vsel %vm854, %v852, %v829
      %v856 = vsel %vm854, %v853, %v832
      %vm857 = vcmask 72704
      %v859 = vsel %vm857, %v855, 0
      %v862 = vsel %vm857, %v856, 0
      %vm864 = vcmask 1040384
      %v866 = vsel %vm864, %v451, 0
      %868 = vmatprep.subr.mxu0 0.0
      %869 = vmatpush1.msra.mxu0 0.0
      %870 = vmatprep.subr.mxu0 0.0
      %871 = vmatpush1.msra.mxu0 0.0
      %872 = vmatprep.subr.mxu0 0.0
      %873 = vmatpush1.msra.mxu0 0.0
      %874 = vmatprep.subr.mxu0 0.0
      %875 = vmatpush1.msra.mxu0 0.0
      %876 = vmatprep.subr.mxu0 0.0
      %877 = vmatpush1.msra.mxu0 0.0
      %878 = vmatprep.subr.mxu0 0.0
      %879 = vmatpush1.msra.mxu0 0.0
      %880 = vmatprep.subr.mxu0 0.0
      %881 = vmatpush1.msra.mxu0 0.0
      %882 = vmatprep.subr.mxu0 0.0
      %883 = vmatpush1.msra.mxu0 0.0
      %884 = vmatprep.subr.mxu0 0.0
      %885 = vmatpush1.msra.mxu0 0.0
      %886 = vmatprep.subr.mxu0 0.0
      %887 = vmatpush1.msra.mxu0 0.0
      %888 = vmatprep.subr.mxu0 0.0
      %889 = vmatpush1.msra.mxu0 0.0
      %890 = vmatprep.subr.mxu0 0.0
      %891 = vmatpush1.msra.mxu0 0.0
      %892 = vmatprep.subr.mxu0 0.0
      %893 = vmatpush1.msra.mxu0 0.0
      %894 = vmatprep.subr.mxu0 0.0
      %895 = vmatpush1.msra.mxu0 0.0
      %896 = vmatprep.subr.mxu0 0.0
      %897 = vmatpush1.msra.mxu0 %v866
      %898 = vmatprep.subr.mxu0 0.0
      %899 = vmatpush1.msra.mxu0 %v450
      %900 = vmatprep.subr.mxu0 0.0
      %901 = vmatpush2.msra.mxu0 0.0
      %902 = vmatprep.subr.mxu0 0.0
      %903 = vmatpush2.msra.mxu0 0.0
      %904 = vmatprep.subr.mxu0 0.0
      %905 = vmatpush2.msra.mxu0 0.0
      %906 = vmatprep.subr.mxu0 0.0
      %907 = vmatpush2.msra.mxu0 0.0
      %908 = vmatprep.subr.mxu0 0.0
      %909 = vmatpush2.msra.mxu0 0.0
      %910 = vmatprep.subr.mxu0 0.0
      %911 = vmatpush2.msra.mxu0 0.0
      %912 = vmatprep.subr.mxu0 0.0
      %913 = vmatpush2.msra.mxu0 0.0
      %914 = vmatprep.subr.mxu0 0.0
      %915 = vmatpush2.msra.mxu0 0.0
      %916 = vmatprep.subr.mxu0 0.0
      %917 = vmatpush2.msra.mxu0 0.0
      %918 = vmatprep.subr.mxu0 0.0
      %919 = vmatpush2.msra.mxu0 0.0
      %920 = vmatprep.subr.mxu0 0.0
      %921 = vmatpush2.msra.mxu0 0.0
      %922 = vmatprep.subr.mxu0 0.0
      %923 = vmatpush2.msra.mxu0 0.0
      %924 = vmatprep.subr.mxu0 0.0
      %925 = vmatpush2.msra.mxu0 0.0
      %926 = vmatprep.subr.mxu0 0.0
      %927 = vmatpush2.msra.mxu0 0.0
      %928 = vmatprep.subr.mxu0 0.0
      %929 = vmatpush2.msra.mxu0 0.0
      %930 = vmatprep.subr.mxu0 0.0
      %931 = vmatpush2.msra.mxu0 0.0
      %932 = vmatprep.mubr.f32.mxu0 0.0
      %933 = vmatmul.mubr.f32.gmra.mxu0 %v859
      %v934 = vpop.f32.mrf.mxu0
      %v935 = vadd.f32 0.0, %v934
      %v936 = vpop.f32.mrf.mxu0
      %937 = vmatprep.mubr.f32.mxu0 0.0
      %938 = vmatmul.mubr.f32.gmra.mxu0 %v862
      %v939 = vpop.f32.mrf.mxu0
      %v940 = vadd.f32 0.0, %v939
      %v941 = vpop.f32.mrf.mxu0
      %942 = vdwg.mxu0
      %943 = vrot.lane.b32.xlu0 %v411, 64
      %v944 = vpop.permute.xlu0 %943
      %945 = vrot.lane.b32.xlu0 %v414, 64
      %v946 = vpop.permute.xlu0 %945
      %v950 = vsel %vm454, %v758, 0
      %v953 = vsel %vm454, %v760, 0
      %955 = vmatprep.subr.mxu0 0.0
      %956 = vmatpush1.msra.mxu0 0.0
      %957 = vmatprep.subr.mxu0 0.0
      %958 = vmatpush1.msra.mxu0 0.0
      %959 = vmatprep.subr.mxu0 0.0
      %960 = vmatpush1.msra.mxu0 0.0
      %961 = vmatprep.subr.mxu0 0.0
      %962 = vmatpush1.msra.mxu0 0.0
      %963 = vmatprep.subr.mxu0 0.0
      %964 = vmatpush1.msra.mxu0 0.0
      %965 = vmatprep.subr.mxu0 0.0
      %966 = vmatpush1.msra.mxu0 0.0
      %967 = vmatprep.subr.mxu0 0.0
      %968 = vmatpush1.msra.mxu0 0.0
      %969 = vmatprep.subr.mxu0 0.0
      %970 = vmatpush1.msra.mxu0 0.0
      %971 = vmatprep.subr.mxu0 0.0
      %972 = vmatpush1.msra.mxu0 0.0
      %973 = vmatprep.subr.mxu0 0.0
      %974 = vmatpush1.msra.mxu0 0.0
      %975 = vmatprep.subr.mxu0 0.0
      %976 = vmatpush1.msra.mxu0 0.0
      %977 = vmatprep.subr.mxu0 0.0
      %978 = vmatpush1.msra.mxu0 0.0
      %979 = vmatprep.subr.mxu0 0.0
      %980 = vmatpush1.msra.mxu0 0.0
      %981 = vmatprep.subr.mxu0 0.0
      %982 = vmatpush1.msra.mxu0 0.0
      %983 = vmatprep.subr.mxu0 0.0
      %984 = vmatpush1.msra.mxu0 %v946
      %985 = vmatprep.subr.mxu0 0.0
      %986 = vmatpush1.msra.mxu0 %v944
      %987 = vmatprep.subr.mxu0 0.0
      %988 = vmatpush2.msra.mxu0 0.0
      %989 = vmatprep.subr.mxu0 0.0
      %990 = vmatpush2.msra.mxu0 0.0
      %991 = vmatprep.subr.mxu0 0.0
      %992 = vmatpush2.msra.mxu0 0.0
      %993 = vmatprep.subr.mxu0 0.0
      %994 = vmatpush2.msra.mxu0 0.0
      %995 = vmatprep.subr.mxu0 0.0
      %996 = vmatpush2.msra.mxu0 0.0
      %997 = vmatprep.subr.mxu0 0.0
      %998 = vmatpush2.msra.mxu0 0.0
      %999 = vmatprep.subr.mxu0 0.0
      %1000 = vmatpush2.msra.mxu0 0.0
      %1001 = vmatprep.subr.mxu0 0.0
      %1002 = vmatpush2.msra.mxu0 0.0
      %1003 = vmatprep.subr.mxu0 0.0
      %1004 = vmatpush2.msra.mxu0 0.0
      %1005 = vmatprep.subr.mxu0 0.0
      %1006 = vmatpush2.msra.mxu0 0.0
      %1007 = vmatprep.subr.mxu0 0.0
      %1008 = vmatpush2.msra.mxu0 0.0
      %1009 = vmatprep.subr.mxu0 0.0
      %1010 = vmatpush2.msra.mxu0 0.0
      %1011 = vmatprep.subr.mxu0 0.0
      %1012 = vmatpush2.msra.mxu0 0.0
      %1013 = vmatprep.subr.mxu0 0.0
      %1014 = vmatpush2.msra.mxu0 0.0
      %1015 = vmatprep.subr.mxu0 0.0
      %1016 = vmatpush2.msra.mxu0 0.0
      %1017 = vmatprep.subr.mxu0 0.0
      %1018 = vmatpush2.msra.mxu0 0.0
      %1019 = vmatprep.mubr.f32.mxu0 0.0
      %1020 = vmatmul.mubr.f32.gmra.mxu0 %v950
      %v1021 = vpop.f32.mrf.mxu0
      %v1022 = vadd.f32 %v935, %v1021
      %v1023 = vpop.f32.mrf.mxu0
      %1024 = vmatprep.mubr.f32.mxu0 0.0
      %1025 = vmatmul.mubr.f32.gmra.mxu0 %v953
      %v1026 = vpop.f32.mrf.mxu0
      %v1027 = vadd.f32 %v940, %v1026
      %v1028 = vpop.f32.mrf.mxu0
      %1029 = vdwg.mxu0
      %1030 = vst.msk [vmem:[#allocation2] sm:$0xff] %vm454, %v1022
      %1031 = vst.msk [vmem:[#allocation2 + $0x8] sm:$0xff] %vm454, %v1027
      %1032 = vrot.lane.b32.xlu0 %v452, 112
      %v1033 = vpop.permute.xlu0 %1032
      %1034 = vrot.lane.b32.xlu0 %v453, 112
      %v1035 = vpop.permute.xlu0 %1034
      %v1036 = vsel %vm454, %v1033, 0
      %v1038 = vsel %vm454, %v1035, 0
      %1040 = vmatprep.subr.mxu0 0.0
      %1041 = vmatpush1.xpose.msra.mxu0 0.0
      %1042 = vmatprep.subr.mxu0 0.0
      %1043 = vmatpush1.xpose.msra.mxu0 0.0
      %1044 = vmatprep.subr.mxu0 0.0
      %1045 = vmatpush1.xpose.msra.mxu0 0.0
      %1046 = vmatprep.subr.mxu0 0.0
      %1047 = vmatpush1.xpose.msra.mxu0 0.0
      %1048 = vmatprep.subr.mxu0 0.0
      %1049 = vmatpush1.xpose.msra.mxu0 0.0
      %1050 = vmatprep.subr.mxu0 0.0
      %1051 = vmatpush1.xpose.msra.mxu0 0.0
      %1052 = vmatprep.subr.mxu0 0.0
      %1053 = vmatpush1.xpose.msra.mxu0 0.0
      %1054 = vmatprep.subr.mxu0 0.0
      %1055 = vmatpush1.xpose.msra.mxu0 0.0
      %1056 = vmatprep.subr.mxu0 0.0
      %1057 = vmatpush1.xpose.msra.mxu0 0.0
      %1058 = vmatprep.subr.mxu0 0.0
      %1059 = vmatpush1.xpose.msra.mxu0 0.0
      %1060 = vmatprep.subr.mxu0 0.0
      %1061 = vmatpush1.xpose.msra.mxu0 0.0
      %1062 = vmatprep.subr.mxu0 0.0
      %1063 = vmatpush1.xpose.msra.mxu0 0.0
      %1064 = vmatprep.subr.mxu0 0.0
      %1065 = vmatpush1.xpose.msra.mxu0 0.0
      %1066 = vmatprep.subr.mxu0 0.0
      %1067 = vmatpush1.xpose.msra.mxu0 0.0
      %1068 = vmatprep.subr.mxu0 0.0
      %1069 = vmatpush1.xpose.msra.mxu0 %v465
      %1070 = vmatprep.subr.mxu0 0.0
      %1071 = vmatpush1.xpose.msra.mxu0 %v462
      %1072 = vmatprep.subr.mxu0 0.0
      %1073 = vmatpush2.xpose.msra.mxu0 0.0
      %1074 = vmatprep.subr.mxu0 0.0
      %1075 = vmatpush2.xpose.msra.mxu0 0.0
      %1076 = vmatprep.subr.mxu0 0.0
      %1077 = vmatpush2.xpose.msra.mxu0 0.0
      %1078 = vmatprep.subr.mxu0 0.0
      %1079 = vmatpush2.xpose.msra.mxu0 0.0
      %1080 = vmatprep.subr.mxu0 0.0
      %1081 = vmatpush2.xpose.msra.mxu0 0.0
      %1082 = vmatprep.subr.mxu0 0.0
      %1083 = vmatpush2.xpose.msra.mxu0 0.0
      %1084 = vmatprep.subr.mxu0 0.0
      %1085 = vmatpush2.xpose.msra.mxu0 0.0
      %1086 = vmatprep.subr.mxu0 0.0
      %1087 = vmatpush2.xpose.msra.mxu0 0.0
      %1088 = vmatprep.subr.mxu0 0.0
      %1089 = vmatpush2.xpose.msra.mxu0 0.0
      %1090 = vmatprep.subr.mxu0 0.0
      %1091 = vmatpush2.xpose.msra.mxu0 0.0
      %1092 = vmatprep.subr.mxu0 0.0
      %1093 = vmatpush2.xpose.msra.mxu0 0.0
      %1094 = vmatprep.subr.mxu0 0.0
      %1095 = vmatpush2.xpose.msra.mxu0 0.0
      %1096 = vmatprep.subr.mxu0 0.0
      %1097 = vmatpush2.xpose.msra.mxu0 0.0
      %1098 = vmatprep.subr.mxu0 0.0
      %1099 = vmatpush2.xpose.msra.mxu0 0.0
      %1100 = vmatprep.subr.mxu0 0.0
      %1101 = vmatpush2.xpose.msra.mxu0 0.0
      %1102 = vmatprep.subr.mxu0 0.0
      %1103 = vmatpush2.xpose.msra.mxu0 0.0
      %1104 = vmatprep.mubr.f32.mxu0 0.0
      %1105 = vmatmul.mubr.f32.gmra.mxu0 %v1036
      %v1106 = vpop.f32.mrf.mxu0
      %v1107 = vadd.f32 0.0, %v1106
      %v1108 = vpop.f32.mrf.mxu0
      %1109 = vmatprep.mubr.f32.mxu0 0.0
      %1110 = vmatmul.mubr.f32.gmra.mxu0 %v1038
      %v1111 = vpop.f32.mrf.mxu0
      %v1112 = vadd.f32 0.0, %v1111
      %v1113 = vpop.f32.mrf.mxu0
      %1114 = vdwg.mxu0
      %1116 = vset.pattern.permute.xlu0 0
      %1117 = vperm.xlu0 %1116, %v1107
      %v1118 = vpop.permute.xlu0 %1117
      %1121 = vset.pattern.permute.xlu0 0
      %1122 = vperm.xlu0 %1121, %v1112
      %v1123 = vpop.permute.xlu0 %1122
      %v1125 = vsel %vm426, %v1118, 0.0
      %v1126 = vsel %vm427, %v1123, 0.0
      %1127 = vrot.lane.b32.xlu0 %v411, 80
      %v1128 = vpop.permute.xlu0 %1127
      %1129 = vrot.lane.b32.xlu0 %v414, 80
      %v1130 = vpop.permute.xlu0 %1129
      %v1131 = vsel %vm454, %v1128, 0
      %v1133 = vsel %vm454, %v1130, 0
      %1135 = vmatprep.subr.mxu0 0.0
      %1136 = vmatpush1.xpose.msra.mxu0 0.0
      %1137 = vmatprep.subr.mxu0 0.0
      %1138 = vmatpush1.xpose.msra.mxu0 0.0
      %1139 = vmatprep.subr.mxu0 0.0
      %1140 = vmatpush1.xpose.msra.mxu0 0.0
      %1141 = vmatprep.subr.mxu0 0.0
      %1142 = vmatpush1.xpose.msra.mxu0 0.0
      %1143 = vmatprep.subr.mxu0 0.0
      %1144 = vmatpush1.xpose.msra.mxu0 0.0
      %1145 = vmatprep.subr.mxu0 0.0
      %1146 = vmatpush1.xpose.msra.mxu0 0.0
      %1147 = vmatprep.subr.mxu0 0.0
      %1148 = vmatpush1.xpose.msra.mxu0 0.0
      %1149 = vmatprep.subr.mxu0 0.0
      %1150 = vmatpush1.xpose.msra.mxu0 0.0
      %1151 = vmatprep.subr.mxu0 0.0
      %1152 = vmatpush1.xpose.msra.mxu0 0.0
      %1153 = vmatprep.subr.mxu0 0.0
      %1154 = vmatpush1.xpose.msra.mxu0 0.0
      %1155 = vmatprep.subr.mxu0 0.0
      %1156 = vmatpush1.xpose.msra.mxu0 0.0
      %1157 = vmatprep.subr.mxu0 0.0
      %1158 = vmatpush1.xpose.msra.mxu0 0.0
      %1159 = vmatprep.subr.mxu0 0.0
      %1160 = vmatpush1.xpose.msra.mxu0 0.0
      %1161 = vmatprep.subr.mxu0 0.0
      %1162 = vmatpush1.xpose.msra.mxu0 0.0
      %1163 = vmatprep.subr.mxu0 0.0
      %1164 = vmatpush1.xpose.msra.mxu0 %v1133
      %1165 = vmatprep.subr.mxu0 0.0
      %1166 = vmatpush1.xpose.msra.mxu0 %v1131
      %1167 = vmatprep.subr.mxu0 0.0
      %1168 = vmatpush2.xpose.msra.mxu0 0.0
      %1169 = vmatprep.subr.mxu0 0.0
      %1170 = vmatpush2.xpose.msra.mxu0 0.0
      %1171 = vmatprep.subr.mxu0 0.0
      %1172 = vmatpush2.xpose.msra.mxu0 0.0
      %1173 = vmatprep.subr.mxu0 0.0
      %1174 = vmatpush2.xpose.msra.mxu0 0.0
      %1175 = vmatprep.subr.mxu0 0.0
      %1176 = vmatpush2.xpose.msra.mxu0 0.0
      %1177 = vmatprep.subr.mxu0 0.0
      %1178 = vmatpush2.xpose.msra.mxu0 0.0
      %1179 = vmatprep.subr.mxu0 0.0
      %1180 = vmatpush2.xpose.msra.mxu0 0.0
      %1181 = vmatprep.subr.mxu0 0.0
      %1182 = vmatpush2.xpose.msra.mxu0 0.0
      %1183 = vmatprep.subr.mxu0 0.0
      %1184 = vmatpush2.xpose.msra.mxu0 0.0
      %1185 = vmatprep.subr.mxu0 0.0
      %1186 = vmatpush2.xpose.msra.mxu0 0.0
      %1187 = vmatprep.subr.mxu0 0.0
      %1188 = vmatpush2.xpose.msra.mxu0 0.0
      %1189 = vmatprep.subr.mxu0 0.0
      %1190 = vmatpush2.xpose.msra.mxu0 0.0
      %1191 = vmatprep.subr.mxu0 0.0
      %1192 = vmatpush2.xpose.msra.mxu0 0.0
      %1193 = vmatprep.subr.mxu0 0.0
      %1194 = vmatpush2.xpose.msra.mxu0 0.0
      %1195 = vmatprep.subr.mxu0 0.0
      %1196 = vmatpush2.xpose.msra.mxu0 0.0
      %1197 = vmatprep.subr.mxu0 0.0
      %1198 = vmatpush2.xpose.msra.mxu0 0.0
      %1199 = vmatprep.mubr.f32.mxu0 0.0
      %1200 = vmatmul.mubr.f32.gmra.mxu0 %v1036
      %v1201 = vpop.f32.mrf.mxu0
      %v1202 = vadd.f32 %v1125, %v1201
      %v1203 = vpop.f32.mrf.mxu0
      %1204 = vmatprep.mubr.f32.mxu0 0.0
      %1205 = vmatmul.mubr.f32.gmra.mxu0 %v1038
      %v1206 = vpop.f32.mrf.mxu0
      %v1207 = vadd.f32 %v1126, %v1206
      %v1208 = vpop.f32.mrf.mxu0
      %1209 = vdwg.mxu0
      %1210 = vset.pattern.permute.xlu0 1
      %1211 = vperm.xlu0 %1210, %v1107
      %v1212 = vpop.permute.xlu0 %1211
      %1214 = vset.pattern.permute.xlu0 1
      %1215 = vperm.xlu0 %1214, %v1112
      %v1216 = vpop.permute.xlu0 %1215
      %v1218 = vsel %vm428, %v1212, 0.0
      %v1219 = vsel %vm429, %v1216, 0.0
      %v1220 = vadd.f32 %v1202, %v1218
      %v1221 = vadd.f32 %v1207, %v1219
      %1222 = vset.pattern.permute.xlu0 2
      %1223 = vperm.xlu0 %1222, %v1107
      %v1224 = vpop.permute.xlu0 %1223
      %1226 = vset.pattern.permute.xlu0 2
      %1227 = vperm.xlu0 %1226, %v1112
      %v1228 = vpop.permute.xlu0 %1227
      %v1230 = vsel %vm430, %v1224, 0.0
      %v1231 = vsel %vm431, %v1228, 0.0
      %v1232 = vadd.f32 %v1220, %v1230
      %v1233 = vadd.f32 %v1221, %v1231
      %1234 = vset.pattern.permute.xlu0 3
      %1235 = vperm.xlu0 %1234, %v1107
      %v1236 = vpop.permute.xlu0 %1235
      %1238 = vset.pattern.permute.xlu0 3
      %1239 = vperm.xlu0 %1238, %v1112
      %v1240 = vpop.permute.xlu0 %1239
      %v1242 = vsel %vm432, %v1236, 0.0
      %v1243 = vsel %vm433, %v1240, 0.0
      %v1244 = vadd.f32 %v1232, %v1242
      %v1245 = vadd.f32 %v1233, %v1243
      %1246 = vset.pattern.permute.xlu0 4
      %1247 = vperm.xlu0 %1246, %v1107
      %v1248 = vpop.permute.xlu0 %1247
      %1250 = vset.pattern.permute.xlu0 4
      %1251 = vperm.xlu0 %1250, %v1112
      %v1252 = vpop.permute.xlu0 %1251
      %v1254 = vsel %vm434, %v1248, 0.0
      %v1255 = vsel %vm435, %v1252, 0.0
      %v1256 = vadd.f32 %v1244, %v1254
      %v1257 = vadd.f32 %v1245, %v1255
      %1258 = vset.pattern.permute.xlu0 5
      %1259 = vperm.xlu0 %1258, %v1107
      %v1260 = vpop.permute.xlu0 %1259
      %1262 = vset.pattern.permute.xlu0 5
      %1263 = vperm.xlu0 %1262, %v1112
      %v1264 = vpop.permute.xlu0 %1263
      %v1266 = vsel %vm436, %v1260, 0.0
      %v1267 = vsel %vm437, %v1264, 0.0
      %v1268 = vadd.f32 %v1256, %v1266
      %v1269 = vadd.f32 %v1257, %v1267
      %1270 = vset.pattern.permute.xlu0 6
      %1271 = vperm.xlu0 %1270, %v1107
      %v1272 = vpop.permute.xlu0 %1271
      %1274 = vset.pattern.permute.xlu0 6
      %1275 = vperm.xlu0 %1274, %v1112
      %v1276 = vpop.permute.xlu0 %1275
      %v1278 = vsel %vm438, %v1272, 0.0
      %v1279 = vsel %vm439, %v1276, 0.0
      %v1280 = vadd.f32 %v1268, %v1278
      %v1281 = vadd.f32 %v1269, %v1279
      %1282 = vset.pattern.permute.xlu0 7
      %1283 = vperm.xlu0 %1282, %v1107
      %v1284 = vpop.permute.xlu0 %1283
      %1286 = vset.pattern.permute.xlu0 7
      %1287 = vperm.xlu0 %1286, %v1112
      %v1288 = vpop.permute.xlu0 %1287
      %v1290 = vsel %vm440, %v1284, 0.0
      %v1291 = vsel %vm441, %v1288, 0.0
      %v1292 = vadd.f32 %v1280, %v1290
      %v1293 = vadd.f32 %v1281, %v1291
      %1294 = vset.pattern.permute.xlu0 8
      %1295 = vperm.xlu0 %1294, %v1107
      %v1296 = vpop.permute.xlu0 %1295
      %1298 = vset.pattern.permute.xlu0 8
      %1299 = vperm.xlu0 %1298, %v1112
      %v1300 = vpop.permute.xlu0 %1299
      %v1302 = vsel %vm442, %v1296, 0.0
      %v1303 = vsel %vm443, %v1300, 0.0
      %v1304 = vadd.f32 %v1292, %v1302
      %v1305 = vadd.f32 %v1293, %v1303
      %v1306 = vsel %vm736, %v1304, -10000.0
      %v1307 = vsel %vm736, %v1305, -10000.0
      %v1308 = vsel %vm454, %v1306, -inf
      %1309 = vmax.xlane.f32.xlu0 %v1308
      %v1310 = vpop.xlane.xlu0 %1309
      %v1311 = vsel %vm454, %v1307, -inf
      %1312 = vmax.xlane.f32.xlu0 %v1311
      %v1313 = vpop.xlane.xlu0 %1312
      %v1314 = vsub.f32 %v1306, %v1310
      %v1315 = vsub.f32 %v1307, %v1313
      %v1316 = vmul.f32 %v1314, 1.442695
      %v1317 = vpow.pop %v1316
      %v1318 = vmul.f32 %v1315, 1.442695
      %v1319 = vpow.pop %v1318
      %v1320 = vsel %vm454, %v1317, 0.0
      %1321 = vadd.xlane.f32.xlu0 %v1320
      %v1322 = vpop.xlane.xlu0 %1321
      %v1323 = vsel %vm454, %v1319, 0.0
      %1324 = vadd.xlane.f32.xlu0 %v1323
      %v1325 = vpop.xlane.xlu0 %1324
      %v1326 = vrcp.pop %v1322
      %v1327 = vmul.f32 %v1317, %v1326
      %v1328 = vrcp.pop %v1325
      %v1329 = vmul.f32 %v1319, %v1328
      %v1330 = vsel %vm426, %v1327, 0.0
      %v1331 = vsel %vm427, %v1329, 0.0
      %v1332 = vsel %vm454, %v1330, 0.0
      %1333 = vadd.xlane.f32.xlu0 %v1332
      %v1334 = vpop.xlane.xlu0 %1333
      %v1335 = vsel %vm454, %v1331, 0.0
      %1336 = vadd.xlane.f32.xlu0 %v1335
      %v1337 = vpop.xlane.xlu0 %1336
      %v1338 = vsel %vm428, %v1327, 0.0
      %v1339 = vsel %vm429, %v1329, 0.0
      %v1340 = vsel %vm454, %v1338, 0.0
      %1341 = vadd.xlane.f32.xlu0 %v1340
      %v1342 = vpop.xlane.xlu0 %1341
      %v1343 = vsel %vm454, %v1339, 0.0
      %1344 = vadd.xlane.f32.xlu0 %v1343
      %v1345 = vpop.xlane.xlu0 %1344
      %v1346 = vsel %vm430, %v1327, 0.0
      %v1347 = vsel %vm431, %v1329, 0.0
      %v1348 = vsel %vm454, %v1346, 0.0
      %1349 = vadd.xlane.f32.xlu0 %v1348
      %v1350 = vpop.xlane.xlu0 %1349
      %v1351 = vsel %vm454, %v1347, 0.0
      %1352 = vadd.xlane.f32.xlu0 %v1351
      %v1353 = vpop.xlane.xlu0 %1352
      %v1354 = vsel %vm432, %v1327, 0.0
      %v1355 = vsel %vm433, %v1329, 0.0
      %v1356 = vsel %vm454, %v1354, 0.0
      %1357 = vadd.xlane.f32.xlu0 %v1356
      %v1358 = vpop.xlane.xlu0 %1357
      %v1359 = vsel %vm454, %v1355, 0.0
      %1360 = vadd.xlane.f32.xlu0 %v1359
      %v1361 = vpop.xlane.xlu0 %1360
      %v1362 = vsel %vm434, %v1327, 0.0
      %v1363 = vsel %vm435, %v1329, 0.0
      %v1364 = vsel %vm454, %v1362, 0.0
      %1365 = vadd.xlane.f32.xlu0 %v1364
      %v1366 = vpop.xlane.xlu0 %1365
      %v1367 = vsel %vm454, %v1363, 0.0
      %1368 = vadd.xlane.f32.xlu0 %v1367
      %v1369 = vpop.xlane.xlu0 %1368
      %v1370 = vsel %vm436, %v1327, 0.0
      %v1371 = vsel %vm437, %v1329, 0.0
      %v1372 = vsel %vm454, %v1370, 0.0
      %1373 = vadd.xlane.f32.xlu0 %v1372
      %v1374 = vpop.xlane.xlu0 %1373
      %v1375 = vsel %vm454, %v1371, 0.0
      %1376 = vadd.xlane.f32.xlu0 %v1375
      %v1377 = vpop.xlane.xlu0 %1376
      %v1378 = vsel %vm438, %v1327, 0.0
      %v1379 = vsel %vm439, %v1329, 0.0
      %v1380 = vsel %vm454, %v1378, 0.0
      %1381 = vadd.xlane.f32.xlu0 %v1380
      %v1382 = vpop.xlane.xlu0 %1381
      %v1383 = vsel %vm454, %v1379, 0.0
      %1384 = vadd.xlane.f32.xlu0 %v1383
      %v1385 = vpop.xlane.xlu0 %1384
      %v1386 = vsel %vm440, %v1327, 0.0
      %v1387 = vsel %vm441, %v1329, 0.0
      %v1388 = vsel %vm454, %v1386, 0.0
      %1389 = vadd.xlane.f32.xlu0 %v1388
      %v1390 = vpop.xlane.xlu0 %1389
      %v1391 = vsel %vm454, %v1387, 0.0
      %1392 = vadd.xlane.f32.xlu0 %v1391
      %v1393 = vpop.xlane.xlu0 %1392
      %v1394 = vsel %vm442, %v1327, 0.0
      %v1395 = vsel %vm443, %v1329, 0.0
      %v1396 = vsel %vm454, %v1394, 0.0
      %1397 = vadd.xlane.f32.xlu0 %v1396
      %v1398 = vpop.xlane.xlu0 %1397
      %v1399 = vsel %vm454, %v1395, 0.0
      %1400 = vadd.xlane.f32.xlu0 %v1399
      %v1401 = vpop.xlane.xlu0 %1400
      %v1402 = vsel %vm833, %v1334, %v1342
      %v1403 = vsel %vm833, %v1337, %v1345
      %v1404 = vsel %vm836, %v1402, %v1350
      %v1405 = vsel %vm836, %v1403, %v1353
      %v1406 = vsel %vm839, %v1404, %v1358
      %v1407 = vsel %vm839, %v1405, %v1361
      %v1408 = vsel %vm842, %v1406, %v1366
      %v1409 = vsel %vm842, %v1407, %v1369
      %v1410 = vsel %vm845, %v1408, %v1374
      %v1411 = vsel %vm845, %v1409, %v1377
      %v1412 = vsel %vm848, %v1410, %v1382
      %v1413 = vsel %vm848, %v1411, %v1385
      %v1414 = vsel %vm851, %v1412, %v1390
      %v1415 = vsel %vm851, %v1413, %v1393
      %v1416 = vsel %vm854, %v1414, %v1398
      %v1417 = vsel %vm854, %v1415, %v1401
      %v1419 = vsel %vm857, %v1416, 0
      %v1422 = vsel %vm857, %v1417, 0
      %1424 = vmatprep.subr.mxu0 0.0
      %1425 = vmatpush1.msra.mxu0 0.0
      %1426 = vmatprep.subr.mxu0 0.0
      %1427 = vmatpush1.msra.mxu0 0.0
      %1428 = vmatprep.subr.mxu0 0.0
      %1429 = vmatpush1.msra.mxu0 0.0
      %1430 = vmatprep.subr.mxu0 0.0
      %1431 = vmatpush1.msra.mxu0 0.0
      %1432 = vmatprep.subr.mxu0 0.0
      %1433 = vmatpush1.msra.mxu0 0.0
      %1434 = vmatprep.subr.mxu0 0.0
      %1435 = vmatpush1.msra.mxu0 0.0
      %1436 = vmatprep.subr.mxu0 0.0
      %1437 = vmatpush1.msra.mxu0 0.0
      %1438 = vmatprep.subr.mxu0 0.0
      %1439 = vmatpush1.msra.mxu0 0.0
      %1440 = vmatprep.subr.mxu0 0.0
      %1441 = vmatpush1.msra.mxu0 0.0
      %1442 = vmatprep.subr.mxu0 0.0
      %1443 = vmatpush1.msra.mxu0 0.0
      %1444 = vmatprep.subr.mxu0 0.0
      %1445 = vmatpush1.msra.mxu0 0.0
      %1446 = vmatprep.subr.mxu0 0.0
      %1447 = vmatpush1.msra.mxu0 0.0
      %1448 = vmatprep.subr.mxu0 0.0
      %1449 = vmatpush1.msra.mxu0 0.0
      %1450 = vmatprep.subr.mxu0 0.0
      %1451 = vmatpush1.msra.mxu0 0.0
      %1452 = vmatprep.subr.mxu0 0.0
      %1453 = vmatpush1.msra.mxu0 %v866
      %1454 = vmatprep.subr.mxu0 0.0
      %1455 = vmatpush1.msra.mxu0 %v450
      %1456 = vmatprep.subr.mxu0 0.0
      %1457 = vmatpush2.msra.mxu0 0.0
      %1458 = vmatprep.subr.mxu0 0.0
      %1459 = vmatpush2.msra.mxu0 0.0
      %1460 = vmatprep.subr.mxu0 0.0
      %1461 = vmatpush2.msra.mxu0 0.0
      %1462 = vmatprep.subr.mxu0 0.0
      %1463 = vmatpush2.msra.mxu0 0.0
      %1464 = vmatprep.subr.mxu0 0.0
      %1465 = vmatpush2.msra.mxu0 0.0
      %1466 = vmatprep.subr.mxu0 0.0
      %1467 = vmatpush2.msra.mxu0 0.0
      %1468 = vmatprep.subr.mxu0 0.0
      %1469 = vmatpush2.msra.mxu0 0.0
      %1470 = vmatprep.subr.mxu0 0.0
      %1471 = vmatpush2.msra.mxu0 0.0
      %1472 = vmatprep.subr.mxu0 0.0
      %1473 = vmatpush2.msra.mxu0 0.0
      %1474 = vmatprep.subr.mxu0 0.0
      %1475 = vmatpush2.msra.mxu0 0.0
      %1476 = vmatprep.subr.mxu0 0.0
      %1477 = vmatpush2.msra.mxu0 0.0
      %1478 = vmatprep.subr.mxu0 0.0
      %1479 = vmatpush2.msra.mxu0 0.0
      %1480 = vmatprep.subr.mxu0 0.0
      %1481 = vmatpush2.msra.mxu0 0.0
      %1482 = vmatprep.subr.mxu0 0.0
      %1483 = vmatpush2.msra.mxu0 0.0
      %1484 = vmatprep.subr.mxu0 0.0
      %1485 = vmatpush2.msra.mxu0 0.0
      %1486 = vmatprep.subr.mxu0 0.0
      %1487 = vmatpush2.msra.mxu0 0.0
      %1488 = vmatprep.mubr.f32.mxu0 0.0
      %1489 = vmatmul.mubr.f32.gmra.mxu0 %v1419
      %v1490 = vpop.f32.mrf.mxu0
      %v1491 = vadd.f32 0.0, %v1490
      %v1492 = vpop.f32.mrf.mxu0
      %1493 = vmatprep.mubr.f32.mxu0 0.0
      %1494 = vmatmul.mubr.f32.gmra.mxu0 %v1422
      %v1495 = vpop.f32.mrf.mxu0
      %v1496 = vadd.f32 0.0, %v1495
      %v1497 = vpop.f32.mrf.mxu0
      %1498 = vdwg.mxu0
      %1499 = vrot.lane.b32.xlu0 %v411, 48
      %v1500 = vpop.permute.xlu0 %1499
      %1501 = vrot.lane.b32.xlu0 %v414, 48
      %v1502 = vpop.permute.xlu0 %1501
      %v1506 = vsel %vm454, %v1327, 0
      %v1509 = vsel %vm454, %v1329, 0
      %1511 = vmatprep.subr.mxu0 0.0
      %1512 = vmatpush1.msra.mxu0 0.0
      %1513 = vmatprep.subr.mxu0 0.0
      %1514 = vmatpush1.msra.mxu0 0.0
      %1515 = vmatprep.subr.mxu0 0.0
      %1516 = vmatpush1.msra.mxu0 0.0
      %1517 = vmatprep.subr.mxu0 0.0
      %1518 = vmatpush1.msra.mxu0 0.0
      %1519 = vmatprep.subr.mxu0 0.0
      %1520 = vmatpush1.msra.mxu0 0.0
      %1521 = vmatprep.subr.mxu0 0.0
      %1522 = vmatpush1.msra.mxu0 0.0
      %1523 = vmatprep.subr.mxu0 0.0
      %1524 = vmatpush1.msra.mxu0 0.0
      %1525 = vmatprep.subr.mxu0 0.0
      %1526 = vmatpush1.msra.mxu0 0.0
      %1527 = vmatprep.subr.mxu0 0.0
      %1528 = vmatpush1.msra.mxu0 0.0
      %1529 = vmatprep.subr.mxu0 0.0
      %1530 = vmatpush1.msra.mxu0 0.0
      %1531 = vmatprep.subr.mxu0 0.0
      %1532 = vmatpush1.msra.mxu0 0.0
      %1533 = vmatprep.subr.mxu0 0.0
      %1534 = vmatpush1.msra.mxu0 0.0
      %1535 = vmatprep.subr.mxu0 0.0
      %1536 = vmatpush1.msra.mxu0 0.0
      %1537 = vmatprep.subr.mxu0 0.0
      %1538 = vmatpush1.msra.mxu0 0.0
      %1539 = vmatprep.subr.mxu0 0.0
      %1540 = vmatpush1.msra.mxu0 %v1502
      %1541 = vmatprep.subr.mxu0 0.0
      %1542 = vmatpush1.msra.mxu0 %v1500
      %1543 = vmatprep.subr.mxu0 0.0
      %1544 = vmatpush2.msra.mxu0 0.0
      %1545 = vmatprep.subr.mxu0 0.0
      %1546 = vmatpush2.msra.mxu0 0.0
      %1547 = vmatprep.subr.mxu0 0.0
      %1548 = vmatpush2.msra.mxu0 0.0
      %1549 = vmatprep.subr.mxu0 0.0
      %1550 = vmatpush2.msra.mxu0 0.0
      %1551 = vmatprep.subr.mxu0 0.0
      %1552 = vmatpush2.msra.mxu0 0.0
      %1553 = vmatprep.subr.mxu0 0.0
      %1554 = vmatpush2.msra.mxu0 0.0
      %1555 = vmatprep.subr.mxu0 0.0
      %1556 = vmatpush2.msra.mxu0 0.0
      %1557 = vmatprep.subr.mxu0 0.0
      %1558 = vmatpush2.msra.mxu0 0.0
      %1559 = vmatprep.subr.mxu0 0.0
      %1560 = vmatpush2.msra.mxu0 0.0
      %1561 = vmatprep.subr.mxu0 0.0
      %1562 = vmatpush2.msra.mxu0 0.0
      %1563 = vmatprep.subr.mxu0 0.0
      %1564 = vmatpush2.msra.mxu0 0.0
      %1565 = vmatprep.subr.mxu0 0.0
      %1566 = vmatpush2.msra.mxu0 0.0
      %1567 = vmatprep.subr.mxu0 0.0
      %1568 = vmatpush2.msra.mxu0 0.0
      %1569 = vmatprep.subr.mxu0 0.0
      %1570 = vmatpush2.msra.mxu0 0.0
      %1571 = vmatprep.subr.mxu0 0.0
      %1572 = vmatpush2.msra.mxu0 0.0
      %1573 = vmatprep.subr.mxu0 0.0
      %1574 = vmatpush2.msra.mxu0 0.0
      %1575 = vmatprep.mubr.f32.mxu0 0.0
      %1576 = vmatmul.mubr.f32.gmra.mxu0 %v1506
      %v1577 = vpop.f32.mrf.mxu0
      %v1578 = vadd.f32 %v1491, %v1577
      %v1579 = vpop.f32.mrf.mxu0
      %1580 = vmatprep.mubr.f32.mxu0 0.0
      %1581 = vmatmul.mubr.f32.gmra.mxu0 %v1509
      %v1582 = vpop.f32.mrf.mxu0
      %v1583 = vadd.f32 %v1496, %v1582
      %v1584 = vpop.f32.mrf.mxu0
      %1585 = vdwg.mxu0
      %1588 = vrot.lane.b32.xlu0 %v1578, 16
      %v1589 = vpop.permute.xlu0 %1588
      %1590 = vrot.lane.b32.xlu0 %v1583, 16
      %v1591 = vpop.permute.xlu0 %1590
      %vm1594 = vcmask 261248
      %1595 = vst.msk [vmem:[#allocation2] sm:$0xff] %vm1594, %v1589
      %1596 = vst.msk [vmem:[#allocation2 + $0x8] sm:$0xff] %vm1594, %v1591
      %v1597 = vld [vmem:[#allocation2] sm:$0xff]
      %v1598 = vld [vmem:[#allocation2 + $0x8] sm:$0xff]
      %v1599 = vpack.c.bf16 %v1598, %v1597
      %v1600 = vld [vmem:[%s6] sm:$0xf]
      %v1601 = vld [vmem:[%s6 + $0x4] sm:$0xf]
      %v1602 = vld [vmem:[%s6 + $0x8] sm:$0xf]
      %v1603 = vld [vmem:[%s6 + $0xc] sm:$0xf]
      %v1604 = vld [vmem:[%s7] sm:$0x1]
      %v1606 = vlaneseq
      %v1607 = vshrl.u32 %v1606, 7
      %v1608 = vsub.s32 0, %v1607
      %v1609 = vrot.slane %v1604, %v1608
      %v1615 = vunpack.c.l.b16 %v1600
      %v1616 = vunpack.c.l.b16 %v1601
      %v1617 = vunpack.c.l.b16 %v1602
      %v1618 = vunpack.c.l.b16 %v1603
      %v1619 = vpack.c.b16 %v1616, %v1615
      %v1620 = vpack.c.b16 %v1618, %v1617
      %v1624 = vsel %vm372, %v1599, 0
      %1626 = vmatprep.subr.bf16.mxu0 0
      %1627 = vmatpush1.bf16.msra.mxu0 0
      %1628 = vmatprep.subr.bf16.mxu0 0
      %1629 = vmatpush1.bf16.msra.mxu0 0
      %1630 = vmatprep.subr.bf16.mxu0 0
      %1631 = vmatpush1.bf16.msra.mxu0 0
      %1632 = vmatprep.subr.bf16.mxu0 0
      %1633 = vmatpush1.bf16.msra.mxu0 0
      %1634 = vmatprep.subr.bf16.mxu0 0
      %1635 = vmatpush1.bf16.msra.mxu0 0
      %1636 = vmatprep.subr.bf16.mxu0 0
      %1637 = vmatpush1.bf16.msra.mxu0 0
      %1638 = vmatprep.subr.bf16.mxu0 0
      %1639 = vmatpush1.bf16.msra.mxu0 %v1620
      %1640 = vmatprep.subr.bf16.mxu0 0
      %1641 = vmatpush1.bf16.msra.mxu0 %v1619
      %1642 = vmatprep.subr.bf16.mxu0 0
      %1643 = vmatpush2.bf16.msra.mxu0 0
      %1644 = vmatprep.subr.bf16.mxu0 0
      %1645 = vmatpush2.bf16.msra.mxu0 0
      %1646 = vmatprep.subr.bf16.mxu0 0
      %1647 = vmatpush2.bf16.msra.mxu0 0
      %1648 = vmatprep.subr.bf16.mxu0 0
      %1649 = vmatpush2.bf16.msra.mxu0 0
      %1650 = vmatprep.subr.bf16.mxu0 0
      %1651 = vmatpush2.bf16.msra.mxu0 0
      %1652 = vmatprep.subr.bf16.mxu0 0
      %1653 = vmatpush2.bf16.msra.mxu0 0
      %1654 = vmatprep.subr.bf16.mxu0 0
      %1655 = vmatpush2.bf16.msra.mxu0 0
      %1656 = vmatprep.subr.bf16.mxu0 0
      %1657 = vmatpush2.bf16.msra.mxu0 0
      %1658 = vmatprep.mubr.bf16.mxu0 0
      %1659 = vmatmul.mubr.bf16.gmra.mxu0 %v1624
      %v1660 = vpop.f32.mrf.mxu0
      %v1661 = vadd.f32 %v1609, %v1660
      %v1662 = vpop.f32.mrf.mxu0
      %v1663 = vpop.f32.mrf.mxu0
      %v1664 = vadd.f32 %v1609, %v1663
      %v1665 = vpop.f32.mrf.mxu0
      %1666 = vdwg.mxu0
      %v1667 = vunpack.c.l.bf16 %v342
      %v1668 = vunpack.c.l.bf16 %v343
      %v1669 = vadd.f32 %v1667, %v1661
      %v1670 = vadd.f32 %v1668, %v1664
      %v1671 = vld [vmem:[%s8] sm:$0x1]
      %v1672 = vld [vmem:[%s9] sm:$0x1]
      %v1673 = vsel %vm372, %v1669, 0.0
      %1674 = vadd.xlane.f32.xlu0 %v1673
      %v1675 = vpop.xlane.xlu0 %1674
      %v1676 = vsel %vm372, %v1670, 0.0
      %1677 = vadd.xlane.f32.xlu0 %v1676
      %v1678 = vpop.xlane.xlu0 %1677
      %v1679 = vrcp.pop 32.0
      %v1680 = vmul.f32 %v1675, %v1679
      %v1681 = vmul.f32 %v1678, %v1679
      %v1682 = vsub.f32 %v1669, %v1680
      %v1683 = vsub.f32 %v1670, %v1681
      %v1684 = vmul.f32 %v1682, %v1682
      %v1685 = vmul.f32 %v1683, %v1683
      %v1686 = vsel %vm372, %v1684, 0.0
      %1687 = vadd.xlane.f32.xlu0 %v1686
      %v1688 = vpop.xlane.xlu0 %1687
      %v1689 = vsel %vm372, %v1685, 0.0
      %1690 = vadd.xlane.f32.xlu0 %v1689
      %v1691 = vpop.xlane.xlu0 %1690
      %v1692 = vmul.f32 %v1688, %v1679
      %v1693 = vmul.f32 %v1691, %v1679
      %v1694 = vadd.f32 %v1692, 1e-05
      %v1695 = vadd.f32 %v1693, 1e-05
      %v1696 = vrsqrt.pop %v1694
      %v1697 = vrsqrt.pop %v1695
      %v1698 = vmul.f32 %v1682, %v1696
      %v1699 = vmul.f32 %v1683, %v1697
      %v1701 = vlaneseq
      %v1702 = vshrl.u32 %v1701, 7
      %v1703 = vsub.s32 0, %v1702
      %v1704 = vrot.slane %v1671, %v1703
      %v1706 = vmul.f32 %v1698, %v1704
      %v1707 = vmul.f32 %v1699, %v1704
      %v1709 = vlaneseq
      %v1710 = vshrl.u32 %v1709, 7
      %v1711 = vsub.s32 0, %v1710
      %v1712 = vrot.slane %v1672, %v1711
      %v1714 = vadd.f32 %v1706, %v1712
      %v1715 = vadd.f32 %v1707, %v1712
      %v1716 = vpack.c.bf16 %v1715, %v1714
      %v1718 = vunpack.c.l.b16 %v1716
      %v1719 = vunpack.c.h.b16 %v1716
      %v1720 = vpack.c.b16 %v1718, %v1718
      %v1721 = vpack.c.b16 %v1719, %v1719
      %vm1724 = vcmask 257024
      %1725 = vst.msk [vmem:[%s339] sm:$0xf] %vm1724, %v1720
      %1726 = vst.msk [vmem:[%s339 + $0x4] sm:$0xf] %vm1724, %v1721
      %p1727 = scmp.lt.s32.totalorder %s27, 1
      %s1728 = scalar_select %p1727, %s27, 1
      %s1729 = smul.addr %s1728, 2
      %s1730 = smul.addr %s1729, 4
      %s1731 = scalar_lea.vmem %s10, %s1730
      // Predicated region
      $region57: #{text_encoder_forward.5} parent=55 // pred_check
        %p1732 = pneg %p239
      $region58: #{text_encoder_forward.5} parent=55 // pred_check_branch
        %1734 = sbr.rel (%p1732) target = $region60
      $region59: #{text_encoder_forward.5} parent=55 // pred_region
        _
      $region60: #{text_encoder_forward.5} parent=55 // pred_fallthru
        _
    $region56: #{text_encoder_forward.5} parent=5 // pred_fallthru
      _
    %p1735 = scmp.le.s32.totalorder 2, %s22
    // Predicated region
    $region61: #{text_encoder_forward.5} parent=5 // pred_check
      %p1736 = pneg %p1735
    $region62: #{text_encoder_forward.5} parent=5 // pred_check_branch
      %1738 = sbr.rel (%p1736) target = $region64
    $region63: #{text_encoder_forward.5} parent=5 // pred_region
      %s1739 = ssub.s32 %s22, 2
      // Predicated region
      $region65: #{text_encoder_forward.5} parent=63 // pred_check
        %p1740 = pneg %p245
      $region66: #{text_encoder_forward.5} parent=63 // pred_check_branch
        %1742 = sbr.rel (%p1740) target = $region68
      $region67: #{text_encoder_forward.5} parent=63 // pred_region
        %p1743 = scmp.lt.s32.totalorder %s28, 1
        %s1744 = scalar_select %p1743, %s28, 1
        %s1745 = smul.addr %s1744, 2
        %s1746 = smul.addr %s1745, 4
        %s1747 = scalar_lea.vmem %s10, %s1746
      $region68: #{text_encoder_forward.5} parent=63 // pred_fallthru
        _
    $region64: #{text_encoder_forward.5} parent=5 // pred_fallthru
      _
  $region6: #{text_encoder_forward.5} parent=0 // loop_footer
    %s26 = sadd.s32 1, %s22
  $region7: #{text_encoder_forward.5} parent=0 // loop_footer_branch
    %21 = sbr.rel target = $region3
  $region8: #{text_encoder_forward.5} parent=0 // loop_exit
    _

</llo_original>
